<compile_context>
chip_gen: v6e
topology: v6e:2x2x1
jax: 0.10.0
libtpu: 0.0.40
codegen_flags: <defaults>
</compile_context>

<pallas_src>
import functools

import jax
import jax.numpy as jnp
from jax.experimental import pallas as pl
from jax.experimental.pallas import tpu as pltpu


# --------------------------------------------------------------------- helpers
def _pick_tile(dim, target, align):
    """Largest tile <= target that divides dim and is a multiple of `align`,
    falling back to the full dim (always legal)."""
    if dim <= target:
        return dim
    t = (target // align) * align
    while t >= align:
        if dim % t == 0:
            return t
        t -= align
    return dim


# --------------------------------------------------------------- linear kernels
def _matmul_kernel(x_ref, w_ref, o_ref, acc_ref):
    @pl.when(pl.program_id(2) == 0)
    def _init():
        acc_ref[...] = jnp.zeros(acc_ref.shape, dtype=acc_ref.dtype)

    acc_ref[...] += jnp.dot(x_ref[...], w_ref[...],
                            preferred_element_type=jnp.float32)

    @pl.when(pl.program_id(2) == pl.num_programs(2) - 1)
    def _flush():
        o_ref[...] = acc_ref[...].astype(o_ref.dtype)


def _matmul_bias_kernel(x_ref, w_ref, b_ref, o_ref, acc_ref):
    @pl.when(pl.program_id(2) == 0)
    def _init():
        acc_ref[...] = jnp.zeros(acc_ref.shape, dtype=acc_ref.dtype)

    acc_ref[...] += jnp.dot(x_ref[...], w_ref[...],
                            preferred_element_type=jnp.float32)

    @pl.when(pl.program_id(2) == pl.num_programs(2) - 1)
    def _flush():
        # bias added once, outside the K loop (no per-step re-broadcast)
        o_ref[...] = (acc_ref[...] + b_ref[...].astype(jnp.float32)).astype(o_ref.dtype)


def linear(x2d, w, b=None, *, tm=256, tn=256, tk=512):
    """x2d: (M, K), w: (K, N), b: (N,) or None -> (M, N). Tiled + pipelined."""
    M, K = x2d.shape
    K2, N = w.shape
    assert K == K2

    tm = _pick_tile(M, tm, 8)
    tn = _pick_tile(N, tn, 128)
    tk = _pick_tile(K, tk, 128)
    grid = (M // tm, N // tn, K // tk)

    x_spec = pl.BlockSpec((tm, tk), lambda i, j, k: (i, k))
    w_spec = pl.BlockSpec((tk, tn), lambda i, j, k: (k, j))
    o_spec = pl.BlockSpec((tm, tn), lambda i, j, k: (i, j))
    scratch = [pltpu.VMEM((tm, tn), jnp.float32)]
    params = pltpu.CompilerParams(
        dimension_semantics=("parallel", "parallel", "arbitrary"))
    cost = pl.CostEstimate(
        flops=2 * M * N * K,
        transcendentals=0,
        bytes_accessed=(M * K + K * N + M * N) * x2d.dtype.itemsize)

    if b is None:
        return pl.pallas_call(
            _matmul_kernel,
            out_shape=jax.ShapeDtypeStruct((M, N), x2d.dtype),
            grid=grid,
            in_specs=[x_spec, w_spec],
            out_specs=o_spec,
            scratch_shapes=scratch,
            compiler_params=params,
            cost_estimate=cost,
        )(x2d, w)

    b2d = b.reshape(1, N)
    b_spec = pl.BlockSpec((1, tn), lambda i, j, k: (0, j))
    return pl.pallas_call(
        _matmul_bias_kernel,
        out_shape=jax.ShapeDtypeStruct((M, N), x2d.dtype),
        grid=grid,
        in_specs=[x_spec, w_spec, b_spec],
        out_specs=o_spec,
        scratch_shapes=scratch,
        compiler_params=params,
        cost_estimate=cost,
    )(x2d, w, b2d)


# ----------------------------------------------------------- flash attention
def _flash_attn_kernel(q_ref, k_ref, v_ref, o_ref, m_ref, l_ref, acc_ref, *, scale):
    kv = pl.program_id(3)

    @pl.when(kv == 0)
    def _init():
        m_ref[...] = jnp.full(m_ref.shape, -jnp.inf, dtype=m_ref.dtype)
        l_ref[...] = jnp.zeros(l_ref.shape, dtype=l_ref.dtype)
        acc_ref[...] = jnp.zeros(acc_ref.shape, dtype=acc_ref.dtype)

    # Keep q/k/v in their native dtype for the MXU; fold the softmax scale
    # into q (tq*D elementwise work instead of tq*tkv on the scores).
    q = q_ref[...] * scale                       # (tq, D)
    k = k_ref[...]                               # (tkv, D)
    v = v_ref[...]                               # (tkv, D)

    # Q @ K^T without materializing a transpose: contract last dims of both.
    s = jax.lax.dot_general(q, k, (((1,), (1,)), ((), ())),
                            preferred_element_type=jnp.float32)   # (tq, tkv) f32

    # Online softmax (f32 statistics).
    m_prev = m_ref[...]                                           # (tq, 1)
    m_new = jnp.maximum(m_prev, jnp.max(s, axis=-1, keepdims=True))
    alpha = jnp.exp(m_prev - m_new)                               # (tq, 1)
    p = jnp.exp(s - m_new)                                        # (tq, tkv)

    l_ref[...] = alpha * l_ref[...] + jnp.sum(p, axis=-1, keepdims=True)
    acc_ref[...] = alpha * acc_ref[...] + jnp.dot(
        p.astype(v.dtype), v, preferred_element_type=jnp.float32)
    m_ref[...] = m_new

    @pl.when(kv == pl.num_programs(3) - 1)
    def _finalize():
        # Exact reciprocal: runs once per q-tile (epilogue), cost negligible;
        # approx=True would risk the 1e-4 tolerance for no measurable gain here.
        inv = pl.reciprocal(l_ref[...], approx=False)
        o_ref[...] = (acc_ref[...] * inv).astype(o_ref.dtype)


def attention(qkv, scale, *, tq=128, tkv=128):
    """qkv: (3, B, H, N, D) stacked q/k/v -> (B, H, N, D) attention output."""
    _, B, H, N, D = qkv.shape
    tq = _pick_tile(N, tq, 8)
    tkv = _pick_tile(N, tkv, 8)
    grid = (B, H, N // tq, N // tkv)

    q_spec = pl.BlockSpec((None, None, None, tq, D),
                          lambda b, h, qi, ki: (0, b, h, qi, 0))
    k_spec = pl.BlockSpec((None, None, None, tkv, D),
                          lambda b, h, qi, ki: (1, b, h, ki, 0))
    v_spec = pl.BlockSpec((None, None, None, tkv, D),
                          lambda b, h, qi, ki: (2, b, h, ki, 0))
    o_spec = pl.BlockSpec((None, None, tq, D),
                          lambda b, h, qi, ki: (b, h, qi, 0))

    kern = functools.partial(_flash_attn_kernel, scale=scale)
    itemsize = qkv.dtype.itemsize
    cost = pl.CostEstimate(
        flops=4 * B * H * N * N * D,                 # QK^T + PV
        transcendentals=B * H * N * N,               # exp
        bytes_accessed=4 * B * H * N * D * itemsize)

    return pl.pallas_call(
        kern,
        out_shape=jax.ShapeDtypeStruct((B, H, N, D), qkv.dtype),
        grid=grid,
        in_specs=[q_spec, k_spec, v_spec],
        out_specs=o_spec,
        scratch_shapes=[
            pltpu.VMEM((tq, 1), jnp.float32),    # running max m
            pltpu.VMEM((tq, 1), jnp.float32),    # running sum l
            pltpu.VMEM((tq, D), jnp.float32),    # output accumulator
        ],
        compiler_params=pltpu.CompilerParams(
            dimension_semantics=("parallel", "parallel", "parallel", "arbitrary")),
        cost_estimate=cost,
    )(qkv, qkv, qkv)


# ----------------------------------------------------------------- full forward
def mha_forward(x, w_qkv, w_out, b_out, *, heads, head_dim):
    """x: (B, N, C_in). w_qkv: (C_in, 3*hidden). w_out: (hidden, C_out). b_out: (C_out,)."""
    B, N, C = x.shape
    hidden = heads * head_dim
    scale = head_dim ** (-0.5)

    qkv = linear(x.reshape(B * N, C), w_qkv)                   # (B*N, 3*hidden), no bias
    # 'b n (three h d) -> three b h n d'; the chunk(3) itself is expressed via the
    # attention BlockSpec index_maps on the stacked leading axis (no split copies).
    qkv = qkv.reshape(B, N, 3, heads, head_dim).transpose(2, 0, 3, 1, 4)

    out = attention(qkv, scale)                                # (B, H, N, D)
    # TODO(synk): head_dim=32 keeps the attention output last dim at 32 lanes; a
    # lane-dense (B, N, H*D) out_spec would need per-head lane-offset slicing that
    # is not guaranteed to lower cleanly, so the rearrange stays in XLA.
    out = out.transpose(0, 2, 1, 3).reshape(B * N, hidden)     # 'b h n d -> (b n) (h d)'
    out = linear(out, w_out, b_out)                            # projection (project_out=True)
    return out.reshape(B, N, -1)


# ------------------------------------------------------------- pure-JAX reference
def mha_reference(x, w_qkv, w_out, b_out, *, heads, head_dim):
    B, N, C = x.shape
    hidden = heads * head_dim
    scale = head_dim ** (-0.5)
    qkv = x @ w_qkv
    q, k, v = jnp.split(qkv, 3, axis=-1)
    rh = lambda t: t.reshape(B, N, heads, head_dim).transpose(0, 2, 1, 3)
    q, k, v = rh(q), rh(k), rh(v)
    dots = jnp.einsum("bhnd,bhmd->bhnm", q, k) * scale
    attn = jax.nn.softmax(dots, axis=-1)
    out = jnp.einsum("bhnm,bhmd->bhnd", attn, v)
    out = out.transpose(0, 2, 1, 3).reshape(B, N, hidden)
    return out @ w_out + b_out


if __name__ == "__main__":
    # Small shapes consistent with the module's forward: x is (batch, seq, in_channel).
    B, N = 2, 256
    in_channel, out_channel = 128, 128
    heads, head_dim = 4, 32
    hidden = heads * head_dim

    key = jax.random.PRNGKey(0)
    k_x, k_qkv, k_w, k_b = jax.random.split(key, 4)

    x = jax.random.normal(k_x, (B, N, in_channel), dtype=jnp.float32)
    # nn.Linear(in_channel, 3*hidden, bias=False): weight (3*hidden, in_channel); stored as W^T.
    w_qkv = jax.random.normal(k_qkv, (in_channel, 3 * hidden), dtype=jnp.float32) * 0.05
    # nn.Linear(hidden, out_channel): weight stored transposed, plus bias.
    w_out = jax.random.normal(k_w, (hidden, out_channel), dtype=jnp.float32) * 0.05
    b_out = jax.random.normal(k_b, (out_channel,), dtype=jnp.float32) * 0.05

    fwd = jax.jit(functools.partial(mha_forward, heads=heads, head_dim=head_dim))
    y = jax.block_until_ready(fwd(x, w_qkv, w_out, b_out))

    y_ref = mha_reference(x, w_qkv, w_out, b_out, heads=heads, head_dim=head_dim)
    assert y.shape == (B, N, out_channel)
    assert jnp.allclose(y, y_ref, atol=1e-4, rtol=1e-4), "mismatch vs reference"

    print("KERNEL_OK")
</pallas_src>

<mosaic_0001>
module attributes {stable_mosaic.version = 11 : i64} {
  func.func @_matmul_kernel(%arg0: i32, %arg1: i32, %arg2: i32, %arg3: memref<256x128xf32, #tpu.memory_space<vmem>>, %arg4: memref<128x128xf32, #tpu.memory_space<vmem>>, %arg5: memref<256x128xf32, #tpu.memory_space<vmem>>, %arg6: memref<256x128xf32, #tpu.memory_space<vmem>>) attributes {dimension_semantics = [#tpu.dimension_semantics<parallel>, #tpu.dimension_semantics<parallel>, #tpu.dimension_semantics<arbitrary>], iteration_bounds = array<i64: 2, 3, 1>, scalar_prefetch = 0 : i64, scratch_operands = 1 : i64, tpu.core_type = #tpu.core_type<tc>, window_params = [{transform_indices = @transform_0, window_bounds = array<i64: 256, 128>}, {transform_indices = @transform_1, window_bounds = array<i64: 128, 128>}, {transform_indices = @transform_2, window_bounds = array<i64: 256, 128>}]} {
    %c0_i32 = arith.constant 0 : i32
    %0 = arith.cmpi eq, %arg2, %c0_i32 : i32
    %1 = arith.extui %0 : i1 to i32
    %c0_i32_0 = arith.constant 0 : i32
    %2 = arith.cmpi ne, %1, %c0_i32_0 : i32
    scf.if %2 {
      %cst_10 = arith.constant 0.000000e+00 : f32
      %12 = vector.broadcast %cst_10 : f32 to vector<256x128xf32>
      %c0_11 = arith.constant 0 : index
      %c0_12 = arith.constant 0 : index
      %13 = vector.load %arg6[%c0_11, %c0_12] : memref<256x128xf32, #tpu.memory_space<vmem>>, vector<256x128xf32>
      tpu.vector_store %arg6[%c0_11, %c0_12], %12 {strides = array<i32>} : memref<256x128xf32, #tpu.memory_space<vmem>>, vector<256x128xf32>,
    } else {
    }
    %c0 = arith.constant 0 : index
    %c0_1 = arith.constant 0 : index
    %3 = vector.load %arg6[%c0, %c0_1] : memref<256x128xf32, #tpu.memory_space<vmem>>, vector<256x128xf32>
    %c0_2 = arith.constant 0 : index
    %c0_3 = arith.constant 0 : index
    %4 = vector.load %arg3[%c0_2, %c0_3] : memref<256x128xf32, #tpu.memory_space<vmem>>, vector<256x128xf32>
    %c0_4 = arith.constant 0 : index
    %c0_5 = arith.constant 0 : index
    %5 = vector.load %arg4[%c0_4, %c0_5] : memref<128x128xf32, #tpu.memory_space<vmem>>, vector<128x128xf32>
    %cst = arith.constant dense<0.000000e+00> : vector<256x128xf32>
    %6 = tpu.matmul %4, %5, %cst {dimension_numbers = #tpu.dot_dimension_numbers<[1], [0], [0], [1], [0, 0, 1, 1], [], []>} : vector<256x128xf32>, vector<128x128xf32>, vector<256x128xf32> -> vector<256x128xf32>
    %7 = arith.addf %3, %6 : vector<256x128xf32>
    %c0_6 = arith.constant 0 : index
    %c0_7 = arith.constant 0 : index
    %8 = vector.load %arg6[%c0_6, %c0_7] : memref<256x128xf32, #tpu.memory_space<vmem>>, vector<256x128xf32>
    tpu.vector_store %arg6[%c0_6, %c0_7], %7 {strides = array<i32>} : memref<256x128xf32, #tpu.memory_space<vmem>>, vector<256x128xf32>,
    %c0_i32_8 = arith.constant 0 : i32
    %9 = arith.cmpi eq, %arg2, %c0_i32_8 : i32
    %10 = arith.extui %9 : i1 to i32
    %c0_i32_9 = arith.constant 0 : i32
    %11 = arith.cmpi ne, %10, %c0_i32_9 : i32
    scf.if %11 {
      %c0_10 = arith.constant 0 : index
      %c0_11 = arith.constant 0 : index
      %12 = vector.load %arg6[%c0_10, %c0_11] : memref<256x128xf32, #tpu.memory_space<vmem>>, vector<256x128xf32>
      %c0_12 = arith.constant 0 : index
      %c0_13 = arith.constant 0 : index
      %13 = vector.load %arg5[%c0_12, %c0_13] : memref<256x128xf32, #tpu.memory_space<vmem>>, vector<256x128xf32>
      tpu.vector_store %arg5[%c0_12, %c0_13], %12 {strides = array<i32>} : memref<256x128xf32, #tpu.memory_space<vmem>>, vector<256x128xf32>,
    } else {
    }
    return
  }
  func.func @transform_0(%arg0: i32, %arg1: i32, %arg2: i32) -> (i32, i32) {
    %c0_i32 = arith.constant 0 : i32
    return %arg0, %arg2 : i32, i32
  }
  func.func @transform_1(%arg0: i32, %arg1: i32, %arg2: i32) -> (i32, i32) {
    %c0_i32 = arith.constant 0 : i32
    return %arg2, %arg1 : i32, i32
  }
  func.func @transform_2(%arg0: i32, %arg1: i32, %arg2: i32) -> (i32, i32) {
    %c0_i32 = arith.constant 0 : i32
    return %arg0, %arg1 : i32, i32
  }
}

module attributes {stable_mosaic.version = 11 : i64} {
  func.func @_flash_attn_kernel(%arg0: i32, %arg1: i32, %arg2: i32, %arg3: i32, %arg4: memref<1x1x1x128x32xf32, #tpu.memory_space<vmem>>, %arg5: memref<1x1x1x128x32xf32, #tpu.memory_space<vmem>>, %arg6: memref<1x1x1x128x32xf32, #tpu.memory_space<vmem>>, %arg7: memref<1x1x128x32xf32, #tpu.memory_space<vmem>>, %arg8: memref<128x1xf32, #tpu.memory_space<vmem>>, %arg9: memref<128x1xf32, #tpu.memory_space<vmem>>, %arg10: memref<128x32xf32, #tpu.memory_space<vmem>>) attributes {dimension_semantics = [#tpu.dimension_semantics<parallel>, #tpu.dimension_semantics<parallel>, #tpu.dimension_semantics<parallel>, #tpu.dimension_semantics<arbitrary>], iteration_bounds = array<i64: 2, 4, 2, 2>, scalar_prefetch = 0 : i64, scratch_operands = 3 : i64, tpu.core_type = #tpu.core_type<tc>, window_params = [{transform_indices = @transform_0, window_bounds = array<i64: 1, 1, 1, 128, 32>}, {transform_indices = @transform_1, window_bounds = array<i64: 1, 1, 1, 128, 32>}, {transform_indices = @transform_2, window_bounds = array<i64: 1, 1, 1, 128, 32>}, {transform_indices = @transform_3, window_bounds = array<i64: 1, 1, 128, 32>}]} {
    %c0_i32 = arith.constant 0 : i32
    %0 = arith.cmpi eq, %arg3, %c0_i32 : i32
    %1 = arith.extui %0 : i1 to i32
    %c0_i32_0 = arith.constant 0 : i32
    %2 = arith.cmpi ne, %1, %c0_i32_0 : i32
    scf.if %2 {
      %cst_32 = arith.constant 0xFF800000 : f32
      %37 = vector.broadcast %cst_32 : f32 to vector<128x1xf32>
      %c0_33 = arith.constant 0 : index
      %c0_34 = arith.constant 0 : index
      %38 = vector.load %arg8[%c0_33, %c0_34] : memref<128x1xf32, #tpu.memory_space<vmem>>, vector<128x1xf32>
      tpu.vector_store %arg8[%c0_33, %c0_34], %37 {strides = array<i32>} : memref<128x1xf32, #tpu.memory_space<vmem>>, vector<128x1xf32>,
      %cst_35 = arith.constant 0.000000e+00 : f32
      %39 = vector.broadcast %cst_35 : f32 to vector<128x1xf32>
      %c0_36 = arith.constant 0 : index
      %c0_37 = arith.constant 0 : index
      %40 = vector.load %arg9[%c0_36, %c0_37] : memref<128x1xf32, #tpu.memory_space<vmem>>, vector<128x1xf32>
      tpu.vector_store %arg9[%c0_36, %c0_37], %39 {strides = array<i32>} : memref<128x1xf32, #tpu.memory_space<vmem>>, vector<128x1xf32>,
      %cst_38 = arith.constant 0.000000e+00 : f32
      %41 = vector.broadcast %cst_38 : f32 to vector<128x32xf32>
      %c0_39 = arith.constant 0 : index
      %c0_40 = arith.constant 0 : index
      %42 = vector.load %arg10[%c0_39, %c0_40] : memref<128x32xf32, #tpu.memory_space<vmem>>, vector<128x32xf32>
      tpu.vector_store %arg10[%c0_39, %c0_40], %41 {strides = array<i32>} : memref<128x32xf32, #tpu.memory_space<vmem>>, vector<128x32xf32>,
    } else {
    }
    %c0 = arith.constant 0 : index
    %c0_1 = arith.constant 0 : index
    %c0_2 = arith.constant 0 : index
    %c0_3 = arith.constant 0 : index
    %c0_4 = arith.constant 0 : index
    %3 = vector.load %arg4[%c0, %c0_1, %c0_2, %c0_3, %c0_4] : memref<1x1x1x128x32xf32, #tpu.memory_space<vmem>>, vector<1x1x1x128x32xf32>
    %4 = vector.shape_cast %3 : vector<1x1x1x128x32xf32> to vector<128x32xf32>
    %cst = arith.constant 0.176776692 : f32
    %5 = vector.broadcast %cst : f32 to vector<128x32xf32>
    %6 = arith.mulf %4, %5 : vector<128x32xf32>
    %c0_5 = arith.constant 0 : index
    %c0_6 = arith.constant 0 : index
    %c0_7 = arith.constant 0 : index
    %c0_8 = arith.constant 0 : index
    %c0_9 = arith.constant 0 : index
    %7 = vector.load %arg5[%c0_5, %c0_6, %c0_7, %c0_8, %c0_9] : memref<1x1x1x128x32xf32, #tpu.memory_space<vmem>>, vector<1x1x1x128x32xf32>
    %8 = vector.shape_cast %7 : vector<1x1x1x128x32xf32> to vector<128x32xf32>
    %c0_10 = arith.constant 0 : index
    %c0_11 = arith.constant 0 : index
    %c0_12 = arith.constant 0 : index
    %c0_13 = arith.constant 0 : index
    %c0_14 = arith.constant 0 : index
    %9 = vector.load %arg6[%c0_10, %c0_11, %c0_12, %c0_13, %c0_14] : memref<1x1x1x128x32xf32, #tpu.memory_space<vmem>>, vector<1x1x1x128x32xf32>
    %10 = vector.shape_cast %9 : vector<1x1x1x128x32xf32> to vector<128x32xf32>
    %cst_15 = arith.constant dense<0.000000e+00> : vector<128x128xf32>
    %11 = tpu.matmul %6, %8, %cst_15 {dimension_numbers = #tpu.dot_dimension_numbers<[1], [1], [0], [0], [0, 0, 1, 0], [], []>} : vector<128x32xf32>, vector<128x32xf32>, vector<128x128xf32> -> vector<128x128xf32>
    %c0_16 = arith.constant 0 : index
    %c0_17 = arith.constant 0 : index
    %12 = vector.load %arg8[%c0_16, %c0_17] : memref<128x1xf32, #tpu.memory_space<vmem>>, vector<128x1xf32>
    %cst_18 = arith.constant dense<0xFF800000> : vector<128xf32>
    %13 = vector.multi_reduction <maximumf>, %11, %cst_18 [1] : vector<128x128xf32> to vector<128xf32>
    %14 = vector.shape_cast %13 : vector<128xf32> to vector<128x1xf32>
    %15 = arith.maximumf %12, %14 : vector<128x1xf32>
    %16 = arith.subf %12, %15 : vector<128x1xf32>
    %17 = math.exp %16 : vector<128x1xf32>
    %18 = vector.broadcast %15 : vector<128x1xf32> to vector<128x128xf32>
    %19 = arith.subf %11, %18 : vector<128x128xf32>
    %20 = math.exp %19 : vector<128x128xf32>
    %c0_19 = arith.constant 0 : index
    %c0_20 = arith.constant 0 : index
    %21 = vector.load %arg9[%c0_19, %c0_20] : memref<128x1xf32, #tpu.memory_space<vmem>>, vector<128x1xf32>
    %22 = arith.mulf %17, %21 : vector<128x1xf32>
    %cst_21 = arith.constant dense<0.000000e+00> : vector<128xf32>
    %23 = vector.multi_reduction <add>, %20, %cst_21 [1] : vector<128x128xf32> to vector<128xf32>
    %24 = vector.shape_cast %23 : vector<128xf32> to vector<128x1xf32>
    %25 = arith.addf %22, %24 : vector<128x1xf32>
    %c0_22 = arith.constant 0 : index
    %c0_23 = arith.constant 0 : index
    %26 = vector.load %arg9[%c0_22, %c0_23] : memref<128x1xf32, #tpu.memory_space<vmem>>, vector<128x1xf32>
    tpu.vector_store %arg9[%c0_22, %c0_23], %25 {strides = array<i32>} : memref<128x1xf32, #tpu.memory_space<vmem>>, vector<128x1xf32>,
    %c0_24 = arith.constant 0 : index
    %c0_25 = arith.constant 0 : index
    %27 = vector.load %arg10[%c0_24, %c0_25] : memref<128x32xf32, #tpu.memory_space<vmem>>, vector<128x32xf32>
    %28 = vector.broadcast %17 : vector<128x1xf32> to vector<128x32xf32>
    %29 = arith.mulf %28, %27 : vector<128x32xf32>
    %cst_26 = arith.constant dense<0.000000e+00> : vector<128x32xf32>
    %30 = tpu.matmul %20, %10, %cst_26 {dimension_numbers = #tpu.dot_dimension_numbers<[1], [0], [0], [1], [0, 0, 1, 1], [], []>} : vector<128x128xf32>, vector<128x32xf32>, vector<128x32xf32> -> vector<128x32xf32>
    %31 = arith.addf %29, %30 : vector<128x32xf32>
    %c0_27 = arith.constant 0 : index
    %c0_28 = arith.constant 0 : index
    %32 = vector.load %arg10[%c0_27, %c0_28] : memref<128x32xf32, #tpu.memory_space<vmem>>, vector<128x32xf32>
    tpu.vector_store %arg10[%c0_27, %c0_28], %31 {strides = array<i32>} : memref<128x32xf32, #tpu.memory_space<vmem>>, vector<128x32xf32>,
    %c0_29 = arith.constant 0 : index
    %c0_30 = arith.constant 0 : index
    %33 = vector.load %arg8[%c0_29, %c0_30] : memref<128x1xf32, #tpu.memory_space<vmem>>, vector<128x1xf32>
    tpu.vector_store %arg8[%c0_29, %c0_30], %15 {strides = array<i32>} : memref<128x1xf32, #tpu.memory_space<vmem>>, vector<128x1xf32>,
    %c1_i32 = arith.constant 1 : i32
    %34 = arith.cmpi eq, %arg3, %c1_i32 : i32
    %35 = arith.extui %34 : i1 to i32
    %c0_i32_31 = arith.constant 0 : i32
    %36 = arith.cmpi ne, %35, %c0_i32_31 : i32
    scf.if %36 {
      %c0_32 = arith.constant 0 : index
      %c0_33 = arith.constant 0 : index
      %37 = vector.load %arg9[%c0_32, %c0_33] : memref<128x1xf32, #tpu.memory_space<vmem>>, vector<128x1xf32>
      %38 = tpu.reciprocal %37 : vector<128x1xf32> -> vector<128x1xf32>
      %c0_34 = arith.constant 0 : index
      %c0_35 = arith.constant 0 : index
      %39 = vector.load %arg10[%c0_34, %c0_35] : memref<128x32xf32, #tpu.memory_space<vmem>>, vector<128x32xf32>
      %40 = vector.broadcast %38 : vector<128x1xf32> to vector<128x32xf32>
      %41 = arith.mulf %39, %40 : vector<128x32xf32>
      %c0_36 = arith.constant 0 : index
      %c0_37 = arith.constant 0 : index
      %c0_38 = arith.constant 0 : index
      %c0_39 = arith.constant 0 : index
      %42 = vector.load %arg7[%c0_36, %c0_37, %c0_38, %c0_39] : memref<1x1x128x32xf32, #tpu.memory_space<vmem>>, vector<1x1x128x32xf32>
      %43 = vector.shape_cast %42 : vector<1x1x128x32xf32> to vector<128x32xf32>
      %44 = vector.shape_cast %41 : vector<128x32xf32> to vector<1x1x128x32xf32>
      tpu.vector_store %arg7[%c0_36, %c0_37, %c0_38, %c0_39], %44 {strides = array<i32>} : memref<1x1x128x32xf32, #tpu.memory_space<vmem>>, vector<1x1x128x32xf32>,
    } else {
    }
    return
  }
  func.func @transform_0(%arg0: i32, %arg1: i32, %arg2: i32, %arg3: i32) -> (i32, i32, i32, i32, i32) {
    %c0_i32 = arith.constant 0 : i32
    %c0_i32_0 = arith.constant 0 : i32
    %c0_i32_1 = arith.constant 0 : i32
    return %c0_i32, %arg0, %arg1, %arg2, %c0_i32_0 : i32, i32, i32, i32, i32
  }
  func.func @transform_1(%arg0: i32, %arg1: i32, %arg2: i32, %arg3: i32) -> (i32, i32, i32, i32, i32) {
    %c1_i32 = arith.constant 1 : i32
    %c0_i32 = arith.constant 0 : i32
    %c0_i32_0 = arith.constant 0 : i32
    return %c1_i32, %arg0, %arg1, %arg3, %c0_i32 : i32, i32, i32, i32, i32
  }
  func.func @transform_2(%arg0: i32, %arg1: i32, %arg2: i32, %arg3: i32) -> (i32, i32, i32, i32, i32) {
    %c2_i32 = arith.constant 2 : i32
    %c0_i32 = arith.constant 0 : i32
    %c0_i32_0 = arith.constant 0 : i32
    return %c2_i32, %arg0, %arg1, %arg3, %c0_i32 : i32, i32, i32, i32, i32
  }
  func.func @transform_3(%arg0: i32, %arg1: i32, %arg2: i32, %arg3: i32) -> (i32, i32, i32, i32) {
    %c0_i32 = arith.constant 0 : i32
    %c0_i32_0 = arith.constant 0 : i32
    return %arg0, %arg1, %arg2, %c0_i32 : i32, i32, i32, i32
  }
}

module attributes {stable_mosaic.version = 11 : i64} {
  func.func @_matmul_bias_kernel(%arg0: i32, %arg1: i32, %arg2: i32, %arg3: memref<256x128xf32, #tpu.memory_space<vmem>>, %arg4: memref<128x128xf32, #tpu.memory_space<vmem>>, %arg5: memref<1x128xf32, #tpu.memory_space<vmem>>, %arg6: memref<256x128xf32, #tpu.memory_space<vmem>>, %arg7: memref<256x128xf32, #tpu.memory_space<vmem>>) attributes {dimension_semantics = [#tpu.dimension_semantics<parallel>, #tpu.dimension_semantics<parallel>, #tpu.dimension_semantics<arbitrary>], iteration_bounds = array<i64: 2, 1, 1>, scalar_prefetch = 0 : i64, scratch_operands = 1 : i64, tpu.core_type = #tpu.core_type<tc>, window_params = [{transform_indices = @transform_0, window_bounds = array<i64: 256, 128>}, {transform_indices = @transform_1, window_bounds = array<i64: 128, 128>}, {transform_indices = @transform_2, window_bounds = array<i64: 1, 128>}, {transform_indices = @transform_3, window_bounds = array<i64: 256, 128>}]} {
    %c0_i32 = arith.constant 0 : i32
    %0 = arith.cmpi eq, %arg2, %c0_i32 : i32
    %1 = arith.extui %0 : i1 to i32
    %c0_i32_0 = arith.constant 0 : i32
    %2 = arith.cmpi ne, %1, %c0_i32_0 : i32
    scf.if %2 {
      %cst_10 = arith.constant 0.000000e+00 : f32
      %12 = vector.broadcast %cst_10 : f32 to vector<256x128xf32>
      %c0_11 = arith.constant 0 : index
      %c0_12 = arith.constant 0 : index
      %13 = vector.load %arg7[%c0_11, %c0_12] : memref<256x128xf32, #tpu.memory_space<vmem>>, vector<256x128xf32>
      tpu.vector_store %arg7[%c0_11, %c0_12], %12 {strides = array<i32>} : memref<256x128xf32, #tpu.memory_space<vmem>>, vector<256x128xf32>,
    } else {
    }
    %c0 = arith.constant 0 : index
    %c0_1 = arith.constant 0 : index
    %3 = vector.load %arg7[%c0, %c0_1] : memref<256x128xf32, #tpu.memory_space<vmem>>, vector<256x128xf32>
    %c0_2 = arith.constant 0 : index
    %c0_3 = arith.constant 0 : index
    %4 = vector.load %arg3[%c0_2, %c0_3] : memref<256x128xf32, #tpu.memory_space<vmem>>, vector<256x128xf32>
    %c0_4 = arith.constant 0 : index
    %c0_5 = arith.constant 0 : index
    %5 = vector.load %arg4[%c0_4, %c0_5] : memref<128x128xf32, #tpu.memory_space<vmem>>, vector<128x128xf32>
    %cst = arith.constant dense<0.000000e+00> : vector<256x128xf32>
    %6 = tpu.matmul %4, %5, %cst {dimension_numbers = #tpu.dot_dimension_numbers<[1], [0], [0], [1], [0, 0, 1, 1], [], []>} : vector<256x128xf32>, vector<128x128xf32>, vector<256x128xf32> -> vector<256x128xf32>
    %7 = arith.addf %3, %6 : vector<256x128xf32>
    %c0_6 = arith.constant 0 : index
    %c0_7 = arith.constant 0 : index
    %8 = vector.load %arg7[%c0_6, %c0_7] : memref<256x128xf32, #tpu.memory_space<vmem>>, vector<256x128xf32>
    tpu.vector_store %arg7[%c0_6, %c0_7], %7 {strides = array<i32>} : memref<256x128xf32, #tpu.memory_space<vmem>>, vector<256x128xf32>,
    %c0_i32_8 = arith.constant 0 : i32
    %9 = arith.cmpi eq, %arg2, %c0_i32_8 : i32
    %10 = arith.extui %9 : i1 to i32
    %c0_i32_9 = arith.constant 0 : i32
    %11 = arith.cmpi ne, %10, %c0_i32_9 : i32
    scf.if %11 {
      %c0_10 = arith.constant 0 : index
      %c0_11 = arith.constant 0 : index
      %12 = vector.load %arg7[%c0_10, %c0_11] : memref<256x128xf32, #tpu.memory_space<vmem>>, vector<256x128xf32>
      %c0_12 = arith.constant 0 : index
      %c0_13 = arith.constant 0 : index
      %13 = vector.load %arg5[%c0_12, %c0_13] : memref<1x128xf32, #tpu.memory_space<vmem>>, vector<1x128xf32>
      %14 = vector.broadcast %13 : vector<1x128xf32> to vector<256x128xf32>
      %15 = arith.addf %12, %14 : vector<256x128xf32>
      %c0_14 = arith.constant 0 : index
      %c0_15 = arith.constant 0 : index
      %16 = vector.load %arg6[%c0_14, %c0_15] : memref<256x128xf32, #tpu.memory_space<vmem>>, vector<256x128xf32>
      tpu.vector_store %arg6[%c0_14, %c0_15], %15 {strides = array<i32>} : memref<256x128xf32, #tpu.memory_space<vmem>>, vector<256x128xf32>,
    } else {
    }
    return
  }
  func.func @transform_0(%arg0: i32, %arg1: i32, %arg2: i32) -> (i32, i32) {
    %c0_i32 = arith.constant 0 : i32
    return %arg0, %arg2 : i32, i32
  }
  func.func @transform_1(%arg0: i32, %arg1: i32, %arg2: i32) -> (i32, i32) {
    %c0_i32 = arith.constant 0 : i32
    return %arg2, %arg1 : i32, i32
  }
  func.func @transform_2(%arg0: i32, %arg1: i32, %arg2: i32) -> (i32, i32) {
    %c0_i32 = arith.constant 0 : i32
    %c0_i32_0 = arith.constant 0 : i32
    return %c0_i32, %arg1 : i32, i32
  }
  func.func @transform_3(%arg0: i32, %arg1: i32, %arg2: i32) -> (i32, i32) {
    %c0_i32 = arith.constant 0 : i32
    return %arg0, %arg1 : i32, i32
  }
}

</mosaic_0001>

<llo_original>
// kernel: mha_forward.3
$region0: #{mha_forward.3}
  #allocation0 [shape = 'u32[]', space=smem, size = 0x4, offset = 0x4, fixed_abs, tag = 'smem constant byte address 0x4 - core index']
  #allocation1 [shape = 'u32[144,128]{1,0:T(1,128)}', space=vmem, size = 0x12000, scoped, tag = 'internal scratch']
  #allocation2 [shape = 'f32[256,128]{1,0:T(8,128)}', space=vmem, size = 0x20000, scoped, tag = 'scratch operand']
  %s0 = inlined_call_operand.hbm [shape: f32[512,128], index: 0, kind: input, shape index: {}]
  %s1 = inlined_call_operand.hbm [shape: f32[128,384], index: 1, kind: input, shape index: {}]
  %s2 = inlined_call_operand.vmem [shape: f32[512,384], index: 2, kind: output, shape index: {}]
  %s3 = sld [smem:[#allocation0]]
  $region91: #{mha_forward.3} parent=0
    _
  %s5 = ssub.s32 1, %s3
  %s6 = scalar_select 0, %s5, %s3
  $region1: #{mha_forward.3} parent=0
    #allocation3 [shape = 'u8[262144]{0}', space=vmem, size = 0x40000, scoped, tag = 'input window, operand 0']
    #allocation4 [shape = 's32[2]{0}', space=sflag, size = 0x8, scoped, tag = 'scoped memory for mha_forward.3']
    #allocation5 [shape = 'u8[131072]{0}', space=vmem, size = 0x20000, scoped, tag = 'input window, operand 1']
    #allocation6 [shape = 's32[2]{0}', space=sflag, size = 0x8, scoped, tag = 'scoped memory for mha_forward.3']
    #allocation7 [shape = 'u8[262144]{0}', space=vmem, size = 0x40000, scoped, tag = 'output window, operand 0']
    %7 = vsyncpa [#allocation4], 0
    %s8 = scalar_lea.sflag [#allocation4], 1
    %9 = vsyncpa %s8, 0
    %10 = vsyncpa [#allocation6], 0
    %s11 = scalar_lea.sflag [#allocation6], 1
    %12 = vsyncpa %s11, 0
    loop: start=0, step=1, limit=8
    $region2: #{mha_forward.3} parent=1 // loop_pre_header
      _
    $region3: #{mha_forward.3} parent=1 // loop_header
      %s14 = sphi 0, %s18
      %p15 = scmp.ge.s32.totalorder %s14, 8
      %s21 = sphi 0, %s40
      %s22 = sphi 0, %s36
      %s23 = sphi 0, %s32
      %s24 = sphi 0, %s21
      %s25 = sphi 0, %s22
      %s26 = sphi 0, %s23
      %s27 = sphi 0, %s24
      %s28 = sphi 0, %s25
      %s29 = sphi 0, %s26
      %s45 = sphi 0, %s47
      %s48 = sphi 0, %s45
      %s49 = sphi 0, %s48
      %s65 = sphi 0, %s49
      %s73 = sphi 0, %s75
      %s76 = sphi 0, %s73
      %s77 = sphi 0, %s76
      %s93 = sphi 0, %s77
      %s101 = sphi 0, %s103
      %s104 = sphi 0, %s101
      %s105 = sphi 0, %s104
      %s121 = sphi 0, %s105
    $region4: #{mha_forward.3} parent=1 // loop_header_branch
      %17 = sbr.rel (%p15) target = $region8
    $region5: #{mha_forward.3} parent=1 // loop_body
      %s19 = ssub.s32 %s14, 1
      %s20 = ssub.s32 %s14, 2
      %s30 = sadd.s32 1, %s23
      %p31 = scmp.ge.s32.totalorder %s30, 1
      %s32 = scalar_select %p31, 0, %s30
      %s33 = sadd.s32 1, %s22
      %s34 = scalar_select %p31, %s33, %s22
      %p35 = scmp.ge.s32.totalorder %s34, 3
      %s36 = scalar_select %p35, 0, %s34
      %s37 = sadd.s32 1, %s21
      %s38 = scalar_select %p35, %s37, %s21
      %p39 = scmp.ge.s32.totalorder %s38, 2
      %s40 = scalar_select %p39, 0, %s38
      %s41 = ssub.s32 %s21, %s40
      %s42 = ssub.s32 %s23, %s32
      %s43 = sor.u32 %s41, %s42
      %p44 = scmp.eq.s32.totalorder %s43, 0
      %s46 = sadd.s32 %s45, 1
      %s47 = scalar_select %p44, %s45, %s46
      %p50 = pneg %p44
      %p51 = scmp.eq.s32.totalorder %s14, 5
      %p52 = por %p50, %p51
      %p53 = scmp.ne.s32.totalorder %s45, %s48
      %p54 = scmp.eq.s32.totalorder %s14, 0
      %p55 = por %p53, %p54
      %p56 = scmp.ne.s32.totalorder %s45, %s48
      %p57 = scmp.eq.s32.totalorder %s19, 5
      %p58 = por %p56, %p57
      %p59 = scmp.ne.s32.totalorder %s48, %s49
      %p60 = scmp.eq.s32.totalorder %s19, 0
      %p61 = por %p59, %p60
      %p62 = scmp.ne.s32.totalorder %s48, %s49
      %p63 = scmp.eq.s32.totalorder %s20, 5
      %p64 = por %p62, %p63
      %p66 = scmp.ne.s32.totalorder %s49, %s65
      %p67 = scmp.eq.s32.totalorder %s20, 0
      %p68 = por %p66, %p67
      %s69 = ssub.s32 %s23, %s32
      %s70 = ssub.s32 %s22, %s36
      %s71 = sor.u32 %s69, %s70
      %p72 = scmp.eq.s32.totalorder %s71, 0
      %s74 = sadd.s32 %s73, 1
      %s75 = scalar_select %p72, %s73, %s74
      %p78 = pneg %p72
      %p79 = scmp.eq.s32.totalorder %s14, 5
      %p80 = por %p78, %p79
      %p81 = scmp.ne.s32.totalorder %s73, %s76
      %p82 = scmp.eq.s32.totalorder %s14, 0
      %p83 = por %p81, %p82
      %p84 = scmp.ne.s32.totalorder %s73, %s76
      %p85 = scmp.eq.s32.totalorder %s19, 5
      %p86 = por %p84, %p85
      %p87 = scmp.ne.s32.totalorder %s76, %s77
      %p88 = scmp.eq.s32.totalorder %s19, 0
      %p89 = por %p87, %p88
      %p90 = scmp.ne.s32.totalorder %s76, %s77
      %p91 = scmp.eq.s32.totalorder %s20, 5
      %p92 = por %p90, %p91
      %p94 = scmp.ne.s32.totalorder %s77, %s93
      %p95 = scmp.eq.s32.totalorder %s20, 0
      %p96 = por %p94, %p95
      %s97 = ssub.s32 %s21, %s40
      %s98 = ssub.s32 %s22, %s36
      %s99 = sor.u32 %s97, %s98
      %p100 = scmp.eq.s32.totalorder %s99, 0
      %s102 = sadd.s32 %s101, 1
      %s103 = scalar_select %p100, %s101, %s102
      %p106 = pneg %p100
      %p107 = scmp.eq.s32.totalorder %s14, 5
      %p108 = por %p106, %p107
      %p109 = scmp.ne.s32.totalorder %s101, %s104
      %p110 = scmp.eq.s32.totalorder %s14, 0
      %p111 = por %p109, %p110
      %p112 = scmp.ne.s32.totalorder %s101, %s104
      %p113 = scmp.eq.s32.totalorder %s19, 5
      %p114 = por %p112, %p113
      %p115 = scmp.ne.s32.totalorder %s104, %s105
      %p116 = scmp.eq.s32.totalorder %s19, 0
      %p117 = por %p115, %p116
      %p118 = scmp.ne.s32.totalorder %s104, %s105
      %p119 = scmp.eq.s32.totalorder %s20, 5
      %p120 = por %p118, %p119
      %p122 = scmp.ne.s32.totalorder %s105, %s121
      %p123 = scmp.eq.s32.totalorder %s20, 0
      %p124 = por %p122, %p123
      %p125 = scmp.le.s32.totalorder 1, %s14
      %p126 = scmp.lt.s32.totalorder %s14, 7
      %p127 = pnand %p125, %p126
      %p128 = pneg %p127
      // Predicated region
      $region9: #{mha_forward.3} parent=5 // pred_check
        _
      $region10: #{mha_forward.3} parent=5 // pred_check_branch
        %130 = sbr.rel (%p127) target = $region12
      $region11: #{mha_forward.3} parent=5 // pred_region
        %s131 = ssub.s32 %s14, 1
      $region12: #{mha_forward.3} parent=5 // pred_fallthru
        _
      %p132 = scmp.lt.s32.totalorder %s14, 6
      // Predicated region
      $region13: #{mha_forward.3} parent=5 // pred_check
        %p133 = pneg %p132
      $region14: #{mha_forward.3} parent=5 // pred_check_branch
        %135 = sbr.rel (%p133) target = $region16
      $region15: #{mha_forward.3} parent=5 // pred_region
        // Predicated region
        $region17: #{mha_forward.3} parent=15 // pred_check
          %p136 = pneg %p55
        $region18: #{mha_forward.3} parent=15 // pred_check_branch
          %138 = sbr.rel (%p136) target = $region20
        $region19: #{mha_forward.3} parent=15 // pred_region
          %s139 = sand.u32 %s45, 1
          %s140 = scalar_lea.sflag [#allocation4], %s139
          %s141 = sand.u32 %s45, 1
          %s142 = smul.addr %s141, 256
          %s143 = scalar_lea.vmem [#allocation3], %s142
          %s144 = smul.u32 32, %s21
          %s146 = ssub.s32 4096, 4096
          %147 = vsyncadd %s140, %s146
          %s148 = sadd.s32 %s23, %s144
          %s149 = smul.addr %s148, 128
          %s150 = scalar_lea.hbm %s0, %s149
          %s151 = sshll.u32 %s143, 4
          %s152 = int_to_ptr.vmem [resolvable:$true] %s151
          %157 = dma.hbm_to_vmem [thread:$0]  %s150, 4096, %s152, %s140, 128, 128, 8
        $region20: #{mha_forward.3} parent=15 // pred_fallthru
          _
        // Predicated region
        $region21: #{mha_forward.3} parent=15 // pred_check
          %p158 = pneg %p83
        $region22: #{mha_forward.3} parent=15 // pred_check_branch
          %160 = sbr.rel (%p158) target = $region24
        $region23: #{mha_forward.3} parent=15 // pred_region
          %s161 = sand.u32 %s73, 1
          %s162 = scalar_lea.sflag [#allocation6], %s161
          %s163 = sand.u32 %s73, 1
          %s164 = smul.addr %s163, 128
          %s165 = scalar_lea.vmem [#allocation5], %s164
          %s166 = smul.u32 16, %s23
          %s168 = ssub.s32 2048, 2048
          %169 = vsyncadd %s162, %s168
          %s170 = smul.addr %s166, 3
          %s171 = sadd.s32 %s22, %s170
          %s172 = smul.addr %s171, 128
          %s173 = scalar_lea.hbm %s1, %s172
          %s174 = sshll.u32 %s165, 4
          %s175 = int_to_ptr.vmem [resolvable:$true] %s174
          %180 = dma.hbm_to_vmem [thread:$0]  %s173, 2048, %s175, %s162, 384, 128, 8
        $region24: #{mha_forward.3} parent=15 // pred_fallthru
          _
      $region16: #{mha_forward.3} parent=5 // pred_fallthru
        _
      %p181 = scmp.le.s32.totalorder 1, %s14
      %p182 = scmp.lt.s32.totalorder %s14, 7
      %p183 = pnand %p181, %p182
      %p184 = pneg %p183
      // Predicated region
      $region25: #{mha_forward.3} parent=5 // pred_check
        _
      $region26: #{mha_forward.3} parent=5 // pred_check_branch
        %186 = sbr.rel (%p183) target = $region28
      $region27: #{mha_forward.3} parent=5 // pred_region
        %s187 = ssub.s32 %s14, 1
        %s188 = sand.u32 %s48, 1
        %s189 = scalar_lea.sflag [#allocation4], %s188
        %s190 = sand.u32 %s48, 1
        %s191 = smul.addr %s190, 256
        %s192 = scalar_lea.vmem [#allocation3], %s191
        // Predicated region
        $region29: #{mha_forward.3} parent=27 // pred_check
          %p193 = pneg %p61
        $region30: #{mha_forward.3} parent=27 // pred_check_branch
          %195 = sbr.rel (%p193) target = $region32
        $region31: #{mha_forward.3} parent=27 // pred_region
          %196 = dma.done %s189, 4096
        $region32: #{mha_forward.3} parent=27 // pred_fallthru
          _
        %s197 = sand.u32 %s76, 1
        %s198 = scalar_lea.sflag [#allocation6], %s197
        %s199 = sand.u32 %s76, 1
        %s200 = smul.addr %s199, 128
        %s201 = scalar_lea.vmem [#allocation5], %s200
        // Predicated region
        $region33: #{mha_forward.3} parent=27 // pred_check
          %p202 = pneg %p89
        $region34: #{mha_forward.3} parent=27 // pred_check_branch
          %204 = sbr.rel (%p202) target = $region36
        $region35: #{mha_forward.3} parent=27 // pred_region
          %205 = dma.done %s198, 2048
        $region36: #{mha_forward.3} parent=27 // pred_fallthru
          _
        %s206 = sand.u32 %s48, 1
        %s207 = scalar_lea.sflag [#allocation4], %s206
        %s208 = sand.u32 %s48, 1
        %s209 = smul.addr %s208, 256
        %s210 = scalar_lea.vmem [#allocation3], %s209
        %p211 = pneg %p61
        %p212 = pneg %p58
        %s213 = sand.u32 %s76, 1
        %s214 = scalar_lea.sflag [#allocation6], %s213
        %s215 = sand.u32 %s76, 1
        %s216 = smul.addr %s215, 128
        %s217 = scalar_lea.vmem [#allocation5], %s216
        %p218 = pneg %p89
        %p219 = pneg %p86
        %p220 = pneg %p117
        %p221 = pneg %p114
        %s222 = sand.u32 %s104, 1
        %s223 = sand.u32 %s104, 1
        %s224 = smul.addr %s223, 256
        %s225 = scalar_lea.vmem [#allocation7], %s224
        %s226 = smul.u32 32, %s24
        %s227 = smul.u32 16, %s26
        %s228 = smul.u32 32, %s24
        %p229 = scmp.eq.s32.totalorder %s26, 0
        // Predicated region
        $region37: #{mha_forward.3} parent=27 // pred_check
          %p230 = pneg %p229
        $region38: #{mha_forward.3} parent=27 // pred_check_branch
          %232 = sbr.rel (%p230) target = $region40
        $region39: #{mha_forward.3} parent=27 // pred_region
          %233 = vst [vmem:[#allocation2] sm:$0xff] 0.0
          %234 = vst [vmem:[#allocation2 + $0x8] sm:$0xff] 0.0
          %235 = vst [vmem:[#allocation2 + $0x10] sm:$0xff] 0.0
          %236 = vst [vmem:[#allocation2 + $0x18] sm:$0xff] 0.0
          %237 = vst [vmem:[#allocation2 + $0x20] sm:$0xff] 0.0
          %238 = vst [vmem:[#allocation2 + $0x28] sm:$0xff] 0.0
          %239 = vst [vmem:[#allocation2 + $0x30] sm:$0xff] 0.0
          %240 = vst [vmem:[#allocation2 + $0x38] sm:$0xff] 0.0
          %241 = vst [vmem:[#allocation2 + $0x40] sm:$0xff] 0.0
          %242 = vst [vmem:[#allocation2 + $0x48] sm:$0xff] 0.0
          %243 = vst [vmem:[#allocation2 + $0x50] sm:$0xff] 0.0
          %244 = vst [vmem:[#allocation2 + $0x58] sm:$0xff] 0.0
          %245 = vst [vmem:[#allocation2 + $0x60] sm:$0xff] 0.0
          %246 = vst [vmem:[#allocation2 + $0x68] sm:$0xff] 0.0
          %247 = vst [vmem:[#allocation2 + $0x70] sm:$0xff] 0.0
          %248 = vst [vmem:[#allocation2 + $0x78] sm:$0xff] 0.0
          %249 = vst [vmem:[#allocation2 + $0x80] sm:$0xff] 0.0
          %250 = vst [vmem:[#allocation2 + $0x88] sm:$0xff] 0.0
          %251 = vst [vmem:[#allocation2 + $0x90] sm:$0xff] 0.0
          %252 = vst [vmem:[#allocation2 + $0x98] sm:$0xff] 0.0
          %253 = vst [vmem:[#allocation2 + $0xa0] sm:$0xff] 0.0
          %254 = vst [vmem:[#allocation2 + $0xa8] sm:$0xff] 0.0
          %255 = vst [vmem:[#allocation2 + $0xb0] sm:$0xff] 0.0
          %256 = vst [vmem:[#allocation2 + $0xb8] sm:$0xff] 0.0
          %257 = vst [vmem:[#allocation2 + $0xc0] sm:$0xff] 0.0
          %258 = vst [vmem:[#allocation2 + $0xc8] sm:$0xff] 0.0
          %259 = vst [vmem:[#allocation2 + $0xd0] sm:$0xff] 0.0
          %260 = vst [vmem:[#allocation2 + $0xd8] sm:$0xff] 0.0
          %261 = vst [vmem:[#allocation2 + $0xe0] sm:$0xff] 0.0
          %262 = vst [vmem:[#allocation2 + $0xe8] sm:$0xff] 0.0
          %263 = vst [vmem:[#allocation2 + $0xf0] sm:$0xff] 0.0
          %264 = vst [vmem:[#allocation2 + $0xf8] sm:$0xff] 0.0
        $region40: #{mha_forward.3} parent=27 // pred_fallthru
          _
        %v265 = vld [vmem:[#allocation2] sm:$0xff]
        %v266 = vld [vmem:[#allocation2 + $0x8] sm:$0xff]
        %v267 = vld [vmem:[#allocation2 + $0x10] sm:$0xff]
        %v268 = vld [vmem:[#allocation2 + $0x18] sm:$0xff]
        %v269 = vld [vmem:[#allocation2 + $0x20] sm:$0xff]
        %v270 = vld [vmem:[#allocation2 + $0x28] sm:$0xff]
        %v271 = vld [vmem:[#allocation2 + $0x30] sm:$0xff]
        %v272 = vld [vmem:[#allocation2 + $0x38] sm:$0xff]
        %v273 = vld [vmem:[#allocation2 + $0x40] sm:$0xff]
        %v274 = vld [vmem:[#allocation2 + $0x48] sm:$0xff]
        %v275 = vld [vmem:[#allocation2 + $0x50] sm:$0xff]
        %v276 = vld [vmem:[#allocation2 + $0x58] sm:$0xff]
        %v277 = vld [vmem:[#allocation2 + $0x60] sm:$0xff]
        %v278 = vld [vmem:[#allocation2 + $0x68] sm:$0xff]
        %v279 = vld [vmem:[#allocation2 + $0x70] sm:$0xff]
        %v280 = vld [vmem:[#allocation2 + $0x78] sm:$0xff]
        %v281 = vld [vmem:[#allocation2 + $0x80] sm:$0xff]
        %v282 = vld [vmem:[#allocation2 + $0x88] sm:$0xff]
        %v283 = vld [vmem:[#allocation2 + $0x90] sm:$0xff]
        %v284 = vld [vmem:[#allocation2 + $0x98] sm:$0xff]
        %v285 = vld [vmem:[#allocation2 + $0xa0] sm:$0xff]
        %v286 = vld [vmem:[#allocation2 + $0xa8] sm:$0xff]
        %v287 = vld [vmem:[#allocation2 + $0xb0] sm:$0xff]
        %v288 = vld [vmem:[#allocation2 + $0xb8] sm:$0xff]
        %v289 = vld [vmem:[#allocation2 + $0xc0] sm:$0xff]
        %v290 = vld [vmem:[#allocation2 + $0xc8] sm:$0xff]
        %v291 = vld [vmem:[#allocation2 + $0xd0] sm:$0xff]
        %v292 = vld [vmem:[#allocation2 + $0xd8] sm:$0xff]
        %v293 = vld [vmem:[#allocation2 + $0xe0] sm:$0xff]
        %v294 = vld [vmem:[#allocation2 + $0xe8] sm:$0xff]
        %v295 = vld [vmem:[#allocation2 + $0xf0] sm:$0xff]
        %v296 = vld [vmem:[#allocation2 + $0xf8] sm:$0xff]
        %v297 = vld [vmem:[%s192] sm:$0xff]
        %v298 = vld [vmem:[%s192 + $0x8] sm:$0xff]
        %v299 = vld [vmem:[%s192 + $0x10] sm:$0xff]
        %v300 = vld [vmem:[%s192 + $0x18] sm:$0xff]
        %v301 = vld [vmem:[%s192 + $0x20] sm:$0xff]
        %v302 = vld [vmem:[%s192 + $0x28] sm:$0xff]
        %v303 = vld [vmem:[%s192 + $0x30] sm:$0xff]
        %v304 = vld [vmem:[%s192 + $0x38] sm:$0xff]
        %v305 = vld [vmem:[%s192 + $0x40] sm:$0xff]
        %v306 = vld [vmem:[%s192 + $0x48] sm:$0xff]
        %v307 = vld [vmem:[%s192 + $0x50] sm:$0xff]
        %v308 = vld [vmem:[%s192 + $0x58] sm:$0xff]
        %v309 = vld [vmem:[%s192 + $0x60] sm:$0xff]
        %v310 = vld [vmem:[%s192 + $0x68] sm:$0xff]
        %v311 = vld [vmem:[%s192 + $0x70] sm:$0xff]
        %v312 = vld [vmem:[%s192 + $0x78] sm:$0xff]
        %v313 = vld [vmem:[%s192 + $0x80] sm:$0xff]
        %v314 = vld [vmem:[%s192 + $0x88] sm:$0xff]
        %v315 = vld [vmem:[%s192 + $0x90] sm:$0xff]
        %v316 = vld [vmem:[%s192 + $0x98] sm:$0xff]
        %v317 = vld [vmem:[%s192 + $0xa0] sm:$0xff]
        %v318 = vld [vmem:[%s192 + $0xa8] sm:$0xff]
        %v319 = vld [vmem:[%s192 + $0xb0] sm:$0xff]
        %v320 = vld [vmem:[%s192 + $0xb8] sm:$0xff]
        %v321 = vld [vmem:[%s192 + $0xc0] sm:$0xff]
        %v322 = vld [vmem:[%s192 + $0xc8] sm:$0xff]
        %v323 = vld [vmem:[%s192 + $0xd0] sm:$0xff]
        %v324 = vld [vmem:[%s192 + $0xd8] sm:$0xff]
        %v325 = vld [vmem:[%s192 + $0xe0] sm:$0xff]
        %v326 = vld [vmem:[%s192 + $0xe8] sm:$0xff]
        %v327 = vld [vmem:[%s192 + $0xf0] sm:$0xff]
        %v328 = vld [vmem:[%s192 + $0xf8] sm:$0xff]
        %v329 = vld [vmem:[%s201] sm:$0xff]
        %v330 = vld [vmem:[%s201 + $0x8] sm:$0xff]
        %v331 = vld [vmem:[%s201 + $0x10] sm:$0xff]
        %v332 = vld [vmem:[%s201 + $0x18] sm:$0xff]
        %v333 = vld [vmem:[%s201 + $0x20] sm:$0xff]
        %v334 = vld [vmem:[%s201 + $0x28] sm:$0xff]
        %v335 = vld [vmem:[%s201 + $0x30] sm:$0xff]
        %v336 = vld [vmem:[%s201 + $0x38] sm:$0xff]
        %v337 = vld [vmem:[%s201 + $0x40] sm:$0xff]
        %v338 = vld [vmem:[%s201 + $0x48] sm:$0xff]
        %v339 = vld [vmem:[%s201 + $0x50] sm:$0xff]
        %v340 = vld [vmem:[%s201 + $0x58] sm:$0xff]
        %v341 = vld [vmem:[%s201 + $0x60] sm:$0xff]
        %v342 = vld [vmem:[%s201 + $0x68] sm:$0xff]
        %v343 = vld [vmem:[%s201 + $0x70] sm:$0xff]
        %v344 = vld [vmem:[%s201 + $0x78] sm:$0xff]
        %345 = vmatprep.subr.mxu0 0.0
        %346 = vmatpush1.msra.mxu0 %v344
        %347 = vmatprep.subr.mxu0 0.0
        %348 = vmatpush1.msra.mxu0 %v343
        %349 = vmatprep.subr.mxu0 0.0
        %350 = vmatpush1.msra.mxu0 %v342
        %351 = vmatprep.subr.mxu0 0.0
        %352 = vmatpush1.msra.mxu0 %v341
        %353 = vmatprep.subr.mxu0 0.0
        %354 = vmatpush1.msra.mxu0 %v340
        %355 = vmatprep.subr.mxu0 0.0
        %356 = vmatpush1.msra.mxu0 %v339
        %357 = vmatprep.subr.mxu0 0.0
        %358 = vmatpush1.msra.mxu0 %v338
        %359 = vmatprep.subr.mxu0 0.0
        %360 = vmatpush1.msra.mxu0 %v337
        %361 = vmatprep.subr.mxu0 0.0
        %362 = vmatpush1.msra.mxu0 %v336
        %363 = vmatprep.subr.mxu0 0.0
        %364 = vmatpush1.msra.mxu0 %v335
        %365 = vmatprep.subr.mxu0 0.0
        %366 = vmatpush1.msra.mxu0 %v334
        %367 = vmatprep.subr.mxu0 0.0
        %368 = vmatpush1.msra.mxu0 %v333
        %369 = vmatprep.subr.mxu0 0.0
        %370 = vmatpush1.msra.mxu0 %v332
        %371 = vmatprep.subr.mxu0 0.0
        %372 = vmatpush1.msra.mxu0 %v331
        %373 = vmatprep.subr.mxu0 0.0
        %374 = vmatpush1.msra.mxu0 %v330
        %375 = vmatprep.subr.mxu0 0.0
        %376 = vmatpush1.msra.mxu0 %v329
        %377 = vmatprep.subr.mxu0 0.0
        %378 = vmatpush2.msra.mxu0 0.0
        %379 = vmatprep.subr.mxu0 0.0
        %380 = vmatpush2.msra.mxu0 0.0
        %381 = vmatprep.subr.mxu0 0.0
        %382 = vmatpush2.msra.mxu0 0.0
        %383 = vmatprep.subr.mxu0 0.0
        %384 = vmatpush2.msra.mxu0 0.0
        %385 = vmatprep.subr.mxu0 0.0
        %386 = vmatpush2.msra.mxu0 0.0
        %387 = vmatprep.subr.mxu0 0.0
        %388 = vmatpush2.msra.mxu0 0.0
        %389 = vmatprep.subr.mxu0 0.0
        %390 = vmatpush2.msra.mxu0 0.0
        %391 = vmatprep.subr.mxu0 0.0
        %392 = vmatpush2.msra.mxu0 0.0
        %393 = vmatprep.subr.mxu0 0.0
        %394 = vmatpush2.msra.mxu0 0.0
        %395 = vmatprep.subr.mxu0 0.0
        %396 = vmatpush2.msra.mxu0 0.0
        %397 = vmatprep.subr.mxu0 0.0
        %398 = vmatpush2.msra.mxu0 0.0
        %399 = vmatprep.subr.mxu0 0.0
        %400 = vmatpush2.msra.mxu0 0.0
        %401 = vmatprep.subr.mxu0 0.0
        %402 = vmatpush2.msra.mxu0 0.0
        %403 = vmatprep.subr.mxu0 0.0
        %404 = vmatpush2.msra.mxu0 0.0
        %405 = vmatprep.subr.mxu0 0.0
        %406 = vmatpush2.msra.mxu0 0.0
        %407 = vmatprep.subr.mxu0 0.0
        %408 = vmatpush2.msra.mxu0 0.0
        %409 = vmatprep.mubr.f32.mxu0 0.0
        %410 = vmatmul.mubr.f32.gmra.mxu0 %v297
        %v411 = vpop.f32.mrf.mxu0
        %v412 = vadd.f32 0.0, %v411
        %v413 = vpop.f32.mrf.mxu0
        %414 = vmatprep.mubr.f32.mxu0 0.0
        %415 = vmatmul.mubr.f32.gmra.mxu0 %v298
        %v416 = vpop.f32.mrf.mxu0
        %v417 = vadd.f32 0.0, %v416
        %v418 = vpop.f32.mrf.mxu0
        %419 = vmatprep.mubr.f32.mxu0 0.0
        %420 = vmatmul.mubr.f32.gmra.mxu0 %v299
        %v421 = vpop.f32.mrf.mxu0
        %v422 = vadd.f32 0.0, %v421
        %v423 = vpop.f32.mrf.mxu0
        %424 = vmatprep.mubr.f32.mxu0 0.0
        %425 = vmatmul.mubr.f32.gmra.mxu0 %v300
        %v426 = vpop.f32.mrf.mxu0
        %v427 = vadd.f32 0.0, %v426
        %v428 = vpop.f32.mrf.mxu0
        %429 = vmatprep.mubr.f32.mxu0 0.0
        %430 = vmatmul.mubr.f32.gmra.mxu0 %v301
        %v431 = vpop.f32.mrf.mxu0
        %v432 = vadd.f32 0.0, %v431
        %v433 = vpop.f32.mrf.mxu0
        %434 = vmatprep.mubr.f32.mxu0 0.0
        %435 = vmatmul.mubr.f32.gmra.mxu0 %v302
        %v436 = vpop.f32.mrf.mxu0
        %v437 = vadd.f32 0.0, %v436
        %v438 = vpop.f32.mrf.mxu0
        %439 = vmatprep.mubr.f32.mxu0 0.0
        %440 = vmatmul.mubr.f32.gmra.mxu0 %v303
        %v441 = vpop.f32.mrf.mxu0
        %v442 = vadd.f32 0.0, %v441
        %v443 = vpop.f32.mrf.mxu0
        %444 = vmatprep.mubr.f32.mxu0 0.0
        %445 = vmatmul.mubr.f32.gmra.mxu0 %v304
        %v446 = vpop.f32.mrf.mxu0
        %v447 = vadd.f32 0.0, %v446
        %v448 = vpop.f32.mrf.mxu0
        %449 = vmatprep.mubr.f32.mxu0 0.0
        %450 = vmatmul.mubr.f32.gmra.mxu0 %v305
        %v451 = vpop.f32.mrf.mxu0
        %v452 = vadd.f32 0.0, %v451
        %v453 = vpop.f32.mrf.mxu0
        %454 = vmatprep.mubr.f32.mxu0 0.0
        %455 = vmatmul.mubr.f32.gmra.mxu0 %v306
        %v456 = vpop.f32.mrf.mxu0
        %v457 = vadd.f32 0.0, %v456
        %v458 = vpop.f32.mrf.mxu0
        %459 = vmatprep.mubr.f32.mxu0 0.0
        %460 = vmatmul.mubr.f32.gmra.mxu0 %v307
        %v461 = vpop.f32.mrf.mxu0
        %v462 = vadd.f32 0.0, %v461
        %v463 = vpop.f32.mrf.mxu0
        %464 = vmatprep.mubr.f32.mxu0 0.0
        %465 = vmatmul.mubr.f32.gmra.mxu0 %v308
        %v466 = vpop.f32.mrf.mxu0
        %v467 = vadd.f32 0.0, %v466
        %v468 = vpop.f32.mrf.mxu0
        %469 = vmatprep.mubr.f32.mxu0 0.0
        %470 = vmatmul.mubr.f32.gmra.mxu0 %v309
        %v471 = vpop.f32.mrf.mxu0
        %v472 = vadd.f32 0.0, %v471
        %v473 = vpop.f32.mrf.mxu0
        %474 = vmatprep.mubr.f32.mxu0 0.0
        %475 = vmatmul.mubr.f32.gmra.mxu0 %v310
        %v476 = vpop.f32.mrf.mxu0
        %v477 = vadd.f32 0.0, %v476
        %v478 = vpop.f32.mrf.mxu0
        %479 = vmatprep.mubr.f32.mxu0 0.0
        %480 = vmatmul.mubr.f32.gmra.mxu0 %v311
        %v481 = vpop.f32.mrf.mxu0
        %v482 = vadd.f32 0.0, %v481
        %v483 = vpop.f32.mrf.mxu0
        %484 = vmatprep.mubr.f32.mxu0 0.0
        %485 = vmatmul.mubr.f32.gmra.mxu0 %v312
        %v486 = vpop.f32.mrf.mxu0
        %v487 = vadd.f32 0.0, %v486
        %v488 = vpop.f32.mrf.mxu0
        %489 = vmatprep.mubr.f32.mxu0 0.0
        %490 = vmatmul.mubr.f32.gmra.mxu0 %v313
        %v491 = vpop.f32.mrf.mxu0
        %v492 = vadd.f32 0.0, %v491
        %v493 = vpop.f32.mrf.mxu0
        %494 = vmatprep.mubr.f32.mxu0 0.0
        %495 = vmatmul.mubr.f32.gmra.mxu0 %v314
        %v496 = vpop.f32.mrf.mxu0
        %v497 = vadd.f32 0.0, %v496
        %v498 = vpop.f32.mrf.mxu0
        %499 = vmatprep.mubr.f32.mxu0 0.0
        %500 = vmatmul.mubr.f32.gmra.mxu0 %v315
        %v501 = vpop.f32.mrf.mxu0
        %v502 = vadd.f32 0.0, %v501
        %v503 = vpop.f32.mrf.mxu0
        %504 = vmatprep.mubr.f32.mxu0 0.0
        %505 = vmatmul.mubr.f32.gmra.mxu0 %v316
        %v506 = vpop.f32.mrf.mxu0
        %v507 = vadd.f32 0.0, %v506
        %v508 = vpop.f32.mrf.mxu0
        %509 = vmatprep.mubr.f32.mxu0 0.0
        %510 = vmatmul.mubr.f32.gmra.mxu0 %v317
        %v511 = vpop.f32.mrf.mxu0
        %v512 = vadd.f32 0.0, %v511
        %v513 = vpop.f32.mrf.mxu0
        %514 = vmatprep.mubr.f32.mxu0 0.0
        %515 = vmatmul.mubr.f32.gmra.mxu0 %v318
        %v516 = vpop.f32.mrf.mxu0
        %v517 = vadd.f32 0.0, %v516
        %v518 = vpop.f32.mrf.mxu0
        %519 = vmatprep.mubr.f32.mxu0 0.0
        %520 = vmatmul.mubr.f32.gmra.mxu0 %v319
        %v521 = vpop.f32.mrf.mxu0
        %v522 = vadd.f32 0.0, %v521
        %v523 = vpop.f32.mrf.mxu0
        %524 = vmatprep.mubr.f32.mxu0 0.0
        %525 = vmatmul.mubr.f32.gmra.mxu0 %v320
        %v526 = vpop.f32.mrf.mxu0
        %v527 = vadd.f32 0.0, %v526
        %v528 = vpop.f32.mrf.mxu0
        %529 = vmatprep.mubr.f32.mxu0 0.0
        %530 = vmatmul.mubr.f32.gmra.mxu0 %v321
        %v531 = vpop.f32.mrf.mxu0
        %v532 = vadd.f32 0.0, %v531
        %v533 = vpop.f32.mrf.mxu0
        %534 = vmatprep.mubr.f32.mxu0 0.0
        %535 = vmatmul.mubr.f32.gmra.mxu0 %v322
        %v536 = vpop.f32.mrf.mxu0
        %v537 = vadd.f32 0.0, %v536
        %v538 = vpop.f32.mrf.mxu0
        %539 = vmatprep.mubr.f32.mxu0 0.0
        %540 = vmatmul.mubr.f32.gmra.mxu0 %v323
        %v541 = vpop.f32.mrf.mxu0
        %v542 = vadd.f32 0.0, %v541
        %v543 = vpop.f32.mrf.mxu0
        %544 = vmatprep.mubr.f32.mxu0 0.0
        %545 = vmatmul.mubr.f32.gmra.mxu0 %v324
        %v546 = vpop.f32.mrf.mxu0
        %v547 = vadd.f32 0.0, %v546
        %v548 = vpop.f32.mrf.mxu0
        %549 = vmatprep.mubr.f32.mxu0 0.0
        %550 = vmatmul.mubr.f32.gmra.mxu0 %v325
        %v551 = vpop.f32.mrf.mxu0
        %v552 = vadd.f32 0.0, %v551
        %v553 = vpop.f32.mrf.mxu0
        %554 = vmatprep.mubr.f32.mxu0 0.0
        %555 = vmatmul.mubr.f32.gmra.mxu0 %v326
        %v556 = vpop.f32.mrf.mxu0
        %v557 = vadd.f32 0.0, %v556
        %v558 = vpop.f32.mrf.mxu0
        %559 = vmatprep.mubr.f32.mxu0 0.0
        %560 = vmatmul.mubr.f32.gmra.mxu0 %v327
        %v561 = vpop.f32.mrf.mxu0
        %v562 = vadd.f32 0.0, %v561
        %v563 = vpop.f32.mrf.mxu0
        %564 = vmatprep.mubr.f32.mxu0 0.0
        %565 = vmatmul.mubr.f32.gmra.mxu0 %v328
        %v566 = vpop.f32.mrf.mxu0
        %v567 = vadd.f32 0.0, %v566
        %v568 = vpop.f32.mrf.mxu0
        %569 = vdwg.mxu0
        %v570 = vadd.f32 %v265, %v412
        %v571 = vadd.f32 %v266, %v417
        %v572 = vadd.f32 %v267, %v422
        %v573 = vadd.f32 %v268, %v427
        %v574 = vadd.f32 %v269, %v432
        %v575 = vadd.f32 %v270, %v437
        %v576 = vadd.f32 %v271, %v442
        %v577 = vadd.f32 %v272, %v447
        %v578 = vadd.f32 %v273, %v452
        %v579 = vadd.f32 %v274, %v457
        %v580 = vadd.f32 %v275, %v462
        %v581 = vadd.f32 %v276, %v467
        %v582 = vadd.f32 %v277, %v472
        %v583 = vadd.f32 %v278, %v477
        %v584 = vadd.f32 %v279, %v482
        %v585 = vadd.f32 %v280, %v487
        %v586 = vadd.f32 %v281, %v492
        %v587 = vadd.f32 %v282, %v497
        %v588 = vadd.f32 %v283, %v502
        %v589 = vadd.f32 %v284, %v507
        %v590 = vadd.f32 %v285, %v512
        %v591 = vadd.f32 %v286, %v517
        %v592 = vadd.f32 %v287, %v522
        %v593 = vadd.f32 %v288, %v527
        %v594 = vadd.f32 %v289, %v532
        %v595 = vadd.f32 %v290, %v537
        %v596 = vadd.f32 %v291, %v542
        %v597 = vadd.f32 %v292, %v547
        %v598 = vadd.f32 %v293, %v552
        %v599 = vadd.f32 %v294, %v557
        %v600 = vadd.f32 %v295, %v562
        %v601 = vadd.f32 %v296, %v567
        %602 = vst [vmem:[#allocation2] sm:$0xff] %v570
        %603 = vst [vmem:[#allocation2 + $0x8] sm:$0xff] %v571
        %604 = vst [vmem:[#allocation2 + $0x10] sm:$0xff] %v572
        %605 = vst [vmem:[#allocation2 + $0x18] sm:$0xff] %v573
        %606 = vst [vmem:[#allocation2 + $0x20] sm:$0xff] %v574
        %607 = vst [vmem:[#allocation2 + $0x28] sm:$0xff] %v575
        %608 = vst [vmem:[#allocation2 + $0x30] sm:$0xff] %v576
        %609 = vst [vmem:[#allocation2 + $0x38] sm:$0xff] %v577
        %610 = vst [vmem:[#allocation2 + $0x40] sm:$0xff] %v578
        %611 = vst [vmem:[#allocation2 + $0x48] sm:$0xff] %v579
        %612 = vst [vmem:[#allocation2 + $0x50] sm:$0xff] %v580
        %613 = vst [vmem:[#allocation2 + $0x58] sm:$0xff] %v581
        %614 = vst [vmem:[#allocation2 + $0x60] sm:$0xff] %v582
        %615 = vst [vmem:[#allocation2 + $0x68] sm:$0xff] %v583
        %616 = vst [vmem:[#allocation2 + $0x70] sm:$0xff] %v584
        %617 = vst [vmem:[#allocation2 + $0x78] sm:$0xff] %v585
        %618 = vst [vmem:[#allocation2 + $0x80] sm:$0xff] %v586
        %619 = vst [vmem:[#allocation2 + $0x88] sm:$0xff] %v587
        %620 = vst [vmem:[#allocation2 + $0x90] sm:$0xff] %v588
        %621 = vst [vmem:[#allocation2 + $0x98] sm:$0xff] %v589
        %622 = vst [vmem:[#allocation2 + $0xa0] sm:$0xff] %v590
        %623 = vst [vmem:[#allocation2 + $0xa8] sm:$0xff] %v591
        %624 = vst [vmem:[#allocation2 + $0xb0] sm:$0xff] %v592
        %625 = vst [vmem:[#allocation2 + $0xb8] sm:$0xff] %v593
        %626 = vst [vmem:[#allocation2 + $0xc0] sm:$0xff] %v594
        %627 = vst [vmem:[#allocation2 + $0xc8] sm:$0xff] %v595
        %628 = vst [vmem:[#allocation2 + $0xd0] sm:$0xff] %v596
        %629 = vst [vmem:[#allocation2 + $0xd8] sm:$0xff] %v597
        %630 = vst [vmem:[#allocation2 + $0xe0] sm:$0xff] %v598
        %631 = vst [vmem:[#allocation2 + $0xe8] sm:$0xff] %v599
        %632 = vst [vmem:[#allocation2 + $0xf0] sm:$0xff] %v600
        %633 = vst [vmem:[#allocation2 + $0xf8] sm:$0xff] %v601
        // Predicated region
        $region41: #{mha_forward.3} parent=27 // pred_check
          %p634 = pneg %p229
        $region42: #{mha_forward.3} parent=27 // pred_check_branch
          %636 = sbr.rel (%p634) target = $region44
        $region43: #{mha_forward.3} parent=27 // pred_region
          %v637 = vld [vmem:[#allocation2] sm:$0xff]
          %v638 = vld [vmem:[#allocation2 + $0x8] sm:$0xff]
          %v639 = vld [vmem:[#allocation2 + $0x10] sm:$0xff]
          %v640 = vld [vmem:[#allocation2 + $0x18] sm:$0xff]
          %v641 = vld [vmem:[#allocation2 + $0x20] sm:$0xff]
          %v642 = vld [vmem:[#allocation2 + $0x28] sm:$0xff]
          %v643 = vld [vmem:[#allocation2 + $0x30] sm:$0xff]
          %v644 = vld [vmem:[#allocation2 + $0x38] sm:$0xff]
          %v645 = vld [vmem:[#allocation2 + $0x40] sm:$0xff]
          %v646 = vld [vmem:[#allocation2 + $0x48] sm:$0xff]
          %v647 = vld [vmem:[#allocation2 + $0x50] sm:$0xff]
          %v648 = vld [vmem:[#allocation2 + $0x58] sm:$0xff]
          %v649 = vld [vmem:[#allocation2 + $0x60] sm:$0xff]
          %v650 = vld [vmem:[#allocation2 + $0x68] sm:$0xff]
          %v651 = vld [vmem:[#allocation2 + $0x70] sm:$0xff]
          %v652 = vld [vmem:[#allocation2 + $0x78] sm:$0xff]
          %v653 = vld [vmem:[#allocation2 + $0x80] sm:$0xff]
          %v654 = vld [vmem:[#allocation2 + $0x88] sm:$0xff]
          %v655 = vld [vmem:[#allocation2 + $0x90] sm:$0xff]
          %v656 = vld [vmem:[#allocation2 + $0x98] sm:$0xff]
          %v657 = vld [vmem:[#allocation2 + $0xa0] sm:$0xff]
          %v658 = vld [vmem:[#allocation2 + $0xa8] sm:$0xff]
          %v659 = vld [vmem:[#allocation2 + $0xb0] sm:$0xff]
          %v660 = vld [vmem:[#allocation2 + $0xb8] sm:$0xff]
          %v661 = vld [vmem:[#allocation2 + $0xc0] sm:$0xff]
          %v662 = vld [vmem:[#allocation2 + $0xc8] sm:$0xff]
          %v663 = vld [vmem:[#allocation2 + $0xd0] sm:$0xff]
          %v664 = vld [vmem:[#allocation2 + $0xd8] sm:$0xff]
          %v665 = vld [vmem:[#allocation2 + $0xe0] sm:$0xff]
          %v666 = vld [vmem:[#allocation2 + $0xe8] sm:$0xff]
          %v667 = vld [vmem:[#allocation2 + $0xf0] sm:$0xff]
          %v668 = vld [vmem:[#allocation2 + $0xf8] sm:$0xff]
          %669 = vst [vmem:[%s225] sm:$0xff] %v637
          %670 = vst [vmem:[%s225 + $0x8] sm:$0xff] %v638
          %671 = vst [vmem:[%s225 + $0x10] sm:$0xff] %v639
          %672 = vst [vmem:[%s225 + $0x18] sm:$0xff] %v640
          %673 = vst [vmem:[%s225 + $0x20] sm:$0xff] %v641
          %674 = vst [vmem:[%s225 + $0x28] sm:$0xff] %v642
          %675 = vst [vmem:[%s225 + $0x30] sm:$0xff] %v643
          %676 = vst [vmem:[%s225 + $0x38] sm:$0xff] %v644
          %677 = vst [vmem:[%s225 + $0x40] sm:$0xff] %v645
          %678 = vst [vmem:[%s225 + $0x48] sm:$0xff] %v646
          %679 = vst [vmem:[%s225 + $0x50] sm:$0xff] %v647
          %680 = vst [vmem:[%s225 + $0x58] sm:$0xff] %v648
          %681 = vst [vmem:[%s225 + $0x60] sm:$0xff] %v649
          %682 = vst [vmem:[%s225 + $0x68] sm:$0xff] %v650
          %683 = vst [vmem:[%s225 + $0x70] sm:$0xff] %v651
          %684 = vst [vmem:[%s225 + $0x78] sm:$0xff] %v652
          %685 = vst [vmem:[%s225 + $0x80] sm:$0xff] %v653
          %686 = vst [vmem:[%s225 + $0x88] sm:$0xff] %v654
          %687 = vst [vmem:[%s225 + $0x90] sm:$0xff] %v655
          %688 = vst [vmem:[%s225 + $0x98] sm:$0xff] %v656
          %689 = vst [vmem:[%s225 + $0xa0] sm:$0xff] %v657
          %690 = vst [vmem:[%s225 + $0xa8] sm:$0xff] %v658
          %691 = vst [vmem:[%s225 + $0xb0] sm:$0xff] %v659
          %692 = vst [vmem:[%s225 + $0xb8] sm:$0xff] %v660
          %693 = vst [vmem:[%s225 + $0xc0] sm:$0xff] %v661
          %694 = vst [vmem:[%s225 + $0xc8] sm:$0xff] %v662
          %695 = vst [vmem:[%s225 + $0xd0] sm:$0xff] %v663
          %696 = vst [vmem:[%s225 + $0xd8] sm:$0xff] %v664
          %697 = vst [vmem:[%s225 + $0xe0] sm:$0xff] %v665
          %698 = vst [vmem:[%s225 + $0xe8] sm:$0xff] %v666
          %699 = vst [vmem:[%s225 + $0xf0] sm:$0xff] %v667
          %700 = vst [vmem:[%s225 + $0xf8] sm:$0xff] %v668
        $region44: #{mha_forward.3} parent=27 // pred_fallthru
          _
        %s701 = sand.u32 %s104, 1
        %s702 = sand.u32 %s104, 1
        %s703 = smul.addr %s702, 256
        %s704 = scalar_lea.vmem [#allocation7], %s703
        // Predicated region
        $region45: #{mha_forward.3} parent=27 // pred_check
          %p705 = pneg %p114
        $region46: #{mha_forward.3} parent=27 // pred_check_branch
          %707 = sbr.rel (%p705) target = $region48
        $region47: #{mha_forward.3} parent=27 // pred_region
          %s708 = smul.u32 32, %s24
          %s709 = smul.addr %s708, 3
          %s710 = sadd.s32 %s25, %s709
          %s711 = smul.addr %s710, 8
          %s712 = scalar_lea.vmem %s2, %s711
          // Predicated region
          $region49: #{mha_forward.3} parent=47 // pred_check
            _
          $region50: #{mha_forward.3} parent=47 // pred_check_branch
            %714 = sbr.rel (0) target = $region52
          $region51: #{mha_forward.3} parent=47 // pred_region
            // Predicated region
            $region53: #{mha_forward.3} parent=51 // pred_check
              _
            $region54: #{mha_forward.3} parent=51 // pred_check_branch
              %716 = sbr.rel (0) target = $region56
            $region55: #{mha_forward.3} parent=51 // pred_region
              // Predicated region
              $region68: #{mha_forward.3} parent=55 // pred_check
                _
              $region69: #{mha_forward.3} parent=55 // pred_check_branch
                %794 = sbr.rel (0) target = $region71
              $region70: #{mha_forward.3} parent=55 // pred_region
                loop: start=0, step=1, limit=1
                $region72: #{mha_forward.3} parent=70 // loop_pre_header
                  _
                $region73: #{mha_forward.3} parent=70 // loop_header
                  %s796 = sphi 0, %s800
                  %p797 = scmp.ge.s32.totalorder %s796, 1
                  %s801 = sphi %s704, %s704
                  %s802 = sphi %s712, %s712
                $region74: #{mha_forward.3} parent=70 // loop_header_branch
                  %799 = sbr.rel (%p797) target = $region78
                $region75: #{mha_forward.3} parent=70 // loop_body
                  %v803 = vld [vmem:[%s801] sm:$0xff]
                  %804 = vst [vmem:[%s802] sm:$0xff] %v803
                  %v805 = vld [vmem:[%s801 + $0x8] sm:$0xff]
                  %806 = vst [vmem:[%s802 + $0x18] sm:$0xff] %v805
                  %v807 = vld [vmem:[%s801 + $0x10] sm:$0xff]
                  %808 = vst [vmem:[%s802 + $0x30] sm:$0xff] %v807
                  %v809 = vld [vmem:[%s801 + $0x18] sm:$0xff]
                  %810 = vst [vmem:[%s802 + $0x48] sm:$0xff] %v809
                  %v811 = vld [vmem:[%s801 + $0x20] sm:$0xff]
                  %812 = vst [vmem:[%s802 + $0x60] sm:$0xff] %v811
                  %v813 = vld [vmem:[%s801 + $0x28] sm:$0xff]
                  %814 = vst [vmem:[%s802 + $0x78] sm:$0xff] %v813
                  %v815 = vld [vmem:[%s801 + $0x30] sm:$0xff]
                  %816 = vst [vmem:[%s802 + $0x90] sm:$0xff] %v815
                  %v817 = vld [vmem:[%s801 + $0x38] sm:$0xff]
                  %818 = vst [vmem:[%s802 + $0xa8] sm:$0xff] %v817
                  %v819 = vld [vmem:[%s801 + $0x40] sm:$0xff]
                  %820 = vst [vmem:[%s802 + $0xc0] sm:$0xff] %v819
                  %v821 = vld [vmem:[%s801 + $0x48] sm:$0xff]
                  %822 = vst [vmem:[%s802 + $0xd8] sm:$0xff] %v821
                  %v823 = vld [vmem:[%s801 + $0x50] sm:$0xff]
                  %824 = vst [vmem:[%s802 + $0xf0] sm:$0xff] %v823
                  %v825 = vld [vmem:[%s801 + $0x58] sm:$0xff]
                  %826 = vst [vmem:[%s802 + $0x108] sm:$0xff] %v825
                  %v827 = vld [vmem:[%s801 + $0x60] sm:$0xff]
                  %828 = vst [vmem:[%s802 + $0x120] sm:$0xff] %v827
                  %v829 = vld [vmem:[%s801 + $0x68] sm:$0xff]
                  %830 = vst [vmem:[%s802 + $0x138] sm:$0xff] %v829
                  %v831 = vld [vmem:[%s801 + $0x70] sm:$0xff]
                  %832 = vst [vmem:[%s802 + $0x150] sm:$0xff] %v831
                  %v833 = vld [vmem:[%s801 + $0x78] sm:$0xff]
                  %834 = vst [vmem:[%s802 + $0x168] sm:$0xff] %v833
                  %v835 = vld [vmem:[%s801 + $0x80] sm:$0xff]
                  %836 = vst [vmem:[%s802 + $0x180] sm:$0xff] %v835
                  %v837 = vld [vmem:[%s801 + $0x88] sm:$0xff]
                  %838 = vst [vmem:[%s802 + $0x198] sm:$0xff] %v837
                  %v839 = vld [vmem:[%s801 + $0x90] sm:$0xff]
                  %840 = vst [vmem:[%s802 + $0x1b0] sm:$0xff] %v839
                  %v841 = vld [vmem:[%s801 + $0x98] sm:$0xff]
                  %842 = vst [vmem:[%s802 + $0x1c8] sm:$0xff] %v841
                  %v843 = vld [vmem:[%s801 + $0xa0] sm:$0xff]
                  %844 = vst [vmem:[%s802 + $0x1e0] sm:$0xff] %v843
                  %v845 = vld [vmem:[%s801 + $0xa8] sm:$0xff]
                  %846 = vst [vmem:[%s802 + $0x1f8] sm:$0xff] %v845
                  %v847 = vld [vmem:[%s801 + $0xb0] sm:$0xff]
                  %848 = vst [vmem:[%s802 + $0x210] sm:$0xff] %v847
                  %v849 = vld [vmem:[%s801 + $0xb8] sm:$0xff]
                  %850 = vst [vmem:[%s802 + $0x228] sm:$0xff] %v849
                  %v851 = vld [vmem:[%s801 + $0xc0] sm:$0xff]
                  %852 = vst [vmem:[%s802 + $0x240] sm:$0xff] %v851
                  %v853 = vld [vmem:[%s801 + $0xc8] sm:$0xff]
                  %854 = vst [vmem:[%s802 + $0x258] sm:$0xff] %v853
                  %v855 = vld [vmem:[%s801 + $0xd0] sm:$0xff]
                  %856 = vst [vmem:[%s802 + $0x270] sm:$0xff] %v855
                  %v857 = vld [vmem:[%s801 + $0xd8] sm:$0xff]
                  %858 = vst [vmem:[%s802 + $0x288] sm:$0xff] %v857
                  %v859 = vld [vmem:[%s801 + $0xe0] sm:$0xff]
                  %860 = vst [vmem:[%s802 + $0x2a0] sm:$0xff] %v859
                  %v861 = vld [vmem:[%s801 + $0xe8] sm:$0xff]
                  %862 = vst [vmem:[%s802 + $0x2b8] sm:$0xff] %v861
                  %v863 = vld [vmem:[%s801 + $0xf0] sm:$0xff]
                  %864 = vst [vmem:[%s802 + $0x2d0] sm:$0xff] %v863
                  %v865 = vld [vmem:[%s801 + $0xf8] sm:$0xff]
                  %866 = vst [vmem:[%s802 + $0x2e8] sm:$0xff] %v865
                $region76: #{mha_forward.3} parent=70 // loop_footer
                  %s800 = sadd.s32 1, %s796
                $region77: #{mha_forward.3} parent=70 // loop_footer_branch
                  %795 = sbr.rel target = $region73
                $region78: #{mha_forward.3} parent=70 // loop_exit
                  _
              $region71: #{mha_forward.3} parent=55 // pred_fallthru
                _
              // Predicated region
              $region79: #{mha_forward.3} parent=55 // pred_check
                _
              $region80: #{mha_forward.3} parent=55 // pred_check_branch
                %868 = sbr.rel target = $region82
              $region81: #{mha_forward.3} parent=55 // pred_region
                _
              $region82: #{mha_forward.3} parent=55 // pred_fallthru
                _
            $region56: #{mha_forward.3} parent=51 // pred_fallthru
              _
            // Predicated region
            $region57: #{mha_forward.3} parent=51 // pred_check
              _
            $region58: #{mha_forward.3} parent=51 // pred_check_branch
              %718 = sbr.rel target = $region60
            $region59: #{mha_forward.3} parent=51 // pred_region
              %s720 = ssub.s32 256, 1
              loop: start=0, step=1, limit=1
              $region61: #{mha_forward.3} parent=59 // loop_pre_header
                _
              $region62: #{mha_forward.3} parent=59 // loop_header
                %s722 = sphi 0, %s726
                %p723 = scmp.ge.s32.totalorder %s722, 1
                %s727 = sphi %s704, %s704
                %s728 = sphi %s712, %s712
              $region63: #{mha_forward.3} parent=59 // loop_header_branch
                %725 = sbr.rel (%p723) target = $region67
              $region64: #{mha_forward.3} parent=59 // loop_body
                %v729 = vld [vmem:[%s727] sm:%s720]
                %730 = vst [vmem:[%s728] sm:%s720] %v729
                %v731 = vld [vmem:[%s727 + $0x8] sm:%s720]
                %732 = vst [vmem:[%s728 + $0x18] sm:%s720] %v731
                %v733 = vld [vmem:[%s727 + $0x10] sm:%s720]
                %734 = vst [vmem:[%s728 + $0x30] sm:%s720] %v733
                %v735 = vld [vmem:[%s727 + $0x18] sm:%s720]
                %736 = vst [vmem:[%s728 + $0x48] sm:%s720] %v735
                %v737 = vld [vmem:[%s727 + $0x20] sm:%s720]
                %738 = vst [vmem:[%s728 + $0x60] sm:%s720] %v737
                %v739 = vld [vmem:[%s727 + $0x28] sm:%s720]
                %740 = vst [vmem:[%s728 + $0x78] sm:%s720] %v739
                %v741 = vld [vmem:[%s727 + $0x30] sm:%s720]
                %742 = vst [vmem:[%s728 + $0x90] sm:%s720] %v741
                %v743 = vld [vmem:[%s727 + $0x38] sm:%s720]
                %744 = vst [vmem:[%s728 + $0xa8] sm:%s720] %v743
                %v745 = vld [vmem:[%s727 + $0x40] sm:%s720]
                %746 = vst [vmem:[%s728 + $0xc0] sm:%s720] %v745
                %v747 = vld [vmem:[%s727 + $0x48] sm:%s720]
                %748 = vst [vmem:[%s728 + $0xd8] sm:%s720] %v747
                %v749 = vld [vmem:[%s727 + $0x50] sm:%s720]
                %750 = vst [vmem:[%s728 + $0xf0] sm:%s720] %v749
                %v751 = vld [vmem:[%s727 + $0x58] sm:%s720]
                %752 = vst [vmem:[%s728 + $0x108] sm:%s720] %v751
                %v753 = vld [vmem:[%s727 + $0x60] sm:%s720]
                %754 = vst [vmem:[%s728 + $0x120] sm:%s720] %v753
                %v755 = vld [vmem:[%s727 + $0x68] sm:%s720]
                %756 = vst [vmem:[%s728 + $0x138] sm:%s720] %v755
                %v757 = vld [vmem:[%s727 + $0x70] sm:%s720]
                %758 = vst [vmem:[%s728 + $0x150] sm:%s720] %v757
                %v759 = vld [vmem:[%s727 + $0x78] sm:%s720]
                %760 = vst [vmem:[%s728 + $0x168] sm:%s720] %v759
                %v761 = vld [vmem:[%s727 + $0x80] sm:%s720]
                %762 = vst [vmem:[%s728 + $0x180] sm:%s720] %v761
                %v763 = vld [vmem:[%s727 + $0x88] sm:%s720]
                %764 = vst [vmem:[%s728 + $0x198] sm:%s720] %v763
                %v765 = vld [vmem:[%s727 + $0x90] sm:%s720]
                %766 = vst [vmem:[%s728 + $0x1b0] sm:%s720] %v765
                %v767 = vld [vmem:[%s727 + $0x98] sm:%s720]
                %768 = vst [vmem:[%s728 + $0x1c8] sm:%s720] %v767
                %v769 = vld [vmem:[%s727 + $0xa0] sm:%s720]
                %770 = vst [vmem:[%s728 + $0x1e0] sm:%s720] %v769
                %v771 = vld [vmem:[%s727 + $0xa8] sm:%s720]
                %772 = vst [vmem:[%s728 + $0x1f8] sm:%s720] %v771
                %v773 = vld [vmem:[%s727 + $0xb0] sm:%s720]
                %774 = vst [vmem:[%s728 + $0x210] sm:%s720] %v773
                %v775 = vld [vmem:[%s727 + $0xb8] sm:%s720]
                %776 = vst [vmem:[%s728 + $0x228] sm:%s720] %v775
                %v777 = vld [vmem:[%s727 + $0xc0] sm:%s720]
                %778 = vst [vmem:[%s728 + $0x240] sm:%s720] %v777
                %v779 = vld [vmem:[%s727 + $0xc8] sm:%s720]
                %780 = vst [vmem:[%s728 + $0x258] sm:%s720] %v779
                %v781 = vld [vmem:[%s727 + $0xd0] sm:%s720]
                %782 = vst [vmem:[%s728 + $0x270] sm:%s720] %v781
                %v783 = vld [vmem:[%s727 + $0xd8] sm:%s720]
                %784 = vst [vmem:[%s728 + $0x288] sm:%s720] %v783
                %v785 = vld [vmem:[%s727 + $0xe0] sm:%s720]
                %786 = vst [vmem:[%s728 + $0x2a0] sm:%s720] %v785
                %v787 = vld [vmem:[%s727 + $0xe8] sm:%s720]
                %788 = vst [vmem:[%s728 + $0x2b8] sm:%s720] %v787
                %v789 = vld [vmem:[%s727 + $0xf0] sm:%s720]
                %790 = vst [vmem:[%s728 + $0x2d0] sm:%s720] %v789
                %v791 = vld [vmem:[%s727 + $0xf8] sm:%s720]
                %792 = vst [vmem:[%s728 + $0x2e8] sm:%s720] %v791
              $region65: #{mha_forward.3} parent=59 // loop_footer
                %s726 = sadd.s32 1, %s722
              $region66: #{mha_forward.3} parent=59 // loop_footer_branch
                %721 = sbr.rel target = $region62
              $region67: #{mha_forward.3} parent=59 // loop_exit
                _
            $region60: #{mha_forward.3} parent=51 // pred_fallthru
              _
          $region52: #{mha_forward.3} parent=47 // pred_fallthru
            _
          %869 = vnop
        $region48: #{mha_forward.3} parent=27 // pred_fallthru
          _
      $region28: #{mha_forward.3} parent=5 // pred_fallthru
        _
      %p870 = scmp.le.s32.totalorder 2, %s14
      // Predicated region
      $region83: #{mha_forward.3} parent=5 // pred_check
        %p871 = pneg %p870
      $region84: #{mha_forward.3} parent=5 // pred_check_branch
        %873 = sbr.rel (%p871) target = $region86
      $region85: #{mha_forward.3} parent=5 // pred_region
        %s874 = ssub.s32 %s14, 2
        // Predicated region
        $region87: #{mha_forward.3} parent=85 // pred_check
          %p875 = pneg %p120
        $region88: #{mha_forward.3} parent=85 // pred_check_branch
          %877 = sbr.rel (%p875) target = $region90
        $region89: #{mha_forward.3} parent=85 // pred_region
          %s878 = sand.u32 %s105, 1
          %s879 = sand.u32 %s105, 1
          %s880 = smul.addr %s879, 256
          %s881 = scalar_lea.vmem [#allocation7], %s880
        $region90: #{mha_forward.3} parent=85 // pred_fallthru
          _
      $region86: #{mha_forward.3} parent=5 // pred_fallthru
        _
    $region6: #{mha_forward.3} parent=1 // loop_footer
      %s18 = sadd.s32 1, %s14
    $region7: #{mha_forward.3} parent=1 // loop_footer_branch
      %13 = sbr.rel target = $region3
    $region8: #{mha_forward.3} parent=1 // loop_exit
      _
    %882 = vsyncpa [#allocation4], 1
    %s883 = scalar_lea.sflag [#allocation4], 1
    %884 = vsyncpa %s883, 1
    %885 = vsyncpa [#allocation6], 1
    %s886 = scalar_lea.sflag [#allocation6], 1
    %887 = vsyncpa %s886, 1

// kernel: mha_forward.4
$region0: #{mha_forward.4}
  #allocation0 [shape = 'u32[]', space=smem, size = 0x4, offset = 0x4, fixed_abs, tag = 'smem constant byte address 0x4 - core index']
  #allocation1 [shape = 'u32[144,128]{1,0:T(1,128)}', space=vmem, size = 0x12000, scoped, tag = 'internal scratch']
  #allocation2 [shape = 'f32[128,1]{1,0:T(8,128)}', space=vmem, size = 0x10000, scoped, tag = 'scratch operand']
  #allocation3 [shape = 'f32[128,1]{1,0:T(8,128)}', space=vmem, size = 0x10000, scoped, tag = 'scratch operand']
  #allocation4 [shape = 'f32[128,32]{1,0:T(8,128)}', space=vmem, size = 0x10000, scoped, tag = 'scratch operand']
  %s0 = inlined_call_operand.vmem [shape: f32[3,2,4,256,32], index: 0, kind: input, shape index: {}, may-alias: {0,1,2}]
  %s1 = inlined_call_operand.vmem [shape: f32[3,2,4,256,32], index: 1, kind: input, shape index: {}, may-alias: {0,1,2}]
  %s2 = inlined_call_operand.vmem [shape: f32[3,2,4,256,32], index: 2, kind: input, shape index: {}, may-alias: {0,1,2}]
  %s3 = inlined_call_operand.vmem [shape: f32[2,4,256,32], index: 3, kind: output, shape index: {}]
  %s4 = sld [smem:[#allocation0]]
  $region53: #{mha_forward.4} parent=0
    _
  %s6 = ssub.s32 1, %s4
  %s7 = scalar_select 0, %s6, %s4
  loop: start=0, step=1, limit=34
  $region2: #{mha_forward.4} parent=0 // loop_pre_header
    _
  $region3: #{mha_forward.4} parent=0 // loop_header
    %s9 = sphi 0, %s13
    %p10 = scmp.ge.s32.totalorder %s9, 34
    %s16 = sphi 0, %s42
    %s17 = sphi 0, %s38
    %s18 = sphi 0, %s34
    %s19 = sphi 0, %s30
    %s20 = sphi 0, %s16
    %s21 = sphi 0, %s17
    %s22 = sphi 0, %s18
    %s23 = sphi 0, %s19
    %s24 = sphi 0, %s20
    %s25 = sphi 0, %s21
    %s26 = sphi 0, %s22
    %s27 = sphi 0, %s23
    %s49 = sphi 0, %s51
    %s52 = sphi 0, %s49
    %s53 = sphi 0, %s52
    %s69 = sphi 0, %s53
    %s79 = sphi 0, %s81
    %s82 = sphi 0, %s79
    %s83 = sphi 0, %s82
    %s99 = sphi 0, %s83
    %s109 = sphi 0, %s111
    %s112 = sphi 0, %s109
    %s113 = sphi 0, %s112
    %s129 = sphi 0, %s113
    %s139 = sphi 0, %s141
    %s142 = sphi 0, %s139
    %s143 = sphi 0, %s142
    %s159 = sphi 0, %s143
  $region4: #{mha_forward.4} parent=0 // loop_header_branch
    %12 = sbr.rel (%p10) target = $region8
  $region5: #{mha_forward.4} parent=0 // loop_body
    %s14 = ssub.s32 %s9, 1
    %s15 = ssub.s32 %s9, 2
    %s28 = sadd.s32 1, %s19
    %p29 = scmp.ge.s32.totalorder %s28, 2
    %s30 = scalar_select %p29, 0, %s28
    %s31 = sadd.s32 1, %s18
    %s32 = scalar_select %p29, %s31, %s18
    %p33 = scmp.ge.s32.totalorder %s32, 2
    %s34 = scalar_select %p33, 0, %s32
    %s35 = sadd.s32 1, %s17
    %s36 = scalar_select %p33, %s35, %s17
    %p37 = scmp.ge.s32.totalorder %s36, 4
    %s38 = scalar_select %p37, 0, %s36
    %s39 = sadd.s32 1, %s16
    %s40 = scalar_select %p37, %s39, %s16
    %p41 = scmp.ge.s32.totalorder %s40, 2
    %s42 = scalar_select %p41, 0, %s40
    %s43 = ssub.s32 %s16, %s42
    %s44 = ssub.s32 %s17, %s38
    %s45 = sor.u32 %s43, %s44
    %s46 = ssub.s32 %s18, %s34
    %s47 = sor.u32 %s45, %s46
    %p48 = scmp.eq.s32.totalorder %s47, 0
    %s50 = sadd.s32 %s49, 1
    %s51 = scalar_select %p48, %s49, %s50
    %p54 = pneg %p48
    %p55 = scmp.eq.s32.totalorder %s9, 31
    %p56 = por %p54, %p55
    %p57 = scmp.ne.s32.totalorder %s49, %s52
    %p58 = scmp.eq.s32.totalorder %s9, 0
    %p59 = por %p57, %p58
    %p60 = scmp.ne.s32.totalorder %s49, %s52
    %p61 = scmp.eq.s32.totalorder %s14, 31
    %p62 = por %p60, %p61
    %p63 = scmp.ne.s32.totalorder %s52, %s53
    %p64 = scmp.eq.s32.totalorder %s14, 0
    %p65 = por %p63, %p64
    %p66 = scmp.ne.s32.totalorder %s52, %s53
    %p67 = scmp.eq.s32.totalorder %s15, 31
    %p68 = por %p66, %p67
    %p70 = scmp.ne.s32.totalorder %s53, %s69
    %p71 = scmp.eq.s32.totalorder %s15, 0
    %p72 = por %p70, %p71
    %s73 = ssub.s32 %s16, %s42
    %s74 = ssub.s32 %s17, %s38
    %s75 = sor.u32 %s73, %s74
    %s76 = ssub.s32 %s19, %s30
    %s77 = sor.u32 %s75, %s76
    %p78 = scmp.eq.s32.totalorder %s77, 0
    %s80 = sadd.s32 %s79, 1
    %s81 = scalar_select %p78, %s79, %s80
    %p84 = pneg %p78
    %p85 = scmp.eq.s32.totalorder %s9, 31
    %p86 = por %p84, %p85
    %p87 = scmp.ne.s32.totalorder %s79, %s82
    %p88 = scmp.eq.s32.totalorder %s9, 0
    %p89 = por %p87, %p88
    %p90 = scmp.ne.s32.totalorder %s79, %s82
    %p91 = scmp.eq.s32.totalorder %s14, 31
    %p92 = por %p90, %p91
    %p93 = scmp.ne.s32.totalorder %s82, %s83
    %p94 = scmp.eq.s32.totalorder %s14, 0
    %p95 = por %p93, %p94
    %p96 = scmp.ne.s32.totalorder %s82, %s83
    %p97 = scmp.eq.s32.totalorder %s15, 31
    %p98 = por %p96, %p97
    %p100 = scmp.ne.s32.totalorder %s83, %s99
    %p101 = scmp.eq.s32.totalorder %s15, 0
    %p102 = por %p100, %p101
    %s103 = ssub.s32 %s16, %s42
    %s104 = ssub.s32 %s17, %s38
    %s105 = sor.u32 %s103, %s104
    %s106 = ssub.s32 %s19, %s30
    %s107 = sor.u32 %s105, %s106
    %p108 = scmp.eq.s32.totalorder %s107, 0
    %s110 = sadd.s32 %s109, 1
    %s111 = scalar_select %p108, %s109, %s110
    %p114 = pneg %p108
    %p115 = scmp.eq.s32.totalorder %s9, 31
    %p116 = por %p114, %p115
    %p117 = scmp.ne.s32.totalorder %s109, %s112
    %p118 = scmp.eq.s32.totalorder %s9, 0
    %p119 = por %p117, %p118
    %p120 = scmp.ne.s32.totalorder %s109, %s112
    %p121 = scmp.eq.s32.totalorder %s14, 31
    %p122 = por %p120, %p121
    %p123 = scmp.ne.s32.totalorder %s112, %s113
    %p124 = scmp.eq.s32.totalorder %s14, 0
    %p125 = por %p123, %p124
    %p126 = scmp.ne.s32.totalorder %s112, %s113
    %p127 = scmp.eq.s32.totalorder %s15, 31
    %p128 = por %p126, %p127
    %p130 = scmp.ne.s32.totalorder %s113, %s129
    %p131 = scmp.eq.s32.totalorder %s15, 0
    %p132 = por %p130, %p131
    %s133 = ssub.s32 %s16, %s42
    %s134 = ssub.s32 %s17, %s38
    %s135 = sor.u32 %s133, %s134
    %s136 = ssub.s32 %s18, %s34
    %s137 = sor.u32 %s135, %s136
    %p138 = scmp.eq.s32.totalorder %s137, 0
    %s140 = sadd.s32 %s139, 1
    %s141 = scalar_select %p138, %s139, %s140
    %p144 = pneg %p138
    %p145 = scmp.eq.s32.totalorder %s9, 31
    %p146 = por %p144, %p145
    %p147 = scmp.ne.s32.totalorder %s139, %s142
    %p148 = scmp.eq.s32.totalorder %s9, 0
    %p149 = por %p147, %p148
    %p150 = scmp.ne.s32.totalorder %s139, %s142
    %p151 = scmp.eq.s32.totalorder %s14, 31
    %p152 = por %p150, %p151
    %p153 = scmp.ne.s32.totalorder %s142, %s143
    %p154 = scmp.eq.s32.totalorder %s14, 0
    %p155 = por %p153, %p154
    %p156 = scmp.ne.s32.totalorder %s142, %s143
    %p157 = scmp.eq.s32.totalorder %s15, 31
    %p158 = por %p156, %p157
    %p160 = scmp.ne.s32.totalorder %s143, %s159
    %p161 = scmp.eq.s32.totalorder %s15, 0
    %p162 = por %p160, %p161
    %p163 = scmp.le.s32.totalorder 1, %s9
    %p164 = scmp.lt.s32.totalorder %s9, 33
    %p165 = pnand %p163, %p164
    %p166 = pneg %p165
    // Predicated region
    $region9: #{mha_forward.4} parent=5 // pred_check
      _
    $region10: #{mha_forward.4} parent=5 // pred_check_branch
      %168 = sbr.rel (%p165) target = $region12
    $region11: #{mha_forward.4} parent=5 // pred_region
      %s169 = ssub.s32 %s9, 1
    $region12: #{mha_forward.4} parent=5 // pred_fallthru
      _
    %p170 = scmp.lt.s32.totalorder %s9, 32
    // Predicated region
    $region13: #{mha_forward.4} parent=5 // pred_check
      %p171 = pneg %p170
    $region14: #{mha_forward.4} parent=5 // pred_check_branch
      %173 = sbr.rel (%p171) target = $region16
    $region15: #{mha_forward.4} parent=5 // pred_region
      // Predicated region
      $region17: #{mha_forward.4} parent=15 // pred_check
        %p174 = pneg %p59
      $region18: #{mha_forward.4} parent=15 // pred_check_branch
        %176 = sbr.rel (%p174) target = $region20
      $region19: #{mha_forward.4} parent=15 // pred_region
        %s177 = smul.u32 16, %s18
        %p178 = scmp.lt.s32.totalorder %s16, 1
        %s179 = scalar_select %p178, %s16, 1
        %p180 = scmp.lt.s32.totalorder %s17, 3
        %s181 = scalar_select %p180, %s17, 3
        %p182 = scmp.lt.s32.totalorder %s177, 31
        %s183 = scalar_select %p182, %s177, 31
        %s184 = smul.addr %s181, 32
        %s185 = sadd.s32 %s183, %s184
        %s186 = smul.addr %s179, 128
        %s187 = sadd.s32 %s185, %s186
        %s188 = smul.addr %s187, 8
        %s189 = scalar_lea.vmem %s0, %s188
        %s190 = smul.u32 16, %s18
      $region20: #{mha_forward.4} parent=15 // pred_fallthru
        _
      // Predicated region
      $region21: #{mha_forward.4} parent=15 // pred_check
        %p191 = pneg %p89
      $region22: #{mha_forward.4} parent=15 // pred_check_branch
        %193 = sbr.rel (%p191) target = $region24
      $region23: #{mha_forward.4} parent=15 // pred_region
        %s194 = smul.u32 16, %s19
        %p195 = scmp.lt.s32.totalorder %s16, 1
        %s196 = scalar_select %p195, %s16, 1
        %p197 = scmp.lt.s32.totalorder %s17, 3
        %s198 = scalar_select %p197, %s17, 3
        %p199 = scmp.lt.s32.totalorder %s194, 31
        %s200 = scalar_select %p199, %s194, 31
        %s201 = smul.addr %s198, 32
        %s202 = sadd.s32 %s200, %s201
        %s203 = smul.addr %s196, 128
        %s204 = sadd.s32 %s202, %s203
        %s205 = sadd.s32 %s204, 256
        %s206 = smul.addr %s205, 8
        %s207 = scalar_lea.vmem %s1, %s206
        %s208 = smul.u32 16, %s19
      $region24: #{mha_forward.4} parent=15 // pred_fallthru
        _
      // Predicated region
      $region25: #{mha_forward.4} parent=15 // pred_check
        %p209 = pneg %p119
      $region26: #{mha_forward.4} parent=15 // pred_check_branch
        %211 = sbr.rel (%p209) target = $region28
      $region27: #{mha_forward.4} parent=15 // pred_region
        %s212 = smul.u32 16, %s19
        %p213 = scmp.lt.s32.totalorder %s16, 1
        %s214 = scalar_select %p213, %s16, 1
        %p215 = scmp.lt.s32.totalorder %s17, 3
        %s216 = scalar_select %p215, %s17, 3
        %p217 = scmp.lt.s32.totalorder %s212, 31
        %s218 = scalar_select %p217, %s212, 31
        %s219 = smul.addr %s216, 32
        %s220 = sadd.s32 %s218, %s219
        %s221 = smul.addr %s214, 128
        %s222 = sadd.s32 %s220, %s221
        %s223 = sadd.s32 %s222, 512
        %s224 = smul.addr %s223, 8
        %s225 = scalar_lea.vmem %s2, %s224
        %s226 = smul.u32 16, %s19
      $region28: #{mha_forward.4} parent=15 // pred_fallthru
        _
    $region16: #{mha_forward.4} parent=5 // pred_fallthru
      _
    %p227 = scmp.le.s32.totalorder 1, %s9
    %p228 = scmp.lt.s32.totalorder %s9, 33
    %p229 = pnand %p227, %p228
    %p230 = pneg %p229
    // Predicated region
    $region29: #{mha_forward.4} parent=5 // pred_check
      _
    $region30: #{mha_forward.4} parent=5 // pred_check_branch
      %232 = sbr.rel (%p229) target = $region32
    $region31: #{mha_forward.4} parent=5 // pred_region
      %s233 = ssub.s32 %s9, 1
      %s234 = smul.u32 16, %s22
      %p235 = scmp.lt.s32.totalorder %s20, 1
      %s236 = scalar_select %p235, %s20, 1
      %p237 = scmp.lt.s32.totalorder %s21, 3
      %s238 = scalar_select %p237, %s21, 3
      %p239 = scmp.lt.s32.totalorder %s234, 31
      %s240 = scalar_select %p239, %s234, 31
      %s241 = smul.addr %s238, 32
      %s242 = sadd.s32 %s240, %s241
      %s243 = smul.addr %s236, 128
      %s244 = sadd.s32 %s242, %s243
      %s245 = smul.addr %s244, 8
      %s246 = scalar_lea.vmem %s0, %s245
      %p247 = pneg %p65
      %p248 = pneg %p62
      %s249 = smul.u32 16, %s23
      %p250 = scmp.lt.s32.totalorder %s20, 1
      %s251 = scalar_select %p250, %s20, 1
      %p252 = scmp.lt.s32.totalorder %s21, 3
      %s253 = scalar_select %p252, %s21, 3
      %p254 = scmp.lt.s32.totalorder %s249, 31
      %s255 = scalar_select %p254, %s249, 31
      %s256 = smul.addr %s253, 32
      %s257 = sadd.s32 %s255, %s256
      %s258 = smul.addr %s251, 128
      %s259 = sadd.s32 %s257, %s258
      %s260 = sadd.s32 %s259, 256
      %s261 = smul.addr %s260, 8
      %s262 = scalar_lea.vmem %s1, %s261
      %p263 = pneg %p95
      %p264 = pneg %p92
      %s265 = smul.u32 16, %s23
      %p266 = scmp.lt.s32.totalorder %s20, 1
      %s267 = scalar_select %p266, %s20, 1
      %p268 = scmp.lt.s32.totalorder %s21, 3
      %s269 = scalar_select %p268, %s21, 3
      %p270 = scmp.lt.s32.totalorder %s265, 31
      %s271 = scalar_select %p270, %s265, 31
      %s272 = smul.addr %s269, 32
      %s273 = sadd.s32 %s271, %s272
      %s274 = smul.addr %s267, 128
      %s275 = sadd.s32 %s273, %s274
      %s276 = sadd.s32 %s275, 512
      %s277 = smul.addr %s276, 8
      %s278 = scalar_lea.vmem %s2, %s277
      %p279 = pneg %p125
      %p280 = pneg %p122
      %p281 = pneg %p155
      %p282 = pneg %p152
      %s283 = smul.u32 16, %s22
      %p284 = scmp.lt.s32.totalorder %s20, 1
      %s285 = scalar_select %p284, %s20, 1
      %p286 = scmp.lt.s32.totalorder %s21, 3
      %s287 = scalar_select %p286, %s21, 3
      %p288 = scmp.lt.s32.totalorder %s283, 31
      %s289 = scalar_select %p288, %s283, 31
      %s290 = smul.addr %s287, 32
      %s291 = sadd.s32 %s289, %s290
      %s292 = smul.addr %s285, 128
      %s293 = sadd.s32 %s291, %s292
      %s294 = smul.addr %s293, 8
      %s295 = scalar_lea.vmem %s3, %s294
      %s296 = smul.u32 16, %s22
      %p297 = scmp.lt.s32.totalorder %s20, 1
      %s298 = scalar_select %p297, %s20, 1
      %p299 = scmp.lt.s32.totalorder %s21, 3
      %s300 = scalar_select %p299, %s21, 3
      %p301 = scmp.lt.s32.totalorder %s296, 31
      %s302 = scalar_select %p301, %s296, 31
      %s303 = smul.addr %s300, 32
      %s304 = sadd.s32 %s302, %s303
      %s305 = smul.addr %s298, 128
      %s306 = sadd.s32 %s304, %s305
      %s307 = smul.addr %s306, 8
      %s308 = scalar_lea.vmem %s0, %s307
      %s309 = smul.u32 16, %s22
      %s310 = smul.u32 16, %s23
      %p311 = scmp.lt.s32.totalorder %s20, 1
      %s312 = scalar_select %p311, %s20, 1
      %p313 = scmp.lt.s32.totalorder %s21, 3
      %s314 = scalar_select %p313, %s21, 3
      %p315 = scmp.lt.s32.totalorder %s310, 31
      %s316 = scalar_select %p315, %s310, 31
      %s317 = smul.addr %s314, 32
      %s318 = sadd.s32 %s316, %s317
      %s319 = smul.addr %s312, 128
      %s320 = sadd.s32 %s318, %s319
      %s321 = sadd.s32 %s320, 256
      %s322 = smul.addr %s321, 8
      %s323 = scalar_lea.vmem %s1, %s322
      %s324 = smul.u32 16, %s23
      %s325 = smul.u32 16, %s23
      %p326 = scmp.lt.s32.totalorder %s20, 1
      %s327 = scalar_select %p326, %s20, 1
      %p328 = scmp.lt.s32.totalorder %s21, 3
      %s329 = scalar_select %p328, %s21, 3
      %p330 = scmp.lt.s32.totalorder %s325, 31
      %s331 = scalar_select %p330, %s325, 31
      %s332 = smul.addr %s329, 32
      %s333 = sadd.s32 %s331, %s332
      %s334 = smul.addr %s327, 128
      %s335 = sadd.s32 %s333, %s334
      %s336 = sadd.s32 %s335, 512
      %s337 = smul.addr %s336, 8
      %s338 = scalar_lea.vmem %s2, %s337
      %s339 = smul.u32 16, %s23
      %s340 = smul.u32 16, %s22
      %p341 = scmp.lt.s32.totalorder %s20, 1
      %s342 = scalar_select %p341, %s20, 1
      %p343 = scmp.lt.s32.totalorder %s21, 3
      %s344 = scalar_select %p343, %s21, 3
      %p345 = scmp.lt.s32.totalorder %s340, 31
      %s346 = scalar_select %p345, %s340, 31
      %s347 = smul.addr %s344, 32
      %s348 = sadd.s32 %s346, %s347
      %s349 = smul.addr %s342, 128
      %s350 = sadd.s32 %s348, %s349
      %s351 = smul.addr %s350, 8
      %s352 = scalar_lea.vmem %s3, %s351
      %s353 = smul.u32 16, %s22
      %p354 = scmp.eq.s32.totalorder %s23, 0
      // Predicated region
      $region33: #{mha_forward.4} parent=31 // pred_check
        %p355 = pneg %p354
      $region34: #{mha_forward.4} parent=31 // pred_check_branch
        %357 = sbr.rel (%p355) target = $region36
      $region35: #{mha_forward.4} parent=31 // pred_region
        %vm358 = vcmask 7168
        %359 = vst.msk [vmem:[#allocation2] sm:$0xff] %vm358, -inf
        %360 = vst.msk [vmem:[#allocation2 + $0x8] sm:$0xff] %vm358, -inf
        %361 = vst.msk [vmem:[#allocation2 + $0x10] sm:$0xff] %vm358, -inf
        %362 = vst.msk [vmem:[#allocation2 + $0x18] sm:$0xff] %vm358, -inf
        %363 = vst.msk [vmem:[#allocation2 + $0x20] sm:$0xff] %vm358, -inf
        %364 = vst.msk [vmem:[#allocation2 + $0x28] sm:$0xff] %vm358, -inf
        %365 = vst.msk [vmem:[#allocation2 + $0x30] sm:$0xff] %vm358, -inf
        %366 = vst.msk [vmem:[#allocation2 + $0x38] sm:$0xff] %vm358, -inf
        %367 = vst.msk [vmem:[#allocation2 + $0x40] sm:$0xff] %vm358, -inf
        %368 = vst.msk [vmem:[#allocation2 + $0x48] sm:$0xff] %vm358, -inf
        %369 = vst.msk [vmem:[#allocation2 + $0x50] sm:$0xff] %vm358, -inf
        %370 = vst.msk [vmem:[#allocation2 + $0x58] sm:$0xff] %vm358, -inf
        %371 = vst.msk [vmem:[#allocation2 + $0x60] sm:$0xff] %vm358, -inf
        %372 = vst.msk [vmem:[#allocation2 + $0x68] sm:$0xff] %vm358, -inf
        %373 = vst.msk [vmem:[#allocation2 + $0x70] sm:$0xff] %vm358, -inf
        %374 = vst.msk [vmem:[#allocation2 + $0x78] sm:$0xff] %vm358, -inf
        %375 = vst.msk [vmem:[#allocation3] sm:$0xff] %vm358, 0.0
        %376 = vst.msk [vmem:[#allocation3 + $0x8] sm:$0xff] %vm358, 0.0
        %377 = vst.msk [vmem:[#allocation3 + $0x10] sm:$0xff] %vm358, 0.0
        %378 = vst.msk [vmem:[#allocation3 + $0x18] sm:$0xff] %vm358, 0.0
        %379 = vst.msk [vmem:[#allocation3 + $0x20] sm:$0xff] %vm358, 0.0
        %380 = vst.msk [vmem:[#allocation3 + $0x28] sm:$0xff] %vm358, 0.0
        %381 = vst.msk [vmem:[#allocation3 + $0x30] sm:$0xff] %vm358, 0.0
        %382 = vst.msk [vmem:[#allocation3 + $0x38] sm:$0xff] %vm358, 0.0
        %383 = vst.msk [vmem:[#allocation3 + $0x40] sm:$0xff] %vm358, 0.0
        %384 = vst.msk [vmem:[#allocation3 + $0x48] sm:$0xff] %vm358, 0.0
        %385 = vst.msk [vmem:[#allocation3 + $0x50] sm:$0xff] %vm358, 0.0
        %386 = vst.msk [vmem:[#allocation3 + $0x58] sm:$0xff] %vm358, 0.0
        %387 = vst.msk [vmem:[#allocation3 + $0x60] sm:$0xff] %vm358, 0.0
        %388 = vst.msk [vmem:[#allocation3 + $0x68] sm:$0xff] %vm358, 0.0
        %389 = vst.msk [vmem:[#allocation3 + $0x70] sm:$0xff] %vm358, 0.0
        %390 = vst.msk [vmem:[#allocation3 + $0x78] sm:$0xff] %vm358, 0.0
        %vm391 = vcmask 261120
        %392 = vst.msk [vmem:[#allocation4] sm:$0xff] %vm391, 0.0
        %393 = vst.msk [vmem:[#allocation4 + $0x8] sm:$0xff] %vm391, 0.0
        %394 = vst.msk [vmem:[#allocation4 + $0x10] sm:$0xff] %vm391, 0.0
        %395 = vst.msk [vmem:[#allocation4 + $0x18] sm:$0xff] %vm391, 0.0
        %396 = vst.msk [vmem:[#allocation4 + $0x20] sm:$0xff] %vm391, 0.0
        %397 = vst.msk [vmem:[#allocation4 + $0x28] sm:$0xff] %vm391, 0.0
        %398 = vst.msk [vmem:[#allocation4 + $0x30] sm:$0xff] %vm391, 0.0
        %399 = vst.msk [vmem:[#allocation4 + $0x38] sm:$0xff] %vm391, 0.0
        %400 = vst.msk [vmem:[#allocation4 + $0x40] sm:$0xff] %vm391, 0.0
        %401 = vst.msk [vmem:[#allocation4 + $0x48] sm:$0xff] %vm391, 0.0
        %402 = vst.msk [vmem:[#allocation4 + $0x50] sm:$0xff] %vm391, 0.0
        %403 = vst.msk [vmem:[#allocation4 + $0x58] sm:$0xff] %vm391, 0.0
        %404 = vst.msk [vmem:[#allocation4 + $0x60] sm:$0xff] %vm391, 0.0
        %405 = vst.msk [vmem:[#allocation4 + $0x68] sm:$0xff] %vm391, 0.0
        %406 = vst.msk [vmem:[#allocation4 + $0x70] sm:$0xff] %vm391, 0.0
        %407 = vst.msk [vmem:[#allocation4 + $0x78] sm:$0xff] %vm391, 0.0
      $region36: #{mha_forward.4} parent=31 // pred_fallthru
        _
      %v408 = vld [vmem:[%s308] sm:$0xff]
      %v409 = vld [vmem:[%s308 + $0x8] sm:$0xff]
      %v410 = vld [vmem:[%s308 + $0x10] sm:$0xff]
      %v411 = vld [vmem:[%s308 + $0x18] sm:$0xff]
      %v412 = vld [vmem:[%s308 + $0x20] sm:$0xff]
      %v413 = vld [vmem:[%s308 + $0x28] sm:$0xff]
      %v414 = vld [vmem:[%s308 + $0x30] sm:$0xff]
      %v415 = vld [vmem:[%s308 + $0x38] sm:$0xff]
      %v416 = vld [vmem:[%s308 + $0x40] sm:$0xff]
      %v417 = vld [vmem:[%s308 + $0x48] sm:$0xff]
      %v418 = vld [vmem:[%s308 + $0x50] sm:$0xff]
      %v419 = vld [vmem:[%s308 + $0x58] sm:$0xff]
      %v420 = vld [vmem:[%s308 + $0x60] sm:$0xff]
      %v421 = vld [vmem:[%s308 + $0x68] sm:$0xff]
      %v422 = vld [vmem:[%s308 + $0x70] sm:$0xff]
      %v423 = vld [vmem:[%s308 + $0x78] sm:$0xff]
      %v424 = vmul.f32 %v408, 0.17677669
      %v425 = vmul.f32 %v409, 0.17677669
      %v426 = vmul.f32 %v410, 0.17677669
      %v427 = vmul.f32 %v411, 0.17677669
      %v428 = vmul.f32 %v412, 0.17677669
      %v429 = vmul.f32 %v413, 0.17677669
      %v430 = vmul.f32 %v414, 0.17677669
      %v431 = vmul.f32 %v415, 0.17677669
      %v432 = vmul.f32 %v416, 0.17677669
      %v433 = vmul.f32 %v417, 0.17677669
      %v434 = vmul.f32 %v418, 0.17677669
      %v435 = vmul.f32 %v419, 0.17677669
      %v436 = vmul.f32 %v420, 0.17677669
      %v437 = vmul.f32 %v421, 0.17677669
      %v438 = vmul.f32 %v422, 0.17677669
      %v439 = vmul.f32 %v423, 0.17677669
      %v440 = vld [vmem:[%s323] sm:$0xff]
      %v441 = vld [vmem:[%s323 + $0x8] sm:$0xff]
      %v442 = vld [vmem:[%s323 + $0x10] sm:$0xff]
      %v443 = vld [vmem:[%s323 + $0x18] sm:$0xff]
      %v444 = vld [vmem:[%s323 + $0x20] sm:$0xff]
      %v445 = vld [vmem:[%s323 + $0x28] sm:$0xff]
      %v446 = vld [vmem:[%s323 + $0x30] sm:$0xff]
      %v447 = vld [vmem:[%s323 + $0x38] sm:$0xff]
      %v448 = vld [vmem:[%s323 + $0x40] sm:$0xff]
      %v449 = vld [vmem:[%s323 + $0x48] sm:$0xff]
      %v450 = vld [vmem:[%s323 + $0x50] sm:$0xff]
      %v451 = vld [vmem:[%s323 + $0x58] sm:$0xff]
      %v452 = vld [vmem:[%s323 + $0x60] sm:$0xff]
      %v453 = vld [vmem:[%s323 + $0x68] sm:$0xff]
      %v454 = vld [vmem:[%s323 + $0x70] sm:$0xff]
      %v455 = vld [vmem:[%s323 + $0x78] sm:$0xff]
      %v456 = vld [vmem:[%s338] sm:$0xff]
      %v457 = vld [vmem:[%s338 + $0x8] sm:$0xff]
      %v458 = vld [vmem:[%s338 + $0x10] sm:$0xff]
      %v459 = vld [vmem:[%s338 + $0x18] sm:$0xff]
      %v460 = vld [vmem:[%s338 + $0x20] sm:$0xff]
      %v461 = vld [vmem:[%s338 + $0x28] sm:$0xff]
      %v462 = vld [vmem:[%s338 + $0x30] sm:$0xff]
      %v463 = vld [vmem:[%s338 + $0x38] sm:$0xff]
      %v464 = vld [vmem:[%s338 + $0x40] sm:$0xff]
      %v465 = vld [vmem:[%s338 + $0x48] sm:$0xff]
      %v466 = vld [vmem:[%s338 + $0x50] sm:$0xff]
      %v467 = vld [vmem:[%s338 + $0x58] sm:$0xff]
      %v468 = vld [vmem:[%s338 + $0x60] sm:$0xff]
      %v469 = vld [vmem:[%s338 + $0x68] sm:$0xff]
      %v470 = vld [vmem:[%s338 + $0x70] sm:$0xff]
      %v471 = vld [vmem:[%s338 + $0x78] sm:$0xff]
      %vm472 = vcmask 261120
      %v474 = vsel %vm472, %v424, 0
      %v477 = vsel %vm472, %v425, 0
      %v480 = vsel %vm472, %v426, 0
      %v483 = vsel %vm472, %v427, 0
      %v486 = vsel %vm472, %v428, 0
      %v489 = vsel %vm472, %v429, 0
      %v492 = vsel %vm472, %v430, 0
      %v495 = vsel %vm472, %v431, 0
      %v498 = vsel %vm472, %v432, 0
      %v501 = vsel %vm472, %v433, 0
      %v504 = vsel %vm472, %v434, 0
      %v507 = vsel %vm472, %v435, 0
      %v510 = vsel %vm472, %v436, 0
      %v513 = vsel %vm472, %v437, 0
      %v516 = vsel %vm472, %v438, 0
      %v519 = vsel %vm472, %v439, 0
      %v522 = vsel %vm472, %v440, 0
      %v525 = vsel %vm472, %v441, 0
      %v528 = vsel %vm472, %v442, 0
      %v531 = vsel %vm472, %v443, 0
      %v534 = vsel %vm472, %v444, 0
      %v537 = vsel %vm472, %v445, 0
      %v540 = vsel %vm472, %v446, 0
      %v543 = vsel %vm472, %v447, 0
      %v546 = vsel %vm472, %v448, 0
      %v549 = vsel %vm472, %v449, 0
      %v552 = vsel %vm472, %v450, 0
      %v555 = vsel %vm472, %v451, 0
      %v558 = vsel %vm472, %v452, 0
      %v561 = vsel %vm472, %v453, 0
      %v564 = vsel %vm472, %v454, 0
      %v567 = vsel %vm472, %v455, 0
      %569 = vmatprep.subr.mxu0 0.0
      %570 = vmatpush1.xpose.msra.mxu0 %v567
      %571 = vmatprep.subr.mxu0 0.0
      %572 = vmatpush1.xpose.msra.mxu0 %v564
      %573 = vmatprep.subr.mxu0 0.0
      %574 = vmatpush1.xpose.msra.mxu0 %v561
      %575 = vmatprep.subr.mxu0 0.0
      %576 = vmatpush1.xpose.msra.mxu0 %v558
      %577 = vmatprep.subr.mxu0 0.0
      %578 = vmatpush1.xpose.msra.mxu0 %v555
      %579 = vmatprep.subr.mxu0 0.0
      %580 = vmatpush1.xpose.msra.mxu0 %v552
      %581 = vmatprep.subr.mxu0 0.0
      %582 = vmatpush1.xpose.msra.mxu0 %v549
      %583 = vmatprep.subr.mxu0 0.0
      %584 = vmatpush1.xpose.msra.mxu0 %v546
      %585 = vmatprep.subr.mxu0 0.0
      %586 = vmatpush1.xpose.msra.mxu0 %v543
      %587 = vmatprep.subr.mxu0 0.0
      %588 = vmatpush1.xpose.msra.mxu0 %v540
      %589 = vmatprep.subr.mxu0 0.0
      %590 = vmatpush1.xpose.msra.mxu0 %v537
      %591 = vmatprep.subr.mxu0 0.0
      %592 = vmatpush1.xpose.msra.mxu0 %v534
      %593 = vmatprep.subr.mxu0 0.0
      %594 = vmatpush1.xpose.msra.mxu0 %v531
      %595 = vmatprep.subr.mxu0 0.0
      %596 = vmatpush1.xpose.msra.mxu0 %v528
      %597 = vmatprep.subr.mxu0 0.0
      %598 = vmatpush1.xpose.msra.mxu0 %v525
      %599 = vmatprep.subr.mxu0 0.0
      %600 = vmatpush1.xpose.msra.mxu0 %v522
      %601 = vmatprep.subr.mxu0 0.0
      %602 = vmatpush2.xpose.msra.mxu0 0.0
      %603 = vmatprep.subr.mxu0 0.0
      %604 = vmatpush2.xpose.msra.mxu0 0.0
      %605 = vmatprep.subr.mxu0 0.0
      %606 = vmatpush2.xpose.msra.mxu0 0.0
      %607 = vmatprep.subr.mxu0 0.0
      %608 = vmatpush2.xpose.msra.mxu0 0.0
      %609 = vmatprep.subr.mxu0 0.0
      %610 = vmatpush2.xpose.msra.mxu0 0.0
      %611 = vmatprep.subr.mxu0 0.0
      %612 = vmatpush2.xpose.msra.mxu0 0.0
      %613 = vmatprep.subr.mxu0 0.0
      %614 = vmatpush2.xpose.msra.mxu0 0.0
      %615 = vmatprep.subr.mxu0 0.0
      %616 = vmatpush2.xpose.msra.mxu0 0.0
      %617 = vmatprep.subr.mxu0 0.0
      %618 = vmatpush2.xpose.msra.mxu0 0.0
      %619 = vmatprep.subr.mxu0 0.0
      %620 = vmatpush2.xpose.msra.mxu0 0.0
      %621 = vmatprep.subr.mxu0 0.0
      %622 = vmatpush2.xpose.msra.mxu0 0.0
      %623 = vmatprep.subr.mxu0 0.0
      %624 = vmatpush2.xpose.msra.mxu0 0.0
      %625 = vmatprep.subr.mxu0 0.0
      %626 = vmatpush2.xpose.msra.mxu0 0.0
      %627 = vmatprep.subr.mxu0 0.0
      %628 = vmatpush2.xpose.msra.mxu0 0.0
      %629 = vmatprep.subr.mxu0 0.0
      %630 = vmatpush2.xpose.msra.mxu0 0.0
      %631 = vmatprep.subr.mxu0 0.0
      %632 = vmatpush2.xpose.msra.mxu0 0.0
      %633 = vmatprep.mubr.f32.mxu0 0.0
      %634 = vmatmul.mubr.f32.gmra.mxu0 %v474
      %v635 = vpop.f32.mrf.mxu0
      %v636 = vadd.f32 0.0, %v635
      %v637 = vpop.f32.mrf.mxu0
      %638 = vmatprep.mubr.f32.mxu0 0.0
      %639 = vmatmul.mubr.f32.gmra.mxu0 %v477
      %v640 = vpop.f32.mrf.mxu0
      %v641 = vadd.f32 0.0, %v640
      %v642 = vpop.f32.mrf.mxu0
      %643 = vmatprep.mubr.f32.mxu0 0.0
      %644 = vmatmul.mubr.f32.gmra.mxu0 %v480
      %v645 = vpop.f32.mrf.mxu0
      %v646 = vadd.f32 0.0, %v645
      %v647 = vpop.f32.mrf.mxu0
      %648 = vmatprep.mubr.f32.mxu0 0.0
      %649 = vmatmul.mubr.f32.gmra.mxu0 %v483
      %v650 = vpop.f32.mrf.mxu0
      %v651 = vadd.f32 0.0, %v650
      %v652 = vpop.f32.mrf.mxu0
      %653 = vmatprep.mubr.f32.mxu0 0.0
      %654 = vmatmul.mubr.f32.gmra.mxu0 %v486
      %v655 = vpop.f32.mrf.mxu0
      %v656 = vadd.f32 0.0, %v655
      %v657 = vpop.f32.mrf.mxu0
      %658 = vmatprep.mubr.f32.mxu0 0.0
      %659 = vmatmul.mubr.f32.gmra.mxu0 %v489
      %v660 = vpop.f32.mrf.mxu0
      %v661 = vadd.f32 0.0, %v660
      %v662 = vpop.f32.mrf.mxu0
      %663 = vmatprep.mubr.f32.mxu0 0.0
      %664 = vmatmul.mubr.f32.gmra.mxu0 %v492
      %v665 = vpop.f32.mrf.mxu0
      %v666 = vadd.f32 0.0, %v665
      %v667 = vpop.f32.mrf.mxu0
      %668 = vmatprep.mubr.f32.mxu0 0.0
      %669 = vmatmul.mubr.f32.gmra.mxu0 %v495
      %v670 = vpop.f32.mrf.mxu0
      %v671 = vadd.f32 0.0, %v670
      %v672 = vpop.f32.mrf.mxu0
      %673 = vmatprep.mubr.f32.mxu0 0.0
      %674 = vmatmul.mubr.f32.gmra.mxu0 %v498
      %v675 = vpop.f32.mrf.mxu0
      %v676 = vadd.f32 0.0, %v675
      %v677 = vpop.f32.mrf.mxu0
      %678 = vmatprep.mubr.f32.mxu0 0.0
      %679 = vmatmul.mubr.f32.gmra.mxu0 %v501
      %v680 = vpop.f32.mrf.mxu0
      %v681 = vadd.f32 0.0, %v680
      %v682 = vpop.f32.mrf.mxu0
      %683 = vmatprep.mubr.f32.mxu0 0.0
      %684 = vmatmul.mubr.f32.gmra.mxu0 %v504
      %v685 = vpop.f32.mrf.mxu0
      %v686 = vadd.f32 0.0, %v685
      %v687 = vpop.f32.mrf.mxu0
      %688 = vmatprep.mubr.f32.mxu0 0.0
      %689 = vmatmul.mubr.f32.gmra.mxu0 %v507
      %v690 = vpop.f32.mrf.mxu0
      %v691 = vadd.f32 0.0, %v690
      %v692 = vpop.f32.mrf.mxu0
      %693 = vmatprep.mubr.f32.mxu0 0.0
      %694 = vmatmul.mubr.f32.gmra.mxu0 %v510
      %v695 = vpop.f32.mrf.mxu0
      %v696 = vadd.f32 0.0, %v695
      %v697 = vpop.f32.mrf.mxu0
      %698 = vmatprep.mubr.f32.mxu0 0.0
      %699 = vmatmul.mubr.f32.gmra.mxu0 %v513
      %v700 = vpop.f32.mrf.mxu0
      %v701 = vadd.f32 0.0, %v700
      %v702 = vpop.f32.mrf.mxu0
      %703 = vmatprep.mubr.f32.mxu0 0.0
      %704 = vmatmul.mubr.f32.gmra.mxu0 %v516
      %v705 = vpop.f32.mrf.mxu0
      %v706 = vadd.f32 0.0, %v705
      %v707 = vpop.f32.mrf.mxu0
      %708 = vmatprep.mubr.f32.mxu0 0.0
      %709 = vmatmul.mubr.f32.gmra.mxu0 %v519
      %v710 = vpop.f32.mrf.mxu0
      %v711 = vadd.f32 0.0, %v710
      %v712 = vpop.f32.mrf.mxu0
      %713 = vdwg.mxu0
      %v714 = vld [vmem:[#allocation2] sm:$0xff]
      %v715 = vld [vmem:[#allocation2 + $0x8] sm:$0xff]
      %v716 = vld [vmem:[#allocation2 + $0x10] sm:$0xff]
      %v717 = vld [vmem:[#allocation2 + $0x18] sm:$0xff]
      %v718 = vld [vmem:[#allocation2 + $0x20] sm:$0xff]
      %v719 = vld [vmem:[#allocation2 + $0x28] sm:$0xff]
      %v720 = vld [vmem:[#allocation2 + $0x30] sm:$0xff]
      %v721 = vld [vmem:[#allocation2 + $0x38] sm:$0xff]
      %v722 = vld [vmem:[#allocation2 + $0x40] sm:$0xff]
      %v723 = vld [vmem:[#allocation2 + $0x48] sm:$0xff]
      %v724 = vld [vmem:[#allocation2 + $0x50] sm:$0xff]
      %v725 = vld [vmem:[#allocation2 + $0x58] sm:$0xff]
      %v726 = vld [vmem:[#allocation2 + $0x60] sm:$0xff]
      %v727 = vld [vmem:[#allocation2 + $0x68] sm:$0xff]
      %v728 = vld [vmem:[#allocation2 + $0x70] sm:$0xff]
      %v729 = vld [vmem:[#allocation2 + $0x78] sm:$0xff]
      %730 = vmax.xlane.f32.xlu0 %v636
      %v731 = vpop.xlane.xlu0 %730
      %732 = vmax.xlane.f32.xlu0 %v641
      %v733 = vpop.xlane.xlu0 %732
      %734 = vmax.xlane.f32.xlu0 %v646
      %v735 = vpop.xlane.xlu0 %734
      %736 = vmax.xlane.f32.xlu0 %v651
      %v737 = vpop.xlane.xlu0 %736
      %738 = vmax.xlane.f32.xlu0 %v656
      %v739 = vpop.xlane.xlu0 %738
      %740 = vmax.xlane.f32.xlu0 %v661
      %v741 = vpop.xlane.xlu0 %740
      %742 = vmax.xlane.f32.xlu0 %v666
      %v743 = vpop.xlane.xlu0 %742
      %744 = vmax.xlane.f32.xlu0 %v671
      %v745 = vpop.xlane.xlu0 %744
      %746 = vmax.xlane.f32.xlu0 %v676
      %v747 = vpop.xlane.xlu0 %746
      %748 = vmax.xlane.f32.xlu0 %v681
      %v749 = vpop.xlane.xlu0 %748
      %750 = vmax.xlane.f32.xlu0 %v686
      %v751 = vpop.xlane.xlu0 %750
      %752 = vmax.xlane.f32.xlu0 %v691
      %v753 = vpop.xlane.xlu0 %752
      %754 = vmax.xlane.f32.xlu0 %v696
      %v755 = vpop.xlane.xlu0 %754
      %756 = vmax.xlane.f32.xlu0 %v701
      %v757 = vpop.xlane.xlu0 %756
      %758 = vmax.xlane.f32.xlu0 %v706
      %v759 = vpop.xlane.xlu0 %758
      %760 = vmax.xlane.f32.xlu0 %v711
      %v761 = vpop.xlane.xlu0 %760
      %v762 = vmax.f32 %v714, %v731
      %v763 = vmax.f32 %v715, %v733
      %v764 = vmax.f32 %v716, %v735
      %v765 = vmax.f32 %v717, %v737
      %v766 = vmax.f32 %v718, %v739
      %v767 = vmax.f32 %v719, %v741
      %v768 = vmax.f32 %v720, %v743
      %v769 = vmax.f32 %v721, %v745
      %v770 = vmax.f32 %v722, %v747
      %v771 = vmax.f32 %v723, %v749
      %v772 = vmax.f32 %v724, %v751
      %v773 = vmax.f32 %v725, %v753
      %v774 = vmax.f32 %v726, %v755
      %v775 = vmax.f32 %v727, %v757
      %v776 = vmax.f32 %v728, %v759
      %v777 = vmax.f32 %v729, %v761
      %v778 = vsub.f32 %v714, %v762
      %v779 = vsub.f32 %v715, %v763
      %v780 = vsub.f32 %v716, %v764
      %v781 = vsub.f32 %v717, %v765
      %v782 = vsub.f32 %v718, %v766
      %v783 = vsub.f32 %v719, %v767
      %v784 = vsub.f32 %v720, %v768
      %v785 = vsub.f32 %v721, %v769
      %v786 = vsub.f32 %v722, %v770
      %v787 = vsub.f32 %v723, %v771
      %v788 = vsub.f32 %v724, %v772
      %v789 = vsub.f32 %v725, %v773
      %v790 = vsub.f32 %v726, %v774
      %v791 = vsub.f32 %v727, %v775
      %v792 = vsub.f32 %v728, %v776
      %v793 = vsub.f32 %v729, %v777
      %v794 = vmul.f32 %v778, 1.442695
      %v795 = vpow.pop %v794
      %v796 = vmul.f32 %v779, 1.442695
      %v797 = vpow.pop %v796
      %v798 = vmul.f32 %v780, 1.442695
      %v799 = vpow.pop %v798
      %v800 = vmul.f32 %v781, 1.442695
      %v801 = vpow.pop %v800
      %v802 = vmul.f32 %v782, 1.442695
      %v803 = vpow.pop %v802
      %v804 = vmul.f32 %v783, 1.442695
      %v805 = vpow.pop %v804
      %v806 = vmul.f32 %v784, 1.442695
      %v807 = vpow.pop %v806
      %v808 = vmul.f32 %v785, 1.442695
      %v809 = vpow.pop %v808
      %v810 = vmul.f32 %v786, 1.442695
      %v811 = vpow.pop %v810
      %v812 = vmul.f32 %v787, 1.442695
      %v813 = vpow.pop %v812
      %v814 = vmul.f32 %v788, 1.442695
      %v815 = vpow.pop %v814
      %v816 = vmul.f32 %v789, 1.442695
      %v817 = vpow.pop %v816
      %v818 = vmul.f32 %v790, 1.442695
      %v819 = vpow.pop %v818
      %v820 = vmul.f32 %v791, 1.442695
      %v821 = vpow.pop %v820
      %v822 = vmul.f32 %v792, 1.442695
      %v823 = vpow.pop %v822
      %v824 = vmul.f32 %v793, 1.442695
      %v825 = vpow.pop %v824
      %827 = vset.pattern.permute.xlu0 0
      %828 = vperm.xlu0 %827, %v762
      %v829 = vpop.permute.xlu0 %828
      %832 = vset.pattern.permute.xlu0 0
      %833 = vperm.xlu0 %832, %v763
      %v834 = vpop.permute.xlu0 %833
      %837 = vset.pattern.permute.xlu0 0
      %838 = vperm.xlu0 %837, %v764
      %v839 = vpop.permute.xlu0 %838
      %842 = vset.pattern.permute.xlu0 0
      %843 = vperm.xlu0 %842, %v765
      %v844 = vpop.permute.xlu0 %843
      %847 = vset.pattern.permute.xlu0 0
      %848 = vperm.xlu0 %847, %v766
      %v849 = vpop.permute.xlu0 %848
      %852 = vset.pattern.permute.xlu0 0
      %853 = vperm.xlu0 %852, %v767
      %v854 = vpop.permute.xlu0 %853
      %857 = vset.pattern.permute.xlu0 0
      %858 = vperm.xlu0 %857, %v768
      %v859 = vpop.permute.xlu0 %858
      %862 = vset.pattern.permute.xlu0 0
      %863 = vperm.xlu0 %862, %v769
      %v864 = vpop.permute.xlu0 %863
      %867 = vset.pattern.permute.xlu0 0
      %868 = vperm.xlu0 %867, %v770
      %v869 = vpop.permute.xlu0 %868
      %872 = vset.pattern.permute.xlu0 0
      %873 = vperm.xlu0 %872, %v771
      %v874 = vpop.permute.xlu0 %873
      %877 = vset.pattern.permute.xlu0 0
      %878 = vperm.xlu0 %877, %v772
      %v879 = vpop.permute.xlu0 %878
      %882 = vset.pattern.permute.xlu0 0
      %883 = vperm.xlu0 %882, %v773
      %v884 = vpop.permute.xlu0 %883
      %887 = vset.pattern.permute.xlu0 0
      %888 = vperm.xlu0 %887, %v774
      %v889 = vpop.permute.xlu0 %888
      %892 = vset.pattern.permute.xlu0 0
      %893 = vperm.xlu0 %892, %v775
      %v894 = vpop.permute.xlu0 %893
      %897 = vset.pattern.permute.xlu0 0
      %898 = vperm.xlu0 %897, %v776
      %v899 = vpop.permute.xlu0 %898
      %902 = vset.pattern.permute.xlu0 0
      %903 = vperm.xlu0 %902, %v777
      %v904 = vpop.permute.xlu0 %903
      %v906 = vsub.f32 %v636, %v829
      %v907 = vsub.f32 %v641, %v834
      %v908 = vsub.f32 %v646, %v839
      %v909 = vsub.f32 %v651, %v844
      %v910 = vsub.f32 %v656, %v849
      %v911 = vsub.f32 %v661, %v854
      %v912 = vsub.f32 %v666, %v859
      %v913 = vsub.f32 %v671, %v864
      %v914 = vsub.f32 %v676, %v869
      %v915 = vsub.f32 %v681, %v874
      %v916 = vsub.f32 %v686, %v879
      %v917 = vsub.f32 %v691, %v884
      %v918 = vsub.f32 %v696, %v889
      %v919 = vsub.f32 %v701, %v894
      %v920 = vsub.f32 %v706, %v899
      %v921 = vsub.f32 %v711, %v904
      %v922 = vmul.f32 %v906, 1.442695
      %v923 = vpow.pop %v922
      %v924 = vmul.f32 %v907, 1.442695
      %v925 = vpow.pop %v924
      %v926 = vmul.f32 %v908, 1.442695
      %v927 = vpow.pop %v926
      %v928 = vmul.f32 %v909, 1.442695
      %v929 = vpow.pop %v928
      %v930 = vmul.f32 %v910, 1.442695
      %v931 = vpow.pop %v930
      %v932 = vmul.f32 %v911, 1.442695
      %v933 = vpow.pop %v932
      %v934 = vmul.f32 %v912, 1.442695
      %v935 = vpow.pop %v934
      %v936 = vmul.f32 %v913, 1.442695
      %v937 = vpow.pop %v936
      %v938 = vmul.f32 %v914, 1.442695
      %v939 = vpow.pop %v938
      %v940 = vmul.f32 %v915, 1.442695
      %v941 = vpow.pop %v940
      %v942 = vmul.f32 %v916, 1.442695
      %v943 = vpow.pop %v942
      %v944 = vmul.f32 %v917, 1.442695
      %v945 = vpow.pop %v944
      %v946 = vmul.f32 %v918, 1.442695
      %v947 = vpow.pop %v946
      %v948 = vmul.f32 %v919, 1.442695
      %v949 = vpow.pop %v948
      %v950 = vmul.f32 %v920, 1.442695
      %v951 = vpow.pop %v950
      %v952 = vmul.f32 %v921, 1.442695
      %v953 = vpow.pop %v952
      %v954 = vld [vmem:[#allocation3] sm:$0xff]
      %v955 = vld [vmem:[#allocation3 + $0x8] sm:$0xff]
      %v956 = vld [vmem:[#allocation3 + $0x10] sm:$0xff]
      %v957 = vld [vmem:[#allocation3 + $0x18] sm:$0xff]
      %v958 = vld [vmem:[#allocation3 + $0x20] sm:$0xff]
      %v959 = vld [vmem:[#allocation3 + $0x28] sm:$0xff]
      %v960 = vld [vmem:[#allocation3 + $0x30] sm:$0xff]
      %v961 = vld [vmem:[#allocation3 + $0x38] sm:$0xff]
      %v962 = vld [vmem:[#allocation3 + $0x40] sm:$0xff]
      %v963 = vld [vmem:[#allocation3 + $0x48] sm:$0xff]
      %v964 = vld [vmem:[#allocation3 + $0x50] sm:$0xff]
      %v965 = vld [vmem:[#allocation3 + $0x58] sm:$0xff]
      %v966 = vld [vmem:[#allocation3 + $0x60] sm:$0xff]
      %v967 = vld [vmem:[#allocation3 + $0x68] sm:$0xff]
      %v968 = vld [vmem:[#allocation3 + $0x70] sm:$0xff]
      %v969 = vld [vmem:[#allocation3 + $0x78] sm:$0xff]
      %v970 = vmul.f32 %v795, %v954
      %v971 = vmul.f32 %v797, %v955
      %v972 = vmul.f32 %v799, %v956
      %v973 = vmul.f32 %v801, %v957
      %v974 = vmul.f32 %v803, %v958
      %v975 = vmul.f32 %v805, %v959
      %v976 = vmul.f32 %v807, %v960
      %v977 = vmul.f32 %v809, %v961
      %v978 = vmul.f32 %v811, %v962
      %v979 = vmul.f32 %v813, %v963
      %v980 = vmul.f32 %v815, %v964
      %v981 = vmul.f32 %v817, %v965
      %v982 = vmul.f32 %v819, %v966
      %v983 = vmul.f32 %v821, %v967
      %v984 = vmul.f32 %v823, %v968
      %v985 = vmul.f32 %v825, %v969
      %986 = vadd.xlane.f32.xlu0 %v923
      %v987 = vpop.xlane.xlu0 %986
      %988 = vadd.xlane.f32.xlu0 %v925
      %v989 = vpop.xlane.xlu0 %988
      %990 = vadd.xlane.f32.xlu0 %v927
      %v991 = vpop.xlane.xlu0 %990
      %992 = vadd.xlane.f32.xlu0 %v929
      %v993 = vpop.xlane.xlu0 %992
      %994 = vadd.xlane.f32.xlu0 %v931
      %v995 = vpop.xlane.xlu0 %994
      %996 = vadd.xlane.f32.xlu0 %v933
      %v997 = vpop.xlane.xlu0 %996
      %998 = vadd.xlane.f32.xlu0 %v935
      %v999 = vpop.xlane.xlu0 %998
      %1000 = vadd.xlane.f32.xlu0 %v937
      %v1001 = vpop.xlane.xlu0 %1000
      %1002 = vadd.xlane.f32.xlu0 %v939
      %v1003 = vpop.xlane.xlu0 %1002
      %1004 = vadd.xlane.f32.xlu0 %v941
      %v1005 = vpop.xlane.xlu0 %1004
      %1006 = vadd.xlane.f32.xlu0 %v943
      %v1007 = vpop.xlane.xlu0 %1006
      %1008 = vadd.xlane.f32.xlu0 %v945
      %v1009 = vpop.xlane.xlu0 %1008
      %1010 = vadd.xlane.f32.xlu0 %v947
      %v1011 = vpop.xlane.xlu0 %1010
      %1012 = vadd.xlane.f32.xlu0 %v949
      %v1013 = vpop.xlane.xlu0 %1012
      %1014 = vadd.xlane.f32.xlu0 %v951
      %v1015 = vpop.xlane.xlu0 %1014
      %1016 = vadd.xlane.f32.xlu0 %v953
      %v1017 = vpop.xlane.xlu0 %1016
      %v1018 = vadd.f32 %v970, %v987
      %v1019 = vadd.f32 %v971, %v989
      %v1020 = vadd.f32 %v972, %v991
      %v1021 = vadd.f32 %v973, %v993
      %v1022 = vadd.f32 %v974, %v995
      %v1023 = vadd.f32 %v975, %v997
      %v1024 = vadd.f32 %v976, %v999
      %v1025 = vadd.f32 %v977, %v1001
      %v1026 = vadd.f32 %v978, %v1003
      %v1027 = vadd.f32 %v979, %v1005
      %v1028 = vadd.f32 %v980, %v1007
      %v1029 = vadd.f32 %v981, %v1009
      %v1030 = vadd.f32 %v982, %v1011
      %v1031 = vadd.f32 %v983, %v1013
      %v1032 = vadd.f32 %v984, %v1015
      %v1033 = vadd.f32 %v985, %v1017
      %vm1034 = vcmask 7168
      %1035 = vst.msk [vmem:[#allocation3] sm:$0xff] %vm1034, %v1018
      %1036 = vst.msk [vmem:[#allocation3 + $0x8] sm:$0xff] %vm1034, %v1019
      %1037 = vst.msk [vmem:[#allocation3 + $0x10] sm:$0xff] %vm1034, %v1020
      %1038 = vst.msk [vmem:[#allocation3 + $0x18] sm:$0xff] %vm1034, %v1021
      %1039 = vst.msk [vmem:[#allocation3 + $0x20] sm:$0xff] %vm1034, %v1022
      %1040 = vst.msk [vmem:[#allocation3 + $0x28] sm:$0xff] %vm1034, %v1023
      %1041 = vst.msk [vmem:[#allocation3 + $0x30] sm:$0xff] %vm1034, %v1024
      %1042 = vst.msk [vmem:[#allocation3 + $0x38] sm:$0xff] %vm1034, %v1025
      %1043 = vst.msk [vmem:[#allocation3 + $0x40] sm:$0xff] %vm1034, %v1026
      %1044 = vst.msk [vmem:[#allocation3 + $0x48] sm:$0xff] %vm1034, %v1027
      %1045 = vst.msk [vmem:[#allocation3 + $0x50] sm:$0xff] %vm1034, %v1028
      %1046 = vst.msk [vmem:[#allocation3 + $0x58] sm:$0xff] %vm1034, %v1029
      %1047 = vst.msk [vmem:[#allocation3 + $0x60] sm:$0xff] %vm1034, %v1030
      %1048 = vst.msk [vmem:[#allocation3 + $0x68] sm:$0xff] %vm1034, %v1031
      %1049 = vst.msk [vmem:[#allocation3 + $0x70] sm:$0xff] %vm1034, %v1032
      %1050 = vst.msk [vmem:[#allocation3 + $0x78] sm:$0xff] %vm1034, %v1033
      %v1051 = vld [vmem:[#allocation4] sm:$0xff]
      %v1052 = vld [vmem:[#allocation4 + $0x8] sm:$0xff]
      %v1053 = vld [vmem:[#allocation4 + $0x10] sm:$0xff]
      %v1054 = vld [vmem:[#allocation4 + $0x18] sm:$0xff]
      %v1055 = vld [vmem:[#allocation4 + $0x20] sm:$0xff]
      %v1056 = vld [vmem:[#allocation4 + $0x28] sm:$0xff]
      %v1057 = vld [vmem:[#allocation4 + $0x30] sm:$0xff]
      %v1058 = vld [vmem:[#allocation4 + $0x38] sm:$0xff]
      %v1059 = vld [vmem:[#allocation4 + $0x40] sm:$0xff]
      %v1060 = vld [vmem:[#allocation4 + $0x48] sm:$0xff]
      %v1061 = vld [vmem:[#allocation4 + $0x50] sm:$0xff]
      %v1062 = vld [vmem:[#allocation4 + $0x58] sm:$0xff]
      %v1063 = vld [vmem:[#allocation4 + $0x60] sm:$0xff]
      %v1064 = vld [vmem:[#allocation4 + $0x68] sm:$0xff]
      %v1065 = vld [vmem:[#allocation4 + $0x70] sm:$0xff]
      %v1066 = vld [vmem:[#allocation4 + $0x78] sm:$0xff]
      %1068 = vset.pattern.permute.xlu0 0
      %1069 = vperm.xlu0 %1068, %v795
      %v1070 = vpop.permute.xlu0 %1069
      %1073 = vset.pattern.permute.xlu0 0
      %1074 = vperm.xlu0 %1073, %v797
      %v1075 = vpop.permute.xlu0 %1074
      %1078 = vset.pattern.permute.xlu0 0
      %1079 = vperm.xlu0 %1078, %v799
      %v1080 = vpop.permute.xlu0 %1079
      %1083 = vset.pattern.permute.xlu0 0
      %1084 = vperm.xlu0 %1083, %v801
      %v1085 = vpop.permute.xlu0 %1084
      %1088 = vset.pattern.permute.xlu0 0
      %1089 = vperm.xlu0 %1088, %v803
      %v1090 = vpop.permute.xlu0 %1089
      %1093 = vset.pattern.permute.xlu0 0
      %1094 = vperm.xlu0 %1093, %v805
      %v1095 = vpop.permute.xlu0 %1094
      %1098 = vset.pattern.permute.xlu0 0
      %1099 = vperm.xlu0 %1098, %v807
      %v1100 = vpop.permute.xlu0 %1099
      %1103 = vset.pattern.permute.xlu0 0
      %1104 = vperm.xlu0 %1103, %v809
      %v1105 = vpop.permute.xlu0 %1104
      %1108 = vset.pattern.permute.xlu0 0
      %1109 = vperm.xlu0 %1108, %v811
      %v1110 = vpop.permute.xlu0 %1109
      %1113 = vset.pattern.permute.xlu0 0
      %1114 = vperm.xlu0 %1113, %v813
      %v1115 = vpop.permute.xlu0 %1114
      %1118 = vset.pattern.permute.xlu0 0
      %1119 = vperm.xlu0 %1118, %v815
      %v1120 = vpop.permute.xlu0 %1119
      %1123 = vset.pattern.permute.xlu0 0
      %1124 = vperm.xlu0 %1123, %v817
      %v1125 = vpop.permute.xlu0 %1124
      %1128 = vset.pattern.permute.xlu0 0
      %1129 = vperm.xlu0 %1128, %v819
      %v1130 = vpop.permute.xlu0 %1129
      %1133 = vset.pattern.permute.xlu0 0
      %1134 = vperm.xlu0 %1133, %v821
      %v1135 = vpop.permute.xlu0 %1134
      %1138 = vset.pattern.permute.xlu0 0
      %1139 = vperm.xlu0 %1138, %v823
      %v1140 = vpop.permute.xlu0 %1139
      %1143 = vset.pattern.permute.xlu0 0
      %1144 = vperm.xlu0 %1143, %v825
      %v1145 = vpop.permute.xlu0 %1144
      %v1147 = vmul.f32 %v1070, %v1051
      %v1148 = vmul.f32 %v1075, %v1052
      %v1149 = vmul.f32 %v1080, %v1053
      %v1150 = vmul.f32 %v1085, %v1054
      %v1151 = vmul.f32 %v1090, %v1055
      %v1152 = vmul.f32 %v1095, %v1056
      %v1153 = vmul.f32 %v1100, %v1057
      %v1154 = vmul.f32 %v1105, %v1058
      %v1155 = vmul.f32 %v1110, %v1059
      %v1156 = vmul.f32 %v1115, %v1060
      %v1157 = vmul.f32 %v1120, %v1061
      %v1158 = vmul.f32 %v1125, %v1062
      %v1159 = vmul.f32 %v1130, %v1063
      %v1160 = vmul.f32 %v1135, %v1064
      %v1161 = vmul.f32 %v1140, %v1065
      %v1162 = vmul.f32 %v1145, %v1066
      %1163 = vmatprep.subr.mxu0 0.0
      %1164 = vmatpush1.msra.mxu0 %v471
      %1165 = vmatprep.subr.mxu0 0.0
      %1166 = vmatpush1.msra.mxu0 %v470
      %1167 = vmatprep.subr.mxu0 0.0
      %1168 = vmatpush1.msra.mxu0 %v469
      %1169 = vmatprep.subr.mxu0 0.0
      %1170 = vmatpush1.msra.mxu0 %v468
      %1171 = vmatprep.subr.mxu0 0.0
      %1172 = vmatpush1.msra.mxu0 %v467
      %1173 = vmatprep.subr.mxu0 0.0
      %1174 = vmatpush1.msra.mxu0 %v466
      %1175 = vmatprep.subr.mxu0 0.0
      %1176 = vmatpush1.msra.mxu0 %v465
      %1177 = vmatprep.subr.mxu0 0.0
      %1178 = vmatpush1.msra.mxu0 %v464
      %1179 = vmatprep.subr.mxu0 0.0
      %1180 = vmatpush1.msra.mxu0 %v463
      %1181 = vmatprep.subr.mxu0 0.0
      %1182 = vmatpush1.msra.mxu0 %v462
      %1183 = vmatprep.subr.mxu0 0.0
      %1184 = vmatpush1.msra.mxu0 %v461
      %1185 = vmatprep.subr.mxu0 0.0
      %1186 = vmatpush1.msra.mxu0 %v460
      %1187 = vmatprep.subr.mxu0 0.0
      %1188 = vmatpush1.msra.mxu0 %v459
      %1189 = vmatprep.subr.mxu0 0.0
      %1190 = vmatpush1.msra.mxu0 %v458
      %1191 = vmatprep.subr.mxu0 0.0
      %1192 = vmatpush1.msra.mxu0 %v457
      %1193 = vmatprep.subr.mxu0 0.0
      %1194 = vmatpush1.msra.mxu0 %v456
      %1195 = vmatprep.subr.mxu0 0.0
      %1196 = vmatpush2.msra.mxu0 0.0
      %1197 = vmatprep.subr.mxu0 0.0
      %1198 = vmatpush2.msra.mxu0 0.0
      %1199 = vmatprep.subr.mxu0 0.0
      %1200 = vmatpush2.msra.mxu0 0.0
      %1201 = vmatprep.subr.mxu0 0.0
      %1202 = vmatpush2.msra.mxu0 0.0
      %1203 = vmatprep.subr.mxu0 0.0
      %1204 = vmatpush2.msra.mxu0 0.0
      %1205 = vmatprep.subr.mxu0 0.0
      %1206 = vmatpush2.msra.mxu0 0.0
      %1207 = vmatprep.subr.mxu0 0.0
      %1208 = vmatpush2.msra.mxu0 0.0
      %1209 = vmatprep.subr.mxu0 0.0
      %1210 = vmatpush2.msra.mxu0 0.0
      %1211 = vmatprep.subr.mxu0 0.0
      %1212 = vmatpush2.msra.mxu0 0.0
      %1213 = vmatprep.subr.mxu0 0.0
      %1214 = vmatpush2.msra.mxu0 0.0
      %1215 = vmatprep.subr.mxu0 0.0
      %1216 = vmatpush2.msra.mxu0 0.0
      %1217 = vmatprep.subr.mxu0 0.0
      %1218 = vmatpush2.msra.mxu0 0.0
      %1219 = vmatprep.subr.mxu0 0.0
      %1220 = vmatpush2.msra.mxu0 0.0
      %1221 = vmatprep.subr.mxu0 0.0
      %1222 = vmatpush2.msra.mxu0 0.0
      %1223 = vmatprep.subr.mxu0 0.0
      %1224 = vmatpush2.msra.mxu0 0.0
      %1225 = vmatprep.subr.mxu0 0.0
      %1226 = vmatpush2.msra.mxu0 0.0
      %1227 = vmatprep.mubr.f32.mxu0 0.0
      %1228 = vmatmul.mubr.f32.gmra.mxu0 %v923
      %v1229 = vpop.f32.mrf.mxu0
      %v1230 = vadd.f32 0.0, %v1229
      %v1231 = vpop.f32.mrf.mxu0
      %1232 = vmatprep.mubr.f32.mxu0 0.0
      %1233 = vmatmul.mubr.f32.gmra.mxu0 %v925
      %v1234 = vpop.f32.mrf.mxu0
      %v1235 = vadd.f32 0.0, %v1234
      %v1236 = vpop.f32.mrf.mxu0
      %1237 = vmatprep.mubr.f32.mxu0 0.0
      %1238 = vmatmul.mubr.f32.gmra.mxu0 %v927
      %v1239 = vpop.f32.mrf.mxu0
      %v1240 = vadd.f32 0.0, %v1239
      %v1241 = vpop.f32.mrf.mxu0
      %1242 = vmatprep.mubr.f32.mxu0 0.0
      %1243 = vmatmul.mubr.f32.gmra.mxu0 %v929
      %v1244 = vpop.f32.mrf.mxu0
      %v1245 = vadd.f32 0.0, %v1244
      %v1246 = vpop.f32.mrf.mxu0
      %1247 = vmatprep.mubr.f32.mxu0 0.0
      %1248 = vmatmul.mubr.f32.gmra.mxu0 %v931
      %v1249 = vpop.f32.mrf.mxu0
      %v1250 = vadd.f32 0.0, %v1249
      %v1251 = vpop.f32.mrf.mxu0
      %1252 = vmatprep.mubr.f32.mxu0 0.0
      %1253 = vmatmul.mubr.f32.gmra.mxu0 %v933
      %v1254 = vpop.f32.mrf.mxu0
      %v1255 = vadd.f32 0.0, %v1254
      %v1256 = vpop.f32.mrf.mxu0
      %1257 = vmatprep.mubr.f32.mxu0 0.0
      %1258 = vmatmul.mubr.f32.gmra.mxu0 %v935
      %v1259 = vpop.f32.mrf.mxu0
      %v1260 = vadd.f32 0.0, %v1259
      %v1261 = vpop.f32.mrf.mxu0
      %1262 = vmatprep.mubr.f32.mxu0 0.0
      %1263 = vmatmul.mubr.f32.gmra.mxu0 %v937
      %v1264 = vpop.f32.mrf.mxu0
      %v1265 = vadd.f32 0.0, %v1264
      %v1266 = vpop.f32.mrf.mxu0
      %1267 = vmatprep.mubr.f32.mxu0 0.0
      %1268 = vmatmul.mubr.f32.gmra.mxu0 %v939
      %v1269 = vpop.f32.mrf.mxu0
      %v1270 = vadd.f32 0.0, %v1269
      %v1271 = vpop.f32.mrf.mxu0
      %1272 = vmatprep.mubr.f32.mxu0 0.0
      %1273 = vmatmul.mubr.f32.gmra.mxu0 %v941
      %v1274 = vpop.f32.mrf.mxu0
      %v1275 = vadd.f32 0.0, %v1274
      %v1276 = vpop.f32.mrf.mxu0
      %1277 = vmatprep.mubr.f32.mxu0 0.0
      %1278 = vmatmul.mubr.f32.gmra.mxu0 %v943
      %v1279 = vpop.f32.mrf.mxu0
      %v1280 = vadd.f32 0.0, %v1279
      %v1281 = vpop.f32.mrf.mxu0
      %1282 = vmatprep.mubr.f32.mxu0 0.0
      %1283 = vmatmul.mubr.f32.gmra.mxu0 %v945
      %v1284 = vpop.f32.mrf.mxu0
      %v1285 = vadd.f32 0.0, %v1284
      %v1286 = vpop.f32.mrf.mxu0
      %1287 = vmatprep.mubr.f32.mxu0 0.0
      %1288 = vmatmul.mubr.f32.gmra.mxu0 %v947
      %v1289 = vpop.f32.mrf.mxu0
      %v1290 = vadd.f32 0.0, %v1289
      %v1291 = vpop.f32.mrf.mxu0
      %1292 = vmatprep.mubr.f32.mxu0 0.0
      %1293 = vmatmul.mubr.f32.gmra.mxu0 %v949
      %v1294 = vpop.f32.mrf.mxu0
      %v1295 = vadd.f32 0.0, %v1294
      %v1296 = vpop.f32.mrf.mxu0
      %1297 = vmatprep.mubr.f32.mxu0 0.0
      %1298 = vmatmul.mubr.f32.gmra.mxu0 %v951
      %v1299 = vpop.f32.mrf.mxu0
      %v1300 = vadd.f32 0.0, %v1299
      %v1301 = vpop.f32.mrf.mxu0
      %1302 = vmatprep.mubr.f32.mxu0 0.0
      %1303 = vmatmul.mubr.f32.gmra.mxu0 %v953
      %v1304 = vpop.f32.mrf.mxu0
      %v1305 = vadd.f32 0.0, %v1304
      %v1306 = vpop.f32.mrf.mxu0
      %1307 = vdwg.mxu0
      %v1308 = vadd.f32 %v1147, %v1230
      %v1309 = vadd.f32 %v1148, %v1235
      %v1310 = vadd.f32 %v1149, %v1240
      %v1311 = vadd.f32 %v1150, %v1245
      %v1312 = vadd.f32 %v1151, %v1250
      %v1313 = vadd.f32 %v1152, %v1255
      %v1314 = vadd.f32 %v1153, %v1260
      %v1315 = vadd.f32 %v1154, %v1265
      %v1316 = vadd.f32 %v1155, %v1270
      %v1317 = vadd.f32 %v1156, %v1275
      %v1318 = vadd.f32 %v1157, %v1280
      %v1319 = vadd.f32 %v1158, %v1285
      %v1320 = vadd.f32 %v1159, %v1290
      %v1321 = vadd.f32 %v1160, %v1295
      %v1322 = vadd.f32 %v1161, %v1300
      %v1323 = vadd.f32 %v1162, %v1305
      %1324 = vst.msk [vmem:[#allocation4] sm:$0xff] %vm472, %v1308
      %1325 = vst.msk [vmem:[#allocation4 + $0x8] sm:$0xff] %vm472, %v1309
      %1326 = vst.msk [vmem:[#allocation4 + $0x10] sm:$0xff] %vm472, %v1310
      %1327 = vst.msk [vmem:[#allocation4 + $0x18] sm:$0xff] %vm472, %v1311
      %1328 = vst.msk [vmem:[#allocation4 + $0x20] sm:$0xff] %vm472, %v1312
      %1329 = vst.msk [vmem:[#allocation4 + $0x28] sm:$0xff] %vm472, %v1313
      %1330 = vst.msk [vmem:[#allocation4 + $0x30] sm:$0xff] %vm472, %v1314
      %1331 = vst.msk [vmem:[#allocation4 + $0x38] sm:$0xff] %vm472, %v1315
      %1332 = vst.msk [vmem:[#allocation4 + $0x40] sm:$0xff] %vm472, %v1316
      %1333 = vst.msk [vmem:[#allocation4 + $0x48] sm:$0xff] %vm472, %v1317
      %1334 = vst.msk [vmem:[#allocation4 + $0x50] sm:$0xff] %vm472, %v1318
      %1335 = vst.msk [vmem:[#allocation4 + $0x58] sm:$0xff] %vm472, %v1319
      %1336 = vst.msk [vmem:[#allocation4 + $0x60] sm:$0xff] %vm472, %v1320
      %1337 = vst.msk [vmem:[#allocation4 + $0x68] sm:$0xff] %vm472, %v1321
      %1338 = vst.msk [vmem:[#allocation4 + $0x70] sm:$0xff] %vm472, %v1322
      %1339 = vst.msk [vmem:[#allocation4 + $0x78] sm:$0xff] %vm472, %v1323
      %1340 = vst.msk [vmem:[#allocation2] sm:$0xff] %vm1034, %v762
      %1341 = vst.msk [vmem:[#allocation2 + $0x8] sm:$0xff] %vm1034, %v763
      %1342 = vst.msk [vmem:[#allocation2 + $0x10] sm:$0xff] %vm1034, %v764
      %1343 = vst.msk [vmem:[#allocation2 + $0x18] sm:$0xff] %vm1034, %v765
      %1344 = vst.msk [vmem:[#allocation2 + $0x20] sm:$0xff] %vm1034, %v766
      %1345 = vst.msk [vmem:[#allocation2 + $0x28] sm:$0xff] %vm1034, %v767
      %1346 = vst.msk [vmem:[#allocation2 + $0x30] sm:$0xff] %vm1034, %v768
      %1347 = vst.msk [vmem:[#allocation2 + $0x38] sm:$0xff] %vm1034, %v769
      %1348 = vst.msk [vmem:[#allocation2 + $0x40] sm:$0xff] %vm1034, %v770
      %1349 = vst.msk [vmem:[#allocation2 + $0x48] sm:$0xff] %vm1034, %v771
      %1350 = vst.msk [vmem:[#allocation2 + $0x50] sm:$0xff] %vm1034, %v772
      %1351 = vst.msk [vmem:[#allocation2 + $0x58] sm:$0xff] %vm1034, %v773
      %1352 = vst.msk [vmem:[#allocation2 + $0x60] sm:$0xff] %vm1034, %v774
      %1353 = vst.msk [vmem:[#allocation2 + $0x68] sm:$0xff] %vm1034, %v775
      %1354 = vst.msk [vmem:[#allocation2 + $0x70] sm:$0xff] %vm1034, %v776
      %1355 = vst.msk [vmem:[#allocation2 + $0x78] sm:$0xff] %vm1034, %v777
      %p1356 = scmp.eq.s32.totalorder %s23, 1
      // Predicated region
      $region37: #{mha_forward.4} parent=31 // pred_check
        %p1357 = pneg %p1356
      $region38: #{mha_forward.4} parent=31 // pred_check_branch
        %1359 = sbr.rel (%p1357) target = $region40
      $region39: #{mha_forward.4} parent=31 // pred_region
        %v1360 = vld [vmem:[#allocation3] sm:$0xff]
        %v1361 = vld [vmem:[#allocation3 + $0x8] sm:$0xff]
        %v1362 = vld [vmem:[#allocation3 + $0x10] sm:$0xff]
        %v1363 = vld [vmem:[#allocation3 + $0x18] sm:$0xff]
        %v1364 = vld [vmem:[#allocation3 + $0x20] sm:$0xff]
        %v1365 = vld [vmem:[#allocation3 + $0x28] sm:$0xff]
        %v1366 = vld [vmem:[#allocation3 + $0x30] sm:$0xff]
        %v1367 = vld [vmem:[#allocation3 + $0x38] sm:$0xff]
        %v1368 = vld [vmem:[#allocation3 + $0x40] sm:$0xff]
        %v1369 = vld [vmem:[#allocation3 + $0x48] sm:$0xff]
        %v1370 = vld [vmem:[#allocation3 + $0x50] sm:$0xff]
        %v1371 = vld [vmem:[#allocation3 + $0x58] sm:$0xff]
        %v1372 = vld [vmem:[#allocation3 + $0x60] sm:$0xff]
        %v1373 = vld [vmem:[#allocation3 + $0x68] sm:$0xff]
        %v1374 = vld [vmem:[#allocation3 + $0x70] sm:$0xff]
        %v1375 = vld [vmem:[#allocation3 + $0x78] sm:$0xff]
        %v1376 = vrcp.pop %v1360
        %v1377 = vrcp.pop %v1361
        %v1378 = vrcp.pop %v1362
        %v1379 = vrcp.pop %v1363
        %v1380 = vrcp.pop %v1364
        %v1381 = vrcp.pop %v1365
        %v1382 = vrcp.pop %v1366
        %v1383 = vrcp.pop %v1367
        %v1384 = vrcp.pop %v1368
        %v1385 = vrcp.pop %v1369
        %v1386 = vrcp.pop %v1370
        %v1387 = vrcp.pop %v1371
        %v1388 = vrcp.pop %v1372
        %v1389 = vrcp.pop %v1373
        %v1390 = vrcp.pop %v1374
        %v1391 = vrcp.pop %v1375
        %v1392 = vld [vmem:[#allocation4] sm:$0xff]
        %v1393 = vld [vmem:[#allocation4 + $0x8] sm:$0xff]
        %v1394 = vld [vmem:[#allocation4 + $0x10] sm:$0xff]
        %v1395 = vld [vmem:[#allocation4 + $0x18] sm:$0xff]
        %v1396 = vld [vmem:[#allocation4 + $0x20] sm:$0xff]
        %v1397 = vld [vmem:[#allocation4 + $0x28] sm:$0xff]
        %v1398 = vld [vmem:[#allocation4 + $0x30] sm:$0xff]
        %v1399 = vld [vmem:[#allocation4 + $0x38] sm:$0xff]
        %v1400 = vld [vmem:[#allocation4 + $0x40] sm:$0xff]
        %v1401 = vld [vmem:[#allocation4 + $0x48] sm:$0xff]
        %v1402 = vld [vmem:[#allocation4 + $0x50] sm:$0xff]
        %v1403 = vld [vmem:[#allocation4 + $0x58] sm:$0xff]
        %v1404 = vld [vmem:[#allocation4 + $0x60] sm:$0xff]
        %v1405 = vld [vmem:[#allocation4 + $0x68] sm:$0xff]
        %v1406 = vld [vmem:[#allocation4 + $0x70] sm:$0xff]
        %v1407 = vld [vmem:[#allocation4 + $0x78] sm:$0xff]
        %1409 = vset.pattern.permute.xlu0 0
        %1410 = vperm.xlu0 %1409, %v1376
        %v1411 = vpop.permute.xlu0 %1410
        %1414 = vset.pattern.permute.xlu0 0
        %1415 = vperm.xlu0 %1414, %v1377
        %v1416 = vpop.permute.xlu0 %1415
        %1419 = vset.pattern.permute.xlu0 0
        %1420 = vperm.xlu0 %1419, %v1378
        %v1421 = vpop.permute.xlu0 %1420
        %1424 = vset.pattern.permute.xlu0 0
        %1425 = vperm.xlu0 %1424, %v1379
        %v1426 = vpop.permute.xlu0 %1425
        %1429 = vset.pattern.permute.xlu0 0
        %1430 = vperm.xlu0 %1429, %v1380
        %v1431 = vpop.permute.xlu0 %1430
        %1434 = vset.pattern.permute.xlu0 0
        %1435 = vperm.xlu0 %1434, %v1381
        %v1436 = vpop.permute.xlu0 %1435
        %1439 = vset.pattern.permute.xlu0 0
        %1440 = vperm.xlu0 %1439, %v1382
        %v1441 = vpop.permute.xlu0 %1440
        %1444 = vset.pattern.permute.xlu0 0
        %1445 = vperm.xlu0 %1444, %v1383
        %v1446 = vpop.permute.xlu0 %1445
        %1449 = vset.pattern.permute.xlu0 0
        %1450 = vperm.xlu0 %1449, %v1384
        %v1451 = vpop.permute.xlu0 %1450
        %1454 = vset.pattern.permute.xlu0 0
        %1455 = vperm.xlu0 %1454, %v1385
        %v1456 = vpop.permute.xlu0 %1455
        %1459 = vset.pattern.permute.xlu0 0
        %1460 = vperm.xlu0 %1459, %v1386
        %v1461 = vpop.permute.xlu0 %1460
        %1464 = vset.pattern.permute.xlu0 0
        %1465 = vperm.xlu0 %1464, %v1387
        %v1466 = vpop.permute.xlu0 %1465
        %1469 = vset.pattern.permute.xlu0 0
        %1470 = vperm.xlu0 %1469, %v1388
        %v1471 = vpop.permute.xlu0 %1470
        %1474 = vset.pattern.permute.xlu0 0
        %1475 = vperm.xlu0 %1474, %v1389
        %v1476 = vpop.permute.xlu0 %1475
        %1479 = vset.pattern.permute.xlu0 0
        %1480 = vperm.xlu0 %1479, %v1390
        %v1481 = vpop.permute.xlu0 %1480
        %1484 = vset.pattern.permute.xlu0 0
        %1485 = vperm.xlu0 %1484, %v1391
        %v1486 = vpop.permute.xlu0 %1485
        %v1488 = vmul.f32 %v1392, %v1411
        %v1489 = vmul.f32 %v1393, %v1416
        %v1490 = vmul.f32 %v1394, %v1421
        %v1491 = vmul.f32 %v1395, %v1426
        %v1492 = vmul.f32 %v1396, %v1431
        %v1493 = vmul.f32 %v1397, %v1436
        %v1494 = vmul.f32 %v1398, %v1441
        %v1495 = vmul.f32 %v1399, %v1446
        %v1496 = vmul.f32 %v1400, %v1451
        %v1497 = vmul.f32 %v1401, %v1456
        %v1498 = vmul.f32 %v1402, %v1461
        %v1499 = vmul.f32 %v1403, %v1466
        %v1500 = vmul.f32 %v1404, %v1471
        %v1501 = vmul.f32 %v1405, %v1476
        %v1502 = vmul.f32 %v1406, %v1481
        %v1503 = vmul.f32 %v1407, %v1486
        %1504 = vst.msk [vmem:[%s352] sm:$0xff] %vm472, %v1488
        %1505 = vst.msk [vmem:[%s352 + $0x8] sm:$0xff] %vm472, %v1489
        %1506 = vst.msk [vmem:[%s352 + $0x10] sm:$0xff] %vm472, %v1490
        %1507 = vst.msk [vmem:[%s352 + $0x18] sm:$0xff] %vm472, %v1491
        %1508 = vst.msk [vmem:[%s352 + $0x20] sm:$0xff] %vm472, %v1492
        %1509 = vst.msk [vmem:[%s352 + $0x28] sm:$0xff] %vm472, %v1493
        %1510 = vst.msk [vmem:[%s352 + $0x30] sm:$0xff] %vm472, %v1494
        %1511 = vst.msk [vmem:[%s352 + $0x38] sm:$0xff] %vm472, %v1495
        %1512 = vst.msk [vmem:[%s352 + $0x40] sm:$0xff] %vm472, %v1496
        %1513 = vst.msk [vmem:[%s352 + $0x48] sm:$0xff] %vm472, %v1497
        %1514 = vst.msk [vmem:[%s352 + $0x50] sm:$0xff] %vm472, %v1498
        %1515 = vst.msk [vmem:[%s352 + $0x58] sm:$0xff] %vm472, %v1499
        %1516 = vst.msk [vmem:[%s352 + $0x60] sm:$0xff] %vm472, %v1500
        %1517 = vst.msk [vmem:[%s352 + $0x68] sm:$0xff] %vm472, %v1501
        %1518 = vst.msk [vmem:[%s352 + $0x70] sm:$0xff] %vm472, %v1502
        %1519 = vst.msk [vmem:[%s352 + $0x78] sm:$0xff] %vm472, %v1503
      $region40: #{mha_forward.4} parent=31 // pred_fallthru
        _
      %s1520 = smul.u32 16, %s22
      %p1521 = scmp.lt.s32.totalorder %s20, 1
      %s1522 = scalar_select %p1521, %s20, 1
      %p1523 = scmp.lt.s32.totalorder %s21, 3
      %s1524 = scalar_select %p1523, %s21, 3
      %p1525 = scmp.lt.s32.totalorder %s1520, 31
      %s1526 = scalar_select %p1525, %s1520, 31
      %s1527 = smul.addr %s1524, 32
      %s1528 = sadd.s32 %s1526, %s1527
      %s1529 = smul.addr %s1522, 128
      %s1530 = sadd.s32 %s1528, %s1529
      %s1531 = smul.addr %s1530, 8
      %s1532 = scalar_lea.vmem %s3, %s1531
      // Predicated region
      $region41: #{mha_forward.4} parent=31 // pred_check
        %p1533 = pneg %p152
      $region42: #{mha_forward.4} parent=31 // pred_check_branch
        %1535 = sbr.rel (%p1533) target = $region44
      $region43: #{mha_forward.4} parent=31 // pred_region
        %s1536 = smul.u32 16, %s22
      $region44: #{mha_forward.4} parent=31 // pred_fallthru
        _
    $region32: #{mha_forward.4} parent=5 // pred_fallthru
      _
    %p1537 = scmp.le.s32.totalorder 2, %s9
    // Predicated region
    $region45: #{mha_forward.4} parent=5 // pred_check
      %p1538 = pneg %p1537
    $region46: #{mha_forward.4} parent=5 // pred_check_branch
      %1540 = sbr.rel (%p1538) target = $region48
    $region47: #{mha_forward.4} parent=5 // pred_region
      %s1541 = ssub.s32 %s9, 2
      // Predicated region
      $region49: #{mha_forward.4} parent=47 // pred_check
        %p1542 = pneg %p158
      $region50: #{mha_forward.4} parent=47 // pred_check_branch
        %1544 = sbr.rel (%p1542) target = $region52
      $region51: #{mha_forward.4} parent=47 // pred_region
        %s1545 = smul.u32 16, %s26
        %p1546 = scmp.lt.s32.totalorder %s24, 1
        %s1547 = scalar_select %p1546, %s24, 1
        %p1548 = scmp.lt.s32.totalorder %s25, 3
        %s1549 = scalar_select %p1548, %s25, 3
        %p1550 = scmp.lt.s32.totalorder %s1545, 31
        %s1551 = scalar_select %p1550, %s1545, 31
        %s1552 = smul.addr %s1549, 32
        %s1553 = sadd.s32 %s1551, %s1552
        %s1554 = smul.addr %s1547, 128
        %s1555 = sadd.s32 %s1553, %s1554
        %s1556 = smul.addr %s1555, 8
        %s1557 = scalar_lea.vmem %s3, %s1556
      $region52: #{mha_forward.4} parent=47 // pred_fallthru
        _
    $region48: #{mha_forward.4} parent=5 // pred_fallthru
      _
  $region6: #{mha_forward.4} parent=0 // loop_footer
    %s13 = sadd.s32 1, %s9
  $region7: #{mha_forward.4} parent=0 // loop_footer_branch
    %8 = sbr.rel target = $region3
  $region8: #{mha_forward.4} parent=0 // loop_exit
    _

// kernel: mha_forward.5
$region0: #{mha_forward.5}
  #allocation0 [shape = 'u32[]', space=smem, size = 0x4, offset = 0x4, fixed_abs, tag = 'smem constant byte address 0x4 - core index']
  #allocation1 [shape = 'u32[144,128]{1,0:T(1,128)}', space=vmem, size = 0x12000, scoped, tag = 'internal scratch']
  #allocation2 [shape = 'f32[256,128]{1,0:T(8,128)}', space=vmem, size = 0x20000, scoped, tag = 'scratch operand']
  %s0 = inlined_call_operand.vmem [shape: f32[512,128], index: 0, kind: input, shape index: {}]
  %s1 = inlined_call_operand.vmem [shape: f32[128,128], index: 1, kind: input, shape index: {}]
  %s2 = inlined_call_operand.vmem [shape: f32[1,128], index: 2, kind: input, shape index: {}]
  %s3 = inlined_call_operand.hbm [shape: f32[512,128], index: 3, kind: output, shape index: {}]
  %s4 = sld [smem:[#allocation0]]
  $region53: #{mha_forward.5} parent=0
    _
  %s6 = ssub.s32 1, %s4
  %s7 = scalar_select 0, %s6, %s4
  $region1: #{mha_forward.5} parent=0
    #allocation3 [shape = 'u8[262144]{0}', space=vmem, size = 0x40000, scoped, tag = 'output window, operand 0']
    #allocation4 [shape = 's32[2]{0}', space=sflag, size = 0x8, scoped, tag = 'scoped memory for mha_forward.5']
    %8 = vsyncpa [#allocation4], 0
    %s9 = scalar_lea.sflag [#allocation4], 1
    %10 = vsyncpa %s9, 0
    loop: start=0, step=1, limit=4
    $region2: #{mha_forward.5} parent=1 // loop_pre_header
      _
    $region3: #{mha_forward.5} parent=1 // loop_header
      %s12 = sphi 0, %s16
      %p13 = scmp.ge.s32.totalorder %s12, 4
      %s19 = sphi 0, %s38
      %s20 = sphi 0, %s34
      %s21 = sphi 0, %s30
      %s22 = sphi 0, %s19
      %s23 = sphi 0, %s20
      %s24 = sphi 0, %s21
      %s25 = sphi 0, %s22
      %s26 = sphi 0, %s23
      %s27 = sphi 0, %s24
      %s43 = sphi 0, %s45
      %s46 = sphi 0, %s43
      %s47 = sphi 0, %s46
      %s63 = sphi 0, %s47
      %s71 = sphi 0, %s73
      %s74 = sphi 0, %s71
      %s75 = sphi 0, %s74
      %s91 = sphi 0, %s75
      %s97 = sphi 0, %s99
      %s100 = sphi 0, %s97
      %s101 = sphi 0, %s100
      %s117 = sphi 0, %s101
      %s125 = sphi 0, %s127
      %s128 = sphi 0, %s125
      %s129 = sphi 0, %s128
      %s145 = sphi 0, %s129
    $region4: #{mha_forward.5} parent=1 // loop_header_branch
      %15 = sbr.rel (%p13) target = $region8
    $region5: #{mha_forward.5} parent=1 // loop_body
      %s17 = ssub.s32 %s12, 1
      %s18 = ssub.s32 %s12, 2
      %s28 = sadd.s32 1, %s21
      %p29 = scmp.ge.s32.totalorder %s28, 1
      %s30 = scalar_select %p29, 0, %s28
      %s31 = sadd.s32 1, %s20
      %s32 = scalar_select %p29, %s31, %s20
      %p33 = scmp.ge.s32.totalorder %s32, 1
      %s34 = scalar_select %p33, 0, %s32
      %s35 = sadd.s32 1, %s19
      %s36 = scalar_select %p33, %s35, %s19
      %p37 = scmp.ge.s32.totalorder %s36, 2
      %s38 = scalar_select %p37, 0, %s36
      %s39 = ssub.s32 %s19, %s38
      %s40 = ssub.s32 %s21, %s30
      %s41 = sor.u32 %s39, %s40
      %p42 = scmp.eq.s32.totalorder %s41, 0
      %s44 = sadd.s32 %s43, 1
      %s45 = scalar_select %p42, %s43, %s44
      %p48 = pneg %p42
      %p49 = scmp.eq.s32.totalorder %s12, 1
      %p50 = por %p48, %p49
      %p51 = scmp.ne.s32.totalorder %s43, %s46
      %p52 = scmp.eq.s32.totalorder %s12, 0
      %p53 = por %p51, %p52
      %p54 = scmp.ne.s32.totalorder %s43, %s46
      %p55 = scmp.eq.s32.totalorder %s17, 1
      %p56 = por %p54, %p55
      %p57 = scmp.ne.s32.totalorder %s46, %s47
      %p58 = scmp.eq.s32.totalorder %s17, 0
      %p59 = por %p57, %p58
      %p60 = scmp.ne.s32.totalorder %s46, %s47
      %p61 = scmp.eq.s32.totalorder %s18, 1
      %p62 = por %p60, %p61
      %p64 = scmp.ne.s32.totalorder %s47, %s63
      %p65 = scmp.eq.s32.totalorder %s18, 0
      %p66 = por %p64, %p65
      %s67 = ssub.s32 %s21, %s30
      %s68 = ssub.s32 %s20, %s34
      %s69 = sor.u32 %s67, %s68
      %p70 = scmp.eq.s32.totalorder %s69, 0
      %s72 = sadd.s32 %s71, 1
      %s73 = scalar_select %p70, %s71, %s72
      %p76 = pneg %p70
      %p77 = scmp.eq.s32.totalorder %s12, 1
      %p78 = por %p76, %p77
      %p79 = scmp.ne.s32.totalorder %s71, %s74
      %p80 = scmp.eq.s32.totalorder %s12, 0
      %p81 = por %p79, %p80
      %p82 = scmp.ne.s32.totalorder %s71, %s74
      %p83 = scmp.eq.s32.totalorder %s17, 1
      %p84 = por %p82, %p83
      %p85 = scmp.ne.s32.totalorder %s74, %s75
      %p86 = scmp.eq.s32.totalorder %s17, 0
      %p87 = por %p85, %p86
      %p88 = scmp.ne.s32.totalorder %s74, %s75
      %p89 = scmp.eq.s32.totalorder %s18, 1
      %p90 = por %p88, %p89
      %p92 = scmp.ne.s32.totalorder %s75, %s91
      %p93 = scmp.eq.s32.totalorder %s18, 0
      %p94 = por %p92, %p93
      %s95 = ssub.s32 %s20, %s34
      %p96 = scmp.eq.s32.totalorder %s95, 0
      %s98 = sadd.s32 %s97, 1
      %s99 = scalar_select %p96, %s97, %s98
      %p102 = pneg %p96
      %p103 = scmp.eq.s32.totalorder %s12, 1
      %p104 = por %p102, %p103
      %p105 = scmp.ne.s32.totalorder %s97, %s100
      %p106 = scmp.eq.s32.totalorder %s12, 0
      %p107 = por %p105, %p106
      %p108 = scmp.ne.s32.totalorder %s97, %s100
      %p109 = scmp.eq.s32.totalorder %s17, 1
      %p110 = por %p108, %p109
      %p111 = scmp.ne.s32.totalorder %s100, %s101
      %p112 = scmp.eq.s32.totalorder %s17, 0
      %p113 = por %p111, %p112
      %p114 = scmp.ne.s32.totalorder %s100, %s101
      %p115 = scmp.eq.s32.totalorder %s18, 1
      %p116 = por %p114, %p115
      %p118 = scmp.ne.s32.totalorder %s101, %s117
      %p119 = scmp.eq.s32.totalorder %s18, 0
      %p120 = por %p118, %p119
      %s121 = ssub.s32 %s19, %s38
      %s122 = ssub.s32 %s20, %s34
      %s123 = sor.u32 %s121, %s122
      %p124 = scmp.eq.s32.totalorder %s123, 0
      %s126 = sadd.s32 %s125, 1
      %s127 = scalar_select %p124, %s125, %s126
      %p130 = pneg %p124
      %p131 = scmp.eq.s32.totalorder %s12, 1
      %p132 = por %p130, %p131
      %p133 = scmp.ne.s32.totalorder %s125, %s128
      %p134 = scmp.eq.s32.totalorder %s12, 0
      %p135 = por %p133, %p134
      %p136 = scmp.ne.s32.totalorder %s125, %s128
      %p137 = scmp.eq.s32.totalorder %s17, 1
      %p138 = por %p136, %p137
      %p139 = scmp.ne.s32.totalorder %s128, %s129
      %p140 = scmp.eq.s32.totalorder %s17, 0
      %p141 = por %p139, %p140
      %p142 = scmp.ne.s32.totalorder %s128, %s129
      %p143 = scmp.eq.s32.totalorder %s18, 1
      %p144 = por %p142, %p143
      %p146 = scmp.ne.s32.totalorder %s129, %s145
      %p147 = scmp.eq.s32.totalorder %s18, 0
      %p148 = por %p146, %p147
      %p149 = scmp.le.s32.totalorder 1, %s12
      %p150 = scmp.lt.s32.totalorder %s12, 3
      %p151 = pnand %p149, %p150
      %p152 = pneg %p151
      // Predicated region
      $region9: #{mha_forward.5} parent=5 // pred_check
        _
      $region10: #{mha_forward.5} parent=5 // pred_check_branch
        %154 = sbr.rel (%p151) target = $region12
      $region11: #{mha_forward.5} parent=5 // pred_region
        %s155 = ssub.s32 %s12, 1
        // Predicated region
        $region13: #{mha_forward.5} parent=11 // pred_check
          %p156 = pneg %p87
        $region14: #{mha_forward.5} parent=11 // pred_check_branch
          %158 = sbr.rel (%p156) target = $region16
        $region15: #{mha_forward.5} parent=11 // pred_region
          %s159 = smul.u32 16, %s24
          %p160 = scmp.lt.s32.totalorder %s159, 15
          %s161 = scalar_select %p160, %s159, 15
          %p162 = scmp.lt.s32.totalorder %s23, 0
          %s163 = scalar_select %p162, %s23, 0
          %s164 = sadd.s32 %s163, %s161
          %s165 = smul.addr %s164, 8
          %s166 = scalar_lea.vmem %s1, %s165
          %s167 = smul.u32 16, %s24
        $region16: #{mha_forward.5} parent=11 // pred_fallthru
          _
        // Predicated region
        $region17: #{mha_forward.5} parent=11 // pred_check
          %p168 = pneg %p113
        $region18: #{mha_forward.5} parent=11 // pred_check_branch
          %170 = sbr.rel (%p168) target = $region20
        $region19: #{mha_forward.5} parent=11 // pred_region
          %p171 = scmp.lt.s32.totalorder %s23, 0
          %s172 = scalar_select %p171, %s23, 0
          %s173 = scalar_lea.vmem %s2, %s172
        $region20: #{mha_forward.5} parent=11 // pred_fallthru
          _
      $region12: #{mha_forward.5} parent=5 // pred_fallthru
        _
      %p174 = scmp.lt.s32.totalorder %s12, 2
      // Predicated region
      $region21: #{mha_forward.5} parent=5 // pred_check
        %p175 = pneg %p174
      $region22: #{mha_forward.5} parent=5 // pred_check_branch
        %177 = sbr.rel (%p175) target = $region24
      $region23: #{mha_forward.5} parent=5 // pred_region
        // Predicated region
        $region25: #{mha_forward.5} parent=23 // pred_check
          %p178 = pneg %p53
        $region26: #{mha_forward.5} parent=23 // pred_check_branch
          %180 = sbr.rel (%p178) target = $region28
        $region27: #{mha_forward.5} parent=23 // pred_region
          %s181 = smul.u32 32, %s19
          %p182 = scmp.lt.s32.totalorder %s181, 63
          %s183 = scalar_select %p182, %s181, 63
          %p184 = scmp.lt.s32.totalorder %s21, 0
          %s185 = scalar_select %p184, %s21, 0
          %s186 = sadd.s32 %s185, %s183
          %s187 = smul.addr %s186, 8
          %s188 = scalar_lea.vmem %s0, %s187
          %s189 = smul.u32 32, %s19
        $region28: #{mha_forward.5} parent=23 // pred_fallthru
          _
      $region24: #{mha_forward.5} parent=5 // pred_fallthru
        _
      %p190 = scmp.le.s32.totalorder 1, %s12
      %p191 = scmp.lt.s32.totalorder %s12, 3
      %p192 = pnand %p190, %p191
      %p193 = pneg %p192
      // Predicated region
      $region29: #{mha_forward.5} parent=5 // pred_check
        _
      $region30: #{mha_forward.5} parent=5 // pred_check_branch
        %195 = sbr.rel (%p192) target = $region32
      $region31: #{mha_forward.5} parent=5 // pred_region
        %s196 = ssub.s32 %s12, 1
        %s197 = smul.u32 32, %s22
        %p198 = scmp.lt.s32.totalorder %s197, 63
        %s199 = scalar_select %p198, %s197, 63
        %p200 = scmp.lt.s32.totalorder %s24, 0
        %s201 = scalar_select %p200, %s24, 0
        %s202 = sadd.s32 %s201, %s199
        %s203 = smul.addr %s202, 8
        %s204 = scalar_lea.vmem %s0, %s203
        %p205 = pneg %p59
        %p206 = pneg %p56
        %s207 = smul.u32 16, %s24
        %p208 = scmp.lt.s32.totalorder %s207, 15
        %s209 = scalar_select %p208, %s207, 15
        %p210 = scmp.lt.s32.totalorder %s23, 0
        %s211 = scalar_select %p210, %s23, 0
        %s212 = sadd.s32 %s211, %s209
        %s213 = smul.addr %s212, 8
        %s214 = scalar_lea.vmem %s1, %s213
        %p215 = pneg %p87
        %p216 = pneg %p84
        %p217 = scmp.lt.s32.totalorder %s23, 0
        %s218 = scalar_select %p217, %s23, 0
        %s219 = scalar_lea.vmem %s2, %s218
        %p220 = pneg %p113
        %p221 = pneg %p110
        %p222 = pneg %p141
        %p223 = pneg %p138
        %s224 = sand.u32 %s128, 1
        %s225 = scalar_lea.sflag [#allocation4], %s224
        %s226 = sand.u32 %s128, 1
        %s227 = smul.addr %s226, 256
        %s228 = scalar_lea.vmem [#allocation3], %s227
        %s229 = smul.u32 32, %s22
        %p230 = scmp.lt.s32.totalorder %s229, 63
        %s231 = scalar_select %p230, %s229, 63
        %p232 = scmp.lt.s32.totalorder %s24, 0
        %s233 = scalar_select %p232, %s24, 0
        %s234 = sadd.s32 %s233, %s231
        %s235 = smul.addr %s234, 8
        %s236 = scalar_lea.vmem %s0, %s235
        %s237 = smul.u32 32, %s22
        %s238 = smul.u32 16, %s24
        %p239 = scmp.lt.s32.totalorder %s238, 15
        %s240 = scalar_select %p239, %s238, 15
        %p241 = scmp.lt.s32.totalorder %s23, 0
        %s242 = scalar_select %p241, %s23, 0
        %s243 = sadd.s32 %s242, %s240
        %s244 = smul.addr %s243, 8
        %s245 = scalar_lea.vmem %s1, %s244
        %s246 = smul.u32 16, %s24
        %p247 = scmp.lt.s32.totalorder %s23, 0
        %s248 = scalar_select %p247, %s23, 0
        %s249 = scalar_lea.vmem %s2, %s248
        %s250 = smul.u32 32, %s22
        %p251 = scmp.eq.s32.totalorder %s24, 0
        // Predicated region
        $region33: #{mha_forward.5} parent=31 // pred_check
          %p252 = pneg %p251
        $region34: #{mha_forward.5} parent=31 // pred_check_branch
          %254 = sbr.rel (%p252) target = $region36
        $region35: #{mha_forward.5} parent=31 // pred_region
          %255 = vst [vmem:[#allocation2] sm:$0xff] 0.0
          %256 = vst [vmem:[#allocation2 + $0x8] sm:$0xff] 0.0
          %257 = vst [vmem:[#allocation2 + $0x10] sm:$0xff] 0.0
          %258 = vst [vmem:[#allocation2 + $0x18] sm:$0xff] 0.0
          %259 = vst [vmem:[#allocation2 + $0x20] sm:$0xff] 0.0
          %260 = vst [vmem:[#allocation2 + $0x28] sm:$0xff] 0.0
          %261 = vst [vmem:[#allocation2 + $0x30] sm:$0xff] 0.0
          %262 = vst [vmem:[#allocation2 + $0x38] sm:$0xff] 0.0
          %263 = vst [vmem:[#allocation2 + $0x40] sm:$0xff] 0.0
          %264 = vst [vmem:[#allocation2 + $0x48] sm:$0xff] 0.0
          %265 = vst [vmem:[#allocation2 + $0x50] sm:$0xff] 0.0
          %266 = vst [vmem:[#allocation2 + $0x58] sm:$0xff] 0.0
          %267 = vst [vmem:[#allocation2 + $0x60] sm:$0xff] 0.0
          %268 = vst [vmem:[#allocation2 + $0x68] sm:$0xff] 0.0
          %269 = vst [vmem:[#allocation2 + $0x70] sm:$0xff] 0.0
          %270 = vst [vmem:[#allocation2 + $0x78] sm:$0xff] 0.0
          %271 = vst [vmem:[#allocation2 + $0x80] sm:$0xff] 0.0
          %272 = vst [vmem:[#allocation2 + $0x88] sm:$0xff] 0.0
          %273 = vst [vmem:[#allocation2 + $0x90] sm:$0xff] 0.0
          %274 = vst [vmem:[#allocation2 + $0x98] sm:$0xff] 0.0
          %275 = vst [vmem:[#allocation2 + $0xa0] sm:$0xff] 0.0
          %276 = vst [vmem:[#allocation2 + $0xa8] sm:$0xff] 0.0
          %277 = vst [vmem:[#allocation2 + $0xb0] sm:$0xff] 0.0
          %278 = vst [vmem:[#allocation2 + $0xb8] sm:$0xff] 0.0
          %279 = vst [vmem:[#allocation2 + $0xc0] sm:$0xff] 0.0
          %280 = vst [vmem:[#allocation2 + $0xc8] sm:$0xff] 0.0
          %281 = vst [vmem:[#allocation2 + $0xd0] sm:$0xff] 0.0
          %282 = vst [vmem:[#allocation2 + $0xd8] sm:$0xff] 0.0
          %283 = vst [vmem:[#allocation2 + $0xe0] sm:$0xff] 0.0
          %284 = vst [vmem:[#allocation2 + $0xe8] sm:$0xff] 0.0
          %285 = vst [vmem:[#allocation2 + $0xf0] sm:$0xff] 0.0
          %286 = vst [vmem:[#allocation2 + $0xf8] sm:$0xff] 0.0
        $region36: #{mha_forward.5} parent=31 // pred_fallthru
          _
        %v287 = vld [vmem:[#allocation2] sm:$0xff]
        %v288 = vld [vmem:[#allocation2 + $0x8] sm:$0xff]
        %v289 = vld [vmem:[#allocation2 + $0x10] sm:$0xff]
        %v290 = vld [vmem:[#allocation2 + $0x18] sm:$0xff]
        %v291 = vld [vmem:[#allocation2 + $0x20] sm:$0xff]
        %v292 = vld [vmem:[#allocation2 + $0x28] sm:$0xff]
        %v293 = vld [vmem:[#allocation2 + $0x30] sm:$0xff]
        %v294 = vld [vmem:[#allocation2 + $0x38] sm:$0xff]
        %v295 = vld [vmem:[#allocation2 + $0x40] sm:$0xff]
        %v296 = vld [vmem:[#allocation2 + $0x48] sm:$0xff]
        %v297 = vld [vmem:[#allocation2 + $0x50] sm:$0xff]
        %v298 = vld [vmem:[#allocation2 + $0x58] sm:$0xff]
        %v299 = vld [vmem:[#allocation2 + $0x60] sm:$0xff]
        %v300 = vld [vmem:[#allocation2 + $0x68] sm:$0xff]
        %v301 = vld [vmem:[#allocation2 + $0x70] sm:$0xff]
        %v302 = vld [vmem:[#allocation2 + $0x78] sm:$0xff]
        %v303 = vld [vmem:[#allocation2 + $0x80] sm:$0xff]
        %v304 = vld [vmem:[#allocation2 + $0x88] sm:$0xff]
        %v305 = vld [vmem:[#allocation2 + $0x90] sm:$0xff]
        %v306 = vld [vmem:[#allocation2 + $0x98] sm:$0xff]
        %v307 = vld [vmem:[#allocation2 + $0xa0] sm:$0xff]
        %v308 = vld [vmem:[#allocation2 + $0xa8] sm:$0xff]
        %v309 = vld [vmem:[#allocation2 + $0xb0] sm:$0xff]
        %v310 = vld [vmem:[#allocation2 + $0xb8] sm:$0xff]
        %v311 = vld [vmem:[#allocation2 + $0xc0] sm:$0xff]
        %v312 = vld [vmem:[#allocation2 + $0xc8] sm:$0xff]
        %v313 = vld [vmem:[#allocation2 + $0xd0] sm:$0xff]
        %v314 = vld [vmem:[#allocation2 + $0xd8] sm:$0xff]
        %v315 = vld [vmem:[#allocation2 + $0xe0] sm:$0xff]
        %v316 = vld [vmem:[#allocation2 + $0xe8] sm:$0xff]
        %v317 = vld [vmem:[#allocation2 + $0xf0] sm:$0xff]
        %v318 = vld [vmem:[#allocation2 + $0xf8] sm:$0xff]
        %v319 = vld [vmem:[%s236] sm:$0xff]
        %v320 = vld [vmem:[%s236 + $0x8] sm:$0xff]
        %v321 = vld [vmem:[%s236 + $0x10] sm:$0xff]
        %v322 = vld [vmem:[%s236 + $0x18] sm:$0xff]
        %v323 = vld [vmem:[%s236 + $0x20] sm:$0xff]
        %v324 = vld [vmem:[%s236 + $0x28] sm:$0xff]
        %v325 = vld [vmem:[%s236 + $0x30] sm:$0xff]
        %v326 = vld [vmem:[%s236 + $0x38] sm:$0xff]
        %v327 = vld [vmem:[%s236 + $0x40] sm:$0xff]
        %v328 = vld [vmem:[%s236 + $0x48] sm:$0xff]
        %v329 = vld [vmem:[%s236 + $0x50] sm:$0xff]
        %v330 = vld [vmem:[%s236 + $0x58] sm:$0xff]
        %v331 = vld [vmem:[%s236 + $0x60] sm:$0xff]
        %v332 = vld [vmem:[%s236 + $0x68] sm:$0xff]
        %v333 = vld [vmem:[%s236 + $0x70] sm:$0xff]
        %v334 = vld [vmem:[%s236 + $0x78] sm:$0xff]
        %v335 = vld [vmem:[%s236 + $0x80] sm:$0xff]
        %v336 = vld [vmem:[%s236 + $0x88] sm:$0xff]
        %v337 = vld [vmem:[%s236 + $0x90] sm:$0xff]
        %v338 = vld [vmem:[%s236 + $0x98] sm:$0xff]
        %v339 = vld [vmem:[%s236 + $0xa0] sm:$0xff]
        %v340 = vld [vmem:[%s236 + $0xa8] sm:$0xff]
        %v341 = vld [vmem:[%s236 + $0xb0] sm:$0xff]
        %v342 = vld [vmem:[%s236 + $0xb8] sm:$0xff]
        %v343 = vld [vmem:[%s236 + $0xc0] sm:$0xff]
        %v344 = vld [vmem:[%s236 + $0xc8] sm:$0xff]
        %v345 = vld [vmem:[%s236 + $0xd0] sm:$0xff]
        %v346 = vld [vmem:[%s236 + $0xd8] sm:$0xff]
        %v347 = vld [vmem:[%s236 + $0xe0] sm:$0xff]
        %v348 = vld [vmem:[%s236 + $0xe8] sm:$0xff]
        %v349 = vld [vmem:[%s236 + $0xf0] sm:$0xff]
        %v350 = vld [vmem:[%s236 + $0xf8] sm:$0xff]
        %v351 = vld [vmem:[%s245] sm:$0xff]
        %v352 = vld [vmem:[%s245 + $0x8] sm:$0xff]
        %v353 = vld [vmem:[%s245 + $0x10] sm:$0xff]
        %v354 = vld [vmem:[%s245 + $0x18] sm:$0xff]
        %v355 = vld [vmem:[%s245 + $0x20] sm:$0xff]
        %v356 = vld [vmem:[%s245 + $0x28] sm:$0xff]
        %v357 = vld [vmem:[%s245 + $0x30] sm:$0xff]
        %v358 = vld [vmem:[%s245 + $0x38] sm:$0xff]
        %v359 = vld [vmem:[%s245 + $0x40] sm:$0xff]
        %v360 = vld [vmem:[%s245 + $0x48] sm:$0xff]
        %v361 = vld [vmem:[%s245 + $0x50] sm:$0xff]
        %v362 = vld [vmem:[%s245 + $0x58] sm:$0xff]
        %v363 = vld [vmem:[%s245 + $0x60] sm:$0xff]
        %v364 = vld [vmem:[%s245 + $0x68] sm:$0xff]
        %v365 = vld [vmem:[%s245 + $0x70] sm:$0xff]
        %v366 = vld [vmem:[%s245 + $0x78] sm:$0xff]
        %367 = vmatprep.subr.mxu0 0.0
        %368 = vmatpush1.msra.mxu0 %v366
        %369 = vmatprep.subr.mxu0 0.0
        %370 = vmatpush1.msra.mxu0 %v365
        %371 = vmatprep.subr.mxu0 0.0
        %372 = vmatpush1.msra.mxu0 %v364
        %373 = vmatprep.subr.mxu0 0.0
        %374 = vmatpush1.msra.mxu0 %v363
        %375 = vmatprep.subr.mxu0 0.0
        %376 = vmatpush1.msra.mxu0 %v362
        %377 = vmatprep.subr.mxu0 0.0
        %378 = vmatpush1.msra.mxu0 %v361
        %379 = vmatprep.subr.mxu0 0.0
        %380 = vmatpush1.msra.mxu0 %v360
        %381 = vmatprep.subr.mxu0 0.0
        %382 = vmatpush1.msra.mxu0 %v359
        %383 = vmatprep.subr.mxu0 0.0
        %384 = vmatpush1.msra.mxu0 %v358
        %385 = vmatprep.subr.mxu0 0.0
        %386 = vmatpush1.msra.mxu0 %v357
        %387 = vmatprep.subr.mxu0 0.0
        %388 = vmatpush1.msra.mxu0 %v356
        %389 = vmatprep.subr.mxu0 0.0
        %390 = vmatpush1.msra.mxu0 %v355
        %391 = vmatprep.subr.mxu0 0.0
        %392 = vmatpush1.msra.mxu0 %v354
        %393 = vmatprep.subr.mxu0 0.0
        %394 = vmatpush1.msra.mxu0 %v353
        %395 = vmatprep.subr.mxu0 0.0
        %396 = vmatpush1.msra.mxu0 %v352
        %397 = vmatprep.subr.mxu0 0.0
        %398 = vmatpush1.msra.mxu0 %v351
        %399 = vmatprep.subr.mxu0 0.0
        %400 = vmatpush2.msra.mxu0 0.0
        %401 = vmatprep.subr.mxu0 0.0
        %402 = vmatpush2.msra.mxu0 0.0
        %403 = vmatprep.subr.mxu0 0.0
        %404 = vmatpush2.msra.mxu0 0.0
        %405 = vmatprep.subr.mxu0 0.0
        %406 = vmatpush2.msra.mxu0 0.0
        %407 = vmatprep.subr.mxu0 0.0
        %408 = vmatpush2.msra.mxu0 0.0
        %409 = vmatprep.subr.mxu0 0.0
        %410 = vmatpush2.msra.mxu0 0.0
        %411 = vmatprep.subr.mxu0 0.0
        %412 = vmatpush2.msra.mxu0 0.0
        %413 = vmatprep.subr.mxu0 0.0
        %414 = vmatpush2.msra.mxu0 0.0
        %415 = vmatprep.subr.mxu0 0.0
        %416 = vmatpush2.msra.mxu0 0.0
        %417 = vmatprep.subr.mxu0 0.0
        %418 = vmatpush2.msra.mxu0 0.0
        %419 = vmatprep.subr.mxu0 0.0
        %420 = vmatpush2.msra.mxu0 0.0
        %421 = vmatprep.subr.mxu0 0.0
        %422 = vmatpush2.msra.mxu0 0.0
        %423 = vmatprep.subr.mxu0 0.0
        %424 = vmatpush2.msra.mxu0 0.0
        %425 = vmatprep.subr.mxu0 0.0
        %426 = vmatpush2.msra.mxu0 0.0
        %427 = vmatprep.subr.mxu0 0.0
        %428 = vmatpush2.msra.mxu0 0.0
        %429 = vmatprep.subr.mxu0 0.0
        %430 = vmatpush2.msra.mxu0 0.0
        %431 = vmatprep.mubr.f32.mxu0 0.0
        %432 = vmatmul.mubr.f32.gmra.mxu0 %v319
        %v433 = vpop.f32.mrf.mxu0
        %v434 = vadd.f32 0.0, %v433
        %v435 = vpop.f32.mrf.mxu0
        %436 = vmatprep.mubr.f32.mxu0 0.0
        %437 = vmatmul.mubr.f32.gmra.mxu0 %v320
        %v438 = vpop.f32.mrf.mxu0
        %v439 = vadd.f32 0.0, %v438
        %v440 = vpop.f32.mrf.mxu0
        %441 = vmatprep.mubr.f32.mxu0 0.0
        %442 = vmatmul.mubr.f32.gmra.mxu0 %v321
        %v443 = vpop.f32.mrf.mxu0
        %v444 = vadd.f32 0.0, %v443
        %v445 = vpop.f32.mrf.mxu0
        %446 = vmatprep.mubr.f32.mxu0 0.0
        %447 = vmatmul.mubr.f32.gmra.mxu0 %v322
        %v448 = vpop.f32.mrf.mxu0
        %v449 = vadd.f32 0.0, %v448
        %v450 = vpop.f32.mrf.mxu0
        %451 = vmatprep.mubr.f32.mxu0 0.0
        %452 = vmatmul.mubr.f32.gmra.mxu0 %v323
        %v453 = vpop.f32.mrf.mxu0
        %v454 = vadd.f32 0.0, %v453
        %v455 = vpop.f32.mrf.mxu0
        %456 = vmatprep.mubr.f32.mxu0 0.0
        %457 = vmatmul.mubr.f32.gmra.mxu0 %v324
        %v458 = vpop.f32.mrf.mxu0
        %v459 = vadd.f32 0.0, %v458
        %v460 = vpop.f32.mrf.mxu0
        %461 = vmatprep.mubr.f32.mxu0 0.0
        %462 = vmatmul.mubr.f32.gmra.mxu0 %v325
        %v463 = vpop.f32.mrf.mxu0
        %v464 = vadd.f32 0.0, %v463
        %v465 = vpop.f32.mrf.mxu0
        %466 = vmatprep.mubr.f32.mxu0 0.0
        %467 = vmatmul.mubr.f32.gmra.mxu0 %v326
        %v468 = vpop.f32.mrf.mxu0
        %v469 = vadd.f32 0.0, %v468
        %v470 = vpop.f32.mrf.mxu0
        %471 = vmatprep.mubr.f32.mxu0 0.0
        %472 = vmatmul.mubr.f32.gmra.mxu0 %v327
        %v473 = vpop.f32.mrf.mxu0
        %v474 = vadd.f32 0.0, %v473
        %v475 = vpop.f32.mrf.mxu0
        %476 = vmatprep.mubr.f32.mxu0 0.0
        %477 = vmatmul.mubr.f32.gmra.mxu0 %v328
        %v478 = vpop.f32.mrf.mxu0
        %v479 = vadd.f32 0.0, %v478
        %v480 = vpop.f32.mrf.mxu0
        %481 = vmatprep.mubr.f32.mxu0 0.0
        %482 = vmatmul.mubr.f32.gmra.mxu0 %v329
        %v483 = vpop.f32.mrf.mxu0
        %v484 = vadd.f32 0.0, %v483
        %v485 = vpop.f32.mrf.mxu0
        %486 = vmatprep.mubr.f32.mxu0 0.0
        %487 = vmatmul.mubr.f32.gmra.mxu0 %v330
        %v488 = vpop.f32.mrf.mxu0
        %v489 = vadd.f32 0.0, %v488
        %v490 = vpop.f32.mrf.mxu0
        %491 = vmatprep.mubr.f32.mxu0 0.0
        %492 = vmatmul.mubr.f32.gmra.mxu0 %v331
        %v493 = vpop.f32.mrf.mxu0
        %v494 = vadd.f32 0.0, %v493
        %v495 = vpop.f32.mrf.mxu0
        %496 = vmatprep.mubr.f32.mxu0 0.0
        %497 = vmatmul.mubr.f32.gmra.mxu0 %v332
        %v498 = vpop.f32.mrf.mxu0
        %v499 = vadd.f32 0.0, %v498
        %v500 = vpop.f32.mrf.mxu0
        %501 = vmatprep.mubr.f32.mxu0 0.0
        %502 = vmatmul.mubr.f32.gmra.mxu0 %v333
        %v503 = vpop.f32.mrf.mxu0
        %v504 = vadd.f32 0.0, %v503
        %v505 = vpop.f32.mrf.mxu0
        %506 = vmatprep.mubr.f32.mxu0 0.0
        %507 = vmatmul.mubr.f32.gmra.mxu0 %v334
        %v508 = vpop.f32.mrf.mxu0
        %v509 = vadd.f32 0.0, %v508
        %v510 = vpop.f32.mrf.mxu0
        %511 = vmatprep.mubr.f32.mxu0 0.0
        %512 = vmatmul.mubr.f32.gmra.mxu0 %v335
        %v513 = vpop.f32.mrf.mxu0
        %v514 = vadd.f32 0.0, %v513
        %v515 = vpop.f32.mrf.mxu0
        %516 = vmatprep.mubr.f32.mxu0 0.0
        %517 = vmatmul.mubr.f32.gmra.mxu0 %v336
        %v518 = vpop.f32.mrf.mxu0
        %v519 = vadd.f32 0.0, %v518
        %v520 = vpop.f32.mrf.mxu0
        %521 = vmatprep.mubr.f32.mxu0 0.0
        %522 = vmatmul.mubr.f32.gmra.mxu0 %v337
        %v523 = vpop.f32.mrf.mxu0
        %v524 = vadd.f32 0.0, %v523
        %v525 = vpop.f32.mrf.mxu0
        %526 = vmatprep.mubr.f32.mxu0 0.0
        %527 = vmatmul.mubr.f32.gmra.mxu0 %v338
        %v528 = vpop.f32.mrf.mxu0
        %v529 = vadd.f32 0.0, %v528
        %v530 = vpop.f32.mrf.mxu0
        %531 = vmatprep.mubr.f32.mxu0 0.0
        %532 = vmatmul.mubr.f32.gmra.mxu0 %v339
        %v533 = vpop.f32.mrf.mxu0
        %v534 = vadd.f32 0.0, %v533
        %v535 = vpop.f32.mrf.mxu0
        %536 = vmatprep.mubr.f32.mxu0 0.0
        %537 = vmatmul.mubr.f32.gmra.mxu0 %v340
        %v538 = vpop.f32.mrf.mxu0
        %v539 = vadd.f32 0.0, %v538
        %v540 = vpop.f32.mrf.mxu0
        %541 = vmatprep.mubr.f32.mxu0 0.0
        %542 = vmatmul.mubr.f32.gmra.mxu0 %v341
        %v543 = vpop.f32.mrf.mxu0
        %v544 = vadd.f32 0.0, %v543
        %v545 = vpop.f32.mrf.mxu0
        %546 = vmatprep.mubr.f32.mxu0 0.0
        %547 = vmatmul.mubr.f32.gmra.mxu0 %v342
        %v548 = vpop.f32.mrf.mxu0
        %v549 = vadd.f32 0.0, %v548
        %v550 = vpop.f32.mrf.mxu0
        %551 = vmatprep.mubr.f32.mxu0 0.0
        %552 = vmatmul.mubr.f32.gmra.mxu0 %v343
        %v553 = vpop.f32.mrf.mxu0
        %v554 = vadd.f32 0.0, %v553
        %v555 = vpop.f32.mrf.mxu0
        %556 = vmatprep.mubr.f32.mxu0 0.0
        %557 = vmatmul.mubr.f32.gmra.mxu0 %v344
        %v558 = vpop.f32.mrf.mxu0
        %v559 = vadd.f32 0.0, %v558
        %v560 = vpop.f32.mrf.mxu0
        %561 = vmatprep.mubr.f32.mxu0 0.0
        %562 = vmatmul.mubr.f32.gmra.mxu0 %v345
        %v563 = vpop.f32.mrf.mxu0
        %v564 = vadd.f32 0.0, %v563
        %v565 = vpop.f32.mrf.mxu0
        %566 = vmatprep.mubr.f32.mxu0 0.0
        %567 = vmatmul.mubr.f32.gmra.mxu0 %v346
        %v568 = vpop.f32.mrf.mxu0
        %v569 = vadd.f32 0.0, %v568
        %v570 = vpop.f32.mrf.mxu0
        %571 = vmatprep.mubr.f32.mxu0 0.0
        %572 = vmatmul.mubr.f32.gmra.mxu0 %v347
        %v573 = vpop.f32.mrf.mxu0
        %v574 = vadd.f32 0.0, %v573
        %v575 = vpop.f32.mrf.mxu0
        %576 = vmatprep.mubr.f32.mxu0 0.0
        %577 = vmatmul.mubr.f32.gmra.mxu0 %v348
        %v578 = vpop.f32.mrf.mxu0
        %v579 = vadd.f32 0.0, %v578
        %v580 = vpop.f32.mrf.mxu0
        %581 = vmatprep.mubr.f32.mxu0 0.0
        %582 = vmatmul.mubr.f32.gmra.mxu0 %v349
        %v583 = vpop.f32.mrf.mxu0
        %v584 = vadd.f32 0.0, %v583
        %v585 = vpop.f32.mrf.mxu0
        %586 = vmatprep.mubr.f32.mxu0 0.0
        %587 = vmatmul.mubr.f32.gmra.mxu0 %v350
        %v588 = vpop.f32.mrf.mxu0
        %v589 = vadd.f32 0.0, %v588
        %v590 = vpop.f32.mrf.mxu0
        %591 = vdwg.mxu0
        %v592 = vadd.f32 %v287, %v434
        %v593 = vadd.f32 %v288, %v439
        %v594 = vadd.f32 %v289, %v444
        %v595 = vadd.f32 %v290, %v449
        %v596 = vadd.f32 %v291, %v454
        %v597 = vadd.f32 %v292, %v459
        %v598 = vadd.f32 %v293, %v464
        %v599 = vadd.f32 %v294, %v469
        %v600 = vadd.f32 %v295, %v474
        %v601 = vadd.f32 %v296, %v479
        %v602 = vadd.f32 %v297, %v484
        %v603 = vadd.f32 %v298, %v489
        %v604 = vadd.f32 %v299, %v494
        %v605 = vadd.f32 %v300, %v499
        %v606 = vadd.f32 %v301, %v504
        %v607 = vadd.f32 %v302, %v509
        %v608 = vadd.f32 %v303, %v514
        %v609 = vadd.f32 %v304, %v519
        %v610 = vadd.f32 %v305, %v524
        %v611 = vadd.f32 %v306, %v529
        %v612 = vadd.f32 %v307, %v534
        %v613 = vadd.f32 %v308, %v539
        %v614 = vadd.f32 %v309, %v544
        %v615 = vadd.f32 %v310, %v549
        %v616 = vadd.f32 %v311, %v554
        %v617 = vadd.f32 %v312, %v559
        %v618 = vadd.f32 %v313, %v564
        %v619 = vadd.f32 %v314, %v569
        %v620 = vadd.f32 %v315, %v574
        %v621 = vadd.f32 %v316, %v579
        %v622 = vadd.f32 %v317, %v584
        %v623 = vadd.f32 %v318, %v589
        %624 = vst [vmem:[#allocation2] sm:$0xff] %v592
        %625 = vst [vmem:[#allocation2 + $0x8] sm:$0xff] %v593
        %626 = vst [vmem:[#allocation2 + $0x10] sm:$0xff] %v594
        %627 = vst [vmem:[#allocation2 + $0x18] sm:$0xff] %v595
        %628 = vst [vmem:[#allocation2 + $0x20] sm:$0xff] %v596
        %629 = vst [vmem:[#allocation2 + $0x28] sm:$0xff] %v597
        %630 = vst [vmem:[#allocation2 + $0x30] sm:$0xff] %v598
        %631 = vst [vmem:[#allocation2 + $0x38] sm:$0xff] %v599
        %632 = vst [vmem:[#allocation2 + $0x40] sm:$0xff] %v600
        %633 = vst [vmem:[#allocation2 + $0x48] sm:$0xff] %v601
        %634 = vst [vmem:[#allocation2 + $0x50] sm:$0xff] %v602
        %635 = vst [vmem:[#allocation2 + $0x58] sm:$0xff] %v603
        %636 = vst [vmem:[#allocation2 + $0x60] sm:$0xff] %v604
        %637 = vst [vmem:[#allocation2 + $0x68] sm:$0xff] %v605
        %638 = vst [vmem:[#allocation2 + $0x70] sm:$0xff] %v606
        %639 = vst [vmem:[#allocation2 + $0x78] sm:$0xff] %v607
        %640 = vst [vmem:[#allocation2 + $0x80] sm:$0xff] %v608
        %641 = vst [vmem:[#allocation2 + $0x88] sm:$0xff] %v609
        %642 = vst [vmem:[#allocation2 + $0x90] sm:$0xff] %v610
        %643 = vst [vmem:[#allocation2 + $0x98] sm:$0xff] %v611
        %644 = vst [vmem:[#allocation2 + $0xa0] sm:$0xff] %v612
        %645 = vst [vmem:[#allocation2 + $0xa8] sm:$0xff] %v613
        %646 = vst [vmem:[#allocation2 + $0xb0] sm:$0xff] %v614
        %647 = vst [vmem:[#allocation2 + $0xb8] sm:$0xff] %v615
        %648 = vst [vmem:[#allocation2 + $0xc0] sm:$0xff] %v616
        %649 = vst [vmem:[#allocation2 + $0xc8] sm:$0xff] %v617
        %650 = vst [vmem:[#allocation2 + $0xd0] sm:$0xff] %v618
        %651 = vst [vmem:[#allocation2 + $0xd8] sm:$0xff] %v619
        %652 = vst [vmem:[#allocation2 + $0xe0] sm:$0xff] %v620
        %653 = vst [vmem:[#allocation2 + $0xe8] sm:$0xff] %v621
        %654 = vst [vmem:[#allocation2 + $0xf0] sm:$0xff] %v622
        %655 = vst [vmem:[#allocation2 + $0xf8] sm:$0xff] %v623
        // Predicated region
        $region37: #{mha_forward.5} parent=31 // pred_check
          %p656 = pneg %p251
        $region38: #{mha_forward.5} parent=31 // pred_check_branch
          %658 = sbr.rel (%p656) target = $region40
        $region39: #{mha_forward.5} parent=31 // pred_region
          %v659 = vld [vmem:[#allocation2] sm:$0xff]
          %v660 = vld [vmem:[#allocation2 + $0x8] sm:$0xff]
          %v661 = vld [vmem:[#allocation2 + $0x10] sm:$0xff]
          %v662 = vld [vmem:[#allocation2 + $0x18] sm:$0xff]
          %v663 = vld [vmem:[#allocation2 + $0x20] sm:$0xff]
          %v664 = vld [vmem:[#allocation2 + $0x28] sm:$0xff]
          %v665 = vld [vmem:[#allocation2 + $0x30] sm:$0xff]
          %v666 = vld [vmem:[#allocation2 + $0x38] sm:$0xff]
          %v667 = vld [vmem:[#allocation2 + $0x40] sm:$0xff]
          %v668 = vld [vmem:[#allocation2 + $0x48] sm:$0xff]
          %v669 = vld [vmem:[#allocation2 + $0x50] sm:$0xff]
          %v670 = vld [vmem:[#allocation2 + $0x58] sm:$0xff]
          %v671 = vld [vmem:[#allocation2 + $0x60] sm:$0xff]
          %v672 = vld [vmem:[#allocation2 + $0x68] sm:$0xff]
          %v673 = vld [vmem:[#allocation2 + $0x70] sm:$0xff]
          %v674 = vld [vmem:[#allocation2 + $0x78] sm:$0xff]
          %v675 = vld [vmem:[#allocation2 + $0x80] sm:$0xff]
          %v676 = vld [vmem:[#allocation2 + $0x88] sm:$0xff]
          %v677 = vld [vmem:[#allocation2 + $0x90] sm:$0xff]
          %v678 = vld [vmem:[#allocation2 + $0x98] sm:$0xff]
          %v679 = vld [vmem:[#allocation2 + $0xa0] sm:$0xff]
          %v680 = vld [vmem:[#allocation2 + $0xa8] sm:$0xff]
          %v681 = vld [vmem:[#allocation2 + $0xb0] sm:$0xff]
          %v682 = vld [vmem:[#allocation2 + $0xb8] sm:$0xff]
          %v683 = vld [vmem:[#allocation2 + $0xc0] sm:$0xff]
          %v684 = vld [vmem:[#allocation2 + $0xc8] sm:$0xff]
          %v685 = vld [vmem:[#allocation2 + $0xd0] sm:$0xff]
          %v686 = vld [vmem:[#allocation2 + $0xd8] sm:$0xff]
          %v687 = vld [vmem:[#allocation2 + $0xe0] sm:$0xff]
          %v688 = vld [vmem:[#allocation2 + $0xe8] sm:$0xff]
          %v689 = vld [vmem:[#allocation2 + $0xf0] sm:$0xff]
          %v690 = vld [vmem:[#allocation2 + $0xf8] sm:$0xff]
          %v691 = vld [vmem:[%s249] sm:$0x1]
          %v693 = vlaneseq
          %v694 = vshrl.u32 %v693, 7
          %v695 = vsub.s32 0, %v694
          %v696 = vrot.slane %v691, %v695
          %v698 = vadd.f32 %v659, %v696
          %v699 = vadd.f32 %v660, %v696
          %v700 = vadd.f32 %v661, %v696
          %v701 = vadd.f32 %v662, %v696
          %v702 = vadd.f32 %v663, %v696
          %v703 = vadd.f32 %v664, %v696
          %v704 = vadd.f32 %v665, %v696
          %v705 = vadd.f32 %v666, %v696
          %v706 = vadd.f32 %v667, %v696
          %v707 = vadd.f32 %v668, %v696
          %v708 = vadd.f32 %v669, %v696
          %v709 = vadd.f32 %v670, %v696
          %v710 = vadd.f32 %v671, %v696
          %v711 = vadd.f32 %v672, %v696
          %v712 = vadd.f32 %v673, %v696
          %v713 = vadd.f32 %v674, %v696
          %v714 = vadd.f32 %v675, %v696
          %v715 = vadd.f32 %v676, %v696
          %v716 = vadd.f32 %v677, %v696
          %v717 = vadd.f32 %v678, %v696
          %v718 = vadd.f32 %v679, %v696
          %v719 = vadd.f32 %v680, %v696
          %v720 = vadd.f32 %v681, %v696
          %v721 = vadd.f32 %v682, %v696
          %v722 = vadd.f32 %v683, %v696
          %v723 = vadd.f32 %v684, %v696
          %v724 = vadd.f32 %v685, %v696
          %v725 = vadd.f32 %v686, %v696
          %v726 = vadd.f32 %v687, %v696
          %v727 = vadd.f32 %v688, %v696
          %v728 = vadd.f32 %v689, %v696
          %v729 = vadd.f32 %v690, %v696
          %730 = vst [vmem:[%s228] sm:$0xff] %v698
          %731 = vst [vmem:[%s228 + $0x8] sm:$0xff] %v699
          %732 = vst [vmem:[%s228 + $0x10] sm:$0xff] %v700
          %733 = vst [vmem:[%s228 + $0x18] sm:$0xff] %v701
          %734 = vst [vmem:[%s228 + $0x20] sm:$0xff] %v702
          %735 = vst [vmem:[%s228 + $0x28] sm:$0xff] %v703
          %736 = vst [vmem:[%s228 + $0x30] sm:$0xff] %v704
          %737 = vst [vmem:[%s228 + $0x38] sm:$0xff] %v705
          %738 = vst [vmem:[%s228 + $0x40] sm:$0xff] %v706
          %739 = vst [vmem:[%s228 + $0x48] sm:$0xff] %v707
          %740 = vst [vmem:[%s228 + $0x50] sm:$0xff] %v708
          %741 = vst [vmem:[%s228 + $0x58] sm:$0xff] %v709
          %742 = vst [vmem:[%s228 + $0x60] sm:$0xff] %v710
          %743 = vst [vmem:[%s228 + $0x68] sm:$0xff] %v711
          %744 = vst [vmem:[%s228 + $0x70] sm:$0xff] %v712
          %745 = vst [vmem:[%s228 + $0x78] sm:$0xff] %v713
          %746 = vst [vmem:[%s228 + $0x80] sm:$0xff] %v714
          %747 = vst [vmem:[%s228 + $0x88] sm:$0xff] %v715
          %748 = vst [vmem:[%s228 + $0x90] sm:$0xff] %v716
          %749 = vst [vmem:[%s228 + $0x98] sm:$0xff] %v717
          %750 = vst [vmem:[%s228 + $0xa0] sm:$0xff] %v718
          %751 = vst [vmem:[%s228 + $0xa8] sm:$0xff] %v719
          %752 = vst [vmem:[%s228 + $0xb0] sm:$0xff] %v720
          %753 = vst [vmem:[%s228 + $0xb8] sm:$0xff] %v721
          %754 = vst [vmem:[%s228 + $0xc0] sm:$0xff] %v722
          %755 = vst [vmem:[%s228 + $0xc8] sm:$0xff] %v723
          %756 = vst [vmem:[%s228 + $0xd0] sm:$0xff] %v724
          %757 = vst [vmem:[%s228 + $0xd8] sm:$0xff] %v725
          %758 = vst [vmem:[%s228 + $0xe0] sm:$0xff] %v726
          %759 = vst [vmem:[%s228 + $0xe8] sm:$0xff] %v727
          %760 = vst [vmem:[%s228 + $0xf0] sm:$0xff] %v728
          %761 = vst [vmem:[%s228 + $0xf8] sm:$0xff] %v729
        $region40: #{mha_forward.5} parent=31 // pred_fallthru
          _
        %s762 = sand.u32 %s128, 1
        %s763 = scalar_lea.sflag [#allocation4], %s762
        %s764 = sand.u32 %s128, 1
        %s765 = smul.addr %s764, 256
        %s766 = scalar_lea.vmem [#allocation3], %s765
        // Predicated region
        $region41: #{mha_forward.5} parent=31 // pred_check
          %p767 = pneg %p138
        $region42: #{mha_forward.5} parent=31 // pred_check_branch
          %769 = sbr.rel (%p767) target = $region44
        $region43: #{mha_forward.5} parent=31 // pred_region
          %s770 = smul.u32 32, %s22
          %s772 = ssub.s32 4096, 4096
          %773 = vsyncadd %s763, %s772
          %s774 = sadd.s32 %s23, %s770
          %s775 = smul.addr %s774, 128
          %s776 = scalar_lea.hbm %s3, %s775
          %s777 = sshll.u32 %s766, 4
          %s778 = int_to_ptr.vmem [resolvable:$true] %s777
          %783 = dma.vmem_to_hbm [thread:$0]  %s778, 4096, %s776, %s763, 128, 128, 8
        $region44: #{mha_forward.5} parent=31 // pred_fallthru
          _
      $region32: #{mha_forward.5} parent=5 // pred_fallthru
        _
      %p784 = scmp.le.s32.totalorder 2, %s12
      // Predicated region
      $region45: #{mha_forward.5} parent=5 // pred_check
        %p785 = pneg %p784
      $region46: #{mha_forward.5} parent=5 // pred_check_branch
        %787 = sbr.rel (%p785) target = $region48
      $region47: #{mha_forward.5} parent=5 // pred_region
        %s788 = ssub.s32 %s12, 2
        // Predicated region
        $region49: #{mha_forward.5} parent=47 // pred_check
          %p789 = pneg %p144
        $region50: #{mha_forward.5} parent=47 // pred_check_branch
          %791 = sbr.rel (%p789) target = $region52
        $region51: #{mha_forward.5} parent=47 // pred_region
          %s792 = sand.u32 %s129, 1
          %s793 = scalar_lea.sflag [#allocation4], %s792
          %s794 = sand.u32 %s129, 1
          %s795 = smul.addr %s794, 256
          %s796 = scalar_lea.vmem [#allocation3], %s795
          %797 = dma.done %s793, 4096
        $region52: #{mha_forward.5} parent=47 // pred_fallthru
          _
      $region48: #{mha_forward.5} parent=5 // pred_fallthru
        _
    $region6: #{mha_forward.5} parent=1 // loop_footer
      %s16 = sadd.s32 1, %s12
    $region7: #{mha_forward.5} parent=1 // loop_footer_branch
      %11 = sbr.rel target = $region3
    $region8: #{mha_forward.5} parent=1 // loop_exit
      _
    %798 = vsyncpa [#allocation4], 1
    %s799 = scalar_lea.sflag [#allocation4], 1
    %800 = vsyncpa %s799, 1

</llo_original>
